<compile_context>
chip_gen: v6e
topology: v6e:2x2x1
jax: 0.10.0
libtpu: 0.0.40
codegen_flags: <defaults>
</compile_context>

<pallas_src>
import math

import jax
import jax.numpy as jnp
import numpy as np
from jax.experimental import pallas as pl
from jax.experimental.pallas import tpu as pltpu

# ----------------------------- constants -----------------------------------

N, C, H, W = 2, 3, 64, 64
MAX_BOXES = 8
KERNEL_SIZE = 3
BINARY_THRESHOLD = 18
MIN_BBOX_AREA = 100
MAX_BBOX_OVERLAP = 0.65
PERSONS_ONLY = False
PERSON_LABEL = 1

GRAY_W = (0.2989, 0.587, 0.114)  # torchvision rgb_to_grayscale weights

PW = W + 2           # per-image reflect-padded width (66)
PACKW = N * PW       # packed padded width (132)
OUTW = N * W         # packed output width (128) -- lane dense


def _gaussian_kernel1d(ksize: int):
    # torchvision default sigma for gaussian_blur; separable kernel.
    sigma = 0.3 * ((ksize - 1) * 0.5 - 1) + 0.8
    xs = [i - (ksize - 1) / 2.0 for i in range(ksize)]
    g = [math.exp(-(x * x) / (2.0 * sigma * sigma)) for x in xs]
    s = sum(g)
    return [v / s for v in g]


G1 = _gaussian_kernel1d(KERNEL_SIZE)   # symmetric: [g0, g1, g0]
THRESH = BINARY_THRESHOLD / 255.0
BIG = 10 ** 6


# ----------------------------- Pallas kernel --------------------------------

def _foreground_kernel(boxes_ref, first_ref, last_ref, fg_ref, box_ref, v_ref):
    """Single grid step; the two images are packed side-by-side along lanes.

    boxes_ref : SMEM i32 (N, MAX_BOXES, 4)   expanded+clipped detector boxes
    first_ref : VMEM f32 (C, H+2, N*(W+2))   reflect-padded first frames, packed
    last_ref  : VMEM f32 (C, H+2, N*(W+2))   reflect-padded last frames, packed
    fg_ref    : VMEM i32 (H, N*W)            packed foreground maps (lane dense)
    box_ref   : SMEM i32 (N, 4)              foreground bbox per image
    v_ref     : VMEM f32 (H, N*(W+2))        scratch: vertically blurred diff
    """
    g0, g1 = G1[0], G1[1]

    # per-image grayscale of |blur(first) - blur(last)| (local image coords)
    gray = [jnp.zeros((H, W), jnp.float32) for _ in range(N)]

    for c in range(C):
        # Blur linearity: blur(first) - blur(last) == blur(first - last).
        # Separable Gaussian, vertical 3-tap pass (valid on padded rows);
        # vertical shifts never cross image strips (images packed along lanes).
        v_ref[...] = (
            g1 * (first_ref[c, 1:H + 1, :] - last_ref[c, 1:H + 1, :])
            + g0 * ((first_ref[c, 0:H, :] - last_ref[c, 0:H, :])
                    + (first_ref[c, 2:H + 2, :] - last_ref[c, 2:H + 2, :])))
        # Horizontal 3-tap pass per image strip (each strip carries its own
        # reflect-padded columns, so taps never cross image boundaries).
        for n in range(N):
            o = n * PW
            h = (g1 * v_ref[:, o + 1:o + 1 + W]
                 + g0 * (v_ref[:, o:o + W] + v_ref[:, o + 2:o + 2 + W]))
            gray[n] = gray[n] + GRAY_W[c] * jnp.abs(h)

    rows = jax.lax.broadcasted_iota(jnp.int32, (H, W), 0)
    cols = jax.lax.broadcasted_iota(jnp.int32, (H, W), 1)
    rows_n = jax.lax.broadcasted_iota(jnp.int32, (H, 1), 0)
    cols_n = jax.lax.broadcasted_iota(jnp.int32, (1, W), 1)

    for n in range(N):
        # boxes_to_masks: union of (inclusive) box rectangles, built separably:
        # per-box row-interval bits and col-interval bits, combined with a
        # single AND + nonzero test instead of 4 full-plane compares per box.
        row_bits = jnp.zeros((H, 1), jnp.int32)
        col_bits = jnp.zeros((1, W), jnp.int32)
        for k in range(MAX_BOXES):
            x1 = boxes_ref[n, k, 0]
            y1 = boxes_ref[n, k, 1]
            x2 = boxes_ref[n, k, 2]
            y2 = boxes_ref[n, k, 3]
            bit = jnp.int32(1 << k)
            row_bits = row_bits | jnp.where(
                (rows_n >= y1) & (rows_n <= y2), bit, 0)
            col_bits = col_bits | jnp.where(
                (cols_n >= x1) & (cols_n <= x2), bit, 0)
        inside = (row_bits & col_bits) != 0          # (H, W) via broadcast

        fg = (gray[n] > THRESH) & jnp.logical_not(inside)
        fg_ref[:, n * W:(n + 1) * W] = fg.astype(jnp.int32)

        # Bounding box of the remaining foreground (masked min/max reductions),
        # written as scalars to the SMEM output.
        box_ref[n, 0] = jnp.min(jnp.where(fg, cols, BIG))
        box_ref[n, 1] = jnp.min(jnp.where(fg, rows, BIG))
        box_ref[n, 2] = jnp.max(jnp.where(fg, cols, -BIG))
        box_ref[n, 3] = jnp.max(jnp.where(fg, rows, -BIG))


def foreground_detection(first_frame, last_frame, boxes_i32):
    """Run the Pallas foreground-detection kernel.

    first_frame, last_frame: (N, C, H, W) float32
    boxes_i32: (N, MAX_BOXES, 4) int32 (invalid boxes encoded as [0,0,-1,-1])
    Returns: foreground map (N, H, W) int32, fg box (N, 4) int32
    """

    def pack(frames):
        # (N,C,H,W) -> reflect pad H,W by 1 -> pack the N images side-by-side
        # along lanes: (C, H+2, N*(W+2)).  Pure layout plumbing.
        p = jnp.pad(frames, ((0, 0), (0, 0), (1, 1), (1, 1)), mode="reflect")
        return jnp.transpose(p, (1, 2, 0, 3)).reshape(C, H + 2, PACKW)

    first_p = pack(first_frame)
    last_p = pack(last_frame)

    grid_spec = pltpu.PrefetchScalarGridSpec(
        num_scalar_prefetch=1,
        grid=(1,),   # single step: both images processed in one invocation
        in_specs=[
            pl.BlockSpec((C, H + 2, PACKW), lambda i, boxes: (0, 0, 0)),
            pl.BlockSpec((C, H + 2, PACKW), lambda i, boxes: (0, 0, 0)),
        ],
        out_specs=[
            pl.BlockSpec((H, OUTW), lambda i, boxes: (0, 0)),
            pl.BlockSpec(memory_space=pltpu.MemorySpace.SMEM),
        ],
        scratch_shapes=[pltpu.VMEM((H, PACKW), jnp.float32)],
    )

    fg_packed, fg_boxes = pl.pallas_call(
        _foreground_kernel,
        grid_spec=grid_spec,
        out_shape=(
            jax.ShapeDtypeStruct((H, OUTW), jnp.int32),
            jax.ShapeDtypeStruct((N, 4), jnp.int32),
        ),
        compiler_params=pltpu.CompilerParams(
            dimension_semantics=("arbitrary",)),
    )(boxes_i32, first_p, last_p)

    # unpack (H, N*W) -> (N, H, W)
    fg = jnp.transpose(fg_packed.reshape(H, N, W), (1, 0, 2))
    return fg, fg_boxes


# ----------------------------- glue (plain Python) --------------------------

def synthetic_backbone_detections():
    """Deterministic stand-in for Mask R-CNN detections (per image)."""
    regions = []
    for i in range(N):
        boxes = np.array(
            [[5.0 + i, 5.0, 20.0 + i, 25.0],
             [30.0, 10.0 + i, 50.0, 40.0 + i]], dtype=np.float32)
        labels = np.array([1, 3], dtype=np.int64)
        scores = np.array([0.9, 0.85], dtype=np.float32)
        masks = np.zeros((2, 1, H, W), dtype=np.float32)
        for k, b in enumerate(boxes.astype(np.int32)):
            masks[k, 0, b[1]:b[3] + 1, b[0]:b[2] + 1] = 1.0
        regions.append({"boxes": boxes, "labels": labels,
                        "scores": scores, "masks": masks})
    return regions


def prepare_box_array(regions):
    """Expand by [-2,-2,2,2], clip to image, pad to MAX_BOXES, int32."""
    out = np.tile(np.array([0, 0, -1, -1], np.int32), (N, MAX_BOXES, 1))
    for i, r in enumerate(regions):
        b = r["boxes"].copy() + np.array([-2.0, -2.0, 2.0, 2.0], np.float32)
        b[:, 0::2] = np.clip(b[:, 0::2], 0.0, float(W))
        b[:, 1::2] = np.clip(b[:, 1::2], 0.0, float(H))
        bi = b.astype(np.int32)
        k = min(len(bi), MAX_BOXES)
        out[i, :k] = bi[:k]
    return out


def add_foreground_boxes(regions, fg_map, fg_boxes):
    for i, r in enumerate(regions):
        box = fg_boxes[i]
        if box[2] < box[0] or box[3] < box[1]:   # no foreground left
            continue
        boxes = box[None, :].astype(np.float32)
        r["boxes"] = np.concatenate([r["boxes"], boxes], axis=0)
        r["labels"] = np.concatenate(
            [r["labels"], np.zeros(1, dtype=r["labels"].dtype)])
        r["scores"] = np.concatenate(
            [r["scores"], 0.5 * np.ones(1, dtype=np.float32)])
        bi = boxes[0].astype(np.int32)
        box_mask = np.zeros((H, W), np.int32)
        box_mask[bi[1]:bi[3] + 1, bi[0]:bi[2] + 1] = 1
        new_mask = (fg_map[i] * box_mask).astype(np.float32)[None, None]
        r["masks"] = np.concatenate([r["masks"], new_mask], axis=0)
    return regions


def _box_area(boxes):
    if boxes.shape[0] == 0:
        return np.zeros((0,), np.float32)
    return (boxes[:, 2] - boxes[:, 0]) * (boxes[:, 3] - boxes[:, 1])


def _subsample(regions, idx):
    return {k: v[idx] for k, v in regions.items()}


def post_process_bbox_detections(regions):
    out = []
    for r in regions:
        if PERSONS_ONLY:
            r = _subsample(r, np.where(r["labels"] == PERSON_LABEL)[0])
        areas = _box_area(r["boxes"])
        r = _subsample(r, np.where(areas > MIN_BBOX_AREA)[0])
        # delete overlapping boxes (smaller one removed first)
        areas = _box_area(r["boxes"])
        order = np.argsort(areas)
        keep = []
        for idx in range(len(order)):
            b = r["boxes"][order[idx]]
            others = r["boxes"][order[idx + 1:]]
            if others.shape[0] == 0:
                keep.append(order[idx])
                continue
            oc = np.hstack([np.maximum(b[:2], others[:, :2]),
                            np.minimum(b[2:], others[:, 2:])])
            valid = np.all(oc[:, :2] < oc[:, 2:], axis=1)
            overlap = _box_area(oc) * valid.astype(np.float32)
            ratio = overlap / areas[order[idx]]
            if not np.any(ratio > MAX_BBOX_OVERLAP):
                keep.append(order[idx])
        keep = np.array(keep, dtype=np.int64)
        out.append(_subsample(r, keep))
    return out


def region_extractor_forward(first_frame, last_frame):
    regions = synthetic_backbone_detections()
    boxes_i32 = prepare_box_array(regions)
    fg_map, fg_boxes = foreground_detection(
        first_frame, last_frame, jnp.asarray(boxes_i32))
    jax.block_until_ready((fg_map, fg_boxes))
    regions = add_foreground_boxes(
        regions, np.asarray(fg_map), np.asarray(fg_boxes))
    return post_process_bbox_detections(regions)


# ----------------------------- main ------------------------------------------

if __name__ == "__main__":
    key = jax.random.PRNGKey(0)
    k1, k2 = jax.random.split(key)
    first_frame = jax.random.normal(k1, (N, C, H, W), dtype=jnp.float32)
    last_frame = jax.random.normal(k2, (N, C, H, W), dtype=jnp.float32)

    results = region_extractor_forward(first_frame, last_frame)

    assert len(results) == N
    for r in results:
        assert set(r.keys()) == {"boxes", "labels", "scores", "masks"}
        assert r["boxes"].shape[1] == 4
        assert r["masks"].shape[1:] == (1, H, W)
    print("KERNEL_OK")
</pallas_src>

<mosaic_0001>
module attributes {stable_mosaic.version = 11 : i64} {
  func.func @_foreground_kernel(%arg0: i32, %arg1: memref<2x8x4xi32, #tpu.memory_space<smem>>, %arg2: memref<3x66x132xf32, #tpu.memory_space<vmem>>, %arg3: memref<3x66x132xf32, #tpu.memory_space<vmem>>, %arg4: memref<64x128xi32, #tpu.memory_space<vmem>>, %arg5: memref<2x4xi32, #tpu.memory_space<smem>>, %arg6: memref<64x132xf32, #tpu.memory_space<vmem>>) attributes {dimension_semantics = [#tpu.dimension_semantics<arbitrary>], iteration_bounds = array<i64: 1>, scalar_prefetch = 1 : i64, scratch_operands = 1 : i64, tpu.core_type = #tpu.core_type<tc>, window_params = [{pipeline_mode = #tpu.pipeline_mode<synchronous>, transform_indices = @transform_0, window_bounds = array<i64: 3, 66, 132>}, {pipeline_mode = #tpu.pipeline_mode<synchronous>, transform_indices = @transform_1, window_bounds = array<i64: 3, 66, 132>}, {pipeline_mode = #tpu.pipeline_mode<synchronous>, transform_indices = @transform_2, window_bounds = array<i64: 64, 128>}, {transform_indices = @transform_3, window_bounds = array<i64: 2, 4>}]} {
    %cst = arith.constant 0.000000e+00 : f32
    %0 = vector.broadcast %cst : f32 to vector<64x64xf32>
    %cst_0 = arith.constant 0.000000e+00 : f32
    %1 = vector.broadcast %cst_0 : f32 to vector<64x64xf32>
    %c0 = arith.constant 0 : index
    %c1 = arith.constant 1 : index
    %c0_1 = arith.constant 0 : index
    %2 = vector.load %arg2[%c0, %c1, %c0_1] : memref<3x66x132xf32, #tpu.memory_space<vmem>>, vector<1x64x132xf32>
    %3 = vector.shape_cast %2 : vector<1x64x132xf32> to vector<64x132xf32>
    %c0_2 = arith.constant 0 : index
    %c1_3 = arith.constant 1 : index
    %c0_4 = arith.constant 0 : index
    %4 = vector.load %arg3[%c0_2, %c1_3, %c0_4] : memref<3x66x132xf32, #tpu.memory_space<vmem>>, vector<1x64x132xf32>
    %5 = vector.shape_cast %4 : vector<1x64x132xf32> to vector<64x132xf32>
    %6 = arith.subf %3, %5 : vector<64x132xf32>
    %cst_5 = arith.constant 0.522011459 : f32
    %7 = vector.broadcast %cst_5 : f32 to vector<64x132xf32>
    %8 = arith.mulf %7, %6 : vector<64x132xf32>
    %c0_6 = arith.constant 0 : index
    %c0_7 = arith.constant 0 : index
    %c0_8 = arith.constant 0 : index
    %9 = vector.load %arg2[%c0_6, %c0_7, %c0_8] : memref<3x66x132xf32, #tpu.memory_space<vmem>>, vector<1x64x132xf32>
    %10 = vector.shape_cast %9 : vector<1x64x132xf32> to vector<64x132xf32>
    %c0_9 = arith.constant 0 : index
    %c0_10 = arith.constant 0 : index
    %c0_11 = arith.constant 0 : index
    %11 = vector.load %arg3[%c0_9, %c0_10, %c0_11] : memref<3x66x132xf32, #tpu.memory_space<vmem>>, vector<1x64x132xf32>
    %12 = vector.shape_cast %11 : vector<1x64x132xf32> to vector<64x132xf32>
    %13 = arith.subf %10, %12 : vector<64x132xf32>
    %c0_12 = arith.constant 0 : index
    %c2 = arith.constant 2 : index
    %c0_13 = arith.constant 0 : index
    %14 = vector.load %arg2[%c0_12, %c2, %c0_13] : memref<3x66x132xf32, #tpu.memory_space<vmem>>, vector<1x64x132xf32>
    %15 = vector.shape_cast %14 : vector<1x64x132xf32> to vector<64x132xf32>
    %c0_14 = arith.constant 0 : index
    %c2_15 = arith.constant 2 : index
    %c0_16 = arith.constant 0 : index
    %16 = vector.load %arg3[%c0_14, %c2_15, %c0_16] : memref<3x66x132xf32, #tpu.memory_space<vmem>>, vector<1x64x132xf32>
    %17 = vector.shape_cast %16 : vector<1x64x132xf32> to vector<64x132xf32>
    %18 = arith.subf %15, %17 : vector<64x132xf32>
    %19 = arith.addf %13, %18 : vector<64x132xf32>
    %cst_17 = arith.constant 0.238994271 : f32
    %20 = vector.broadcast %cst_17 : f32 to vector<64x132xf32>
    %21 = arith.mulf %20, %19 : vector<64x132xf32>
    %22 = arith.addf %8, %21 : vector<64x132xf32>
    %c0_18 = arith.constant 0 : index
    %c0_19 = arith.constant 0 : index
    %23 = vector.load %arg6[%c0_18, %c0_19] : memref<64x132xf32, #tpu.memory_space<vmem>>, vector<64x132xf32>
    tpu.vector_store %arg6[%c0_18, %c0_19], %22 {strides = array<i32>} : memref<64x132xf32, #tpu.memory_space<vmem>>, vector<64x132xf32>,
    %c0_20 = arith.constant 0 : index
    %c1_21 = arith.constant 1 : index
    %24 = vector.load %arg6[%c0_20, %c1_21] : memref<64x132xf32, #tpu.memory_space<vmem>>, vector<64x64xf32>
    %cst_22 = arith.constant 0.522011459 : f32
    %25 = vector.broadcast %cst_22 : f32 to vector<64x64xf32>
    %26 = arith.mulf %25, %24 : vector<64x64xf32>
    %c0_23 = arith.constant 0 : index
    %c0_24 = arith.constant 0 : index
    %27 = vector.load %arg6[%c0_23, %c0_24] : memref<64x132xf32, #tpu.memory_space<vmem>>, vector<64x64xf32>
    %c0_25 = arith.constant 0 : index
    %c2_26 = arith.constant 2 : index
    %28 = vector.load %arg6[%c0_25, %c2_26] : memref<64x132xf32, #tpu.memory_space<vmem>>, vector<64x64xf32>
    %29 = arith.addf %27, %28 : vector<64x64xf32>
    %cst_27 = arith.constant 0.238994271 : f32
    %30 = vector.broadcast %cst_27 : f32 to vector<64x64xf32>
    %31 = arith.mulf %30, %29 : vector<64x64xf32>
    %32 = arith.addf %26, %31 : vector<64x64xf32>
    %33 = math.absf %32 : vector<64x64xf32>
    %cst_28 = arith.constant 2.989000e-01 : f32
    %34 = vector.broadcast %cst_28 : f32 to vector<64x64xf32>
    %35 = arith.mulf %34, %33 : vector<64x64xf32>
    %36 = arith.addf %0, %35 : vector<64x64xf32>
    %c0_29 = arith.constant 0 : index
    %c67 = arith.constant 67 : index
    %37 = vector.load %arg6[%c0_29, %c67] : memref<64x132xf32, #tpu.memory_space<vmem>>, vector<64x64xf32>
    %cst_30 = arith.constant 0.522011459 : f32
    %38 = vector.broadcast %cst_30 : f32 to vector<64x64xf32>
    %39 = arith.mulf %38, %37 : vector<64x64xf32>
    %c0_31 = arith.constant 0 : index
    %c66 = arith.constant 66 : index
    %40 = vector.load %arg6[%c0_31, %c66] : memref<64x132xf32, #tpu.memory_space<vmem>>, vector<64x64xf32>
    %c0_32 = arith.constant 0 : index
    %c68 = arith.constant 68 : index
    %41 = vector.load %arg6[%c0_32, %c68] : memref<64x132xf32, #tpu.memory_space<vmem>>, vector<64x64xf32>
    %42 = arith.addf %40, %41 : vector<64x64xf32>
    %cst_33 = arith.constant 0.238994271 : f32
    %43 = vector.broadcast %cst_33 : f32 to vector<64x64xf32>
    %44 = arith.mulf %43, %42 : vector<64x64xf32>
    %45 = arith.addf %39, %44 : vector<64x64xf32>
    %46 = math.absf %45 : vector<64x64xf32>
    %cst_34 = arith.constant 2.989000e-01 : f32
    %47 = vector.broadcast %cst_34 : f32 to vector<64x64xf32>
    %48 = arith.mulf %47, %46 : vector<64x64xf32>
    %49 = arith.addf %1, %48 : vector<64x64xf32>
    %c1_35 = arith.constant 1 : index
    %c1_36 = arith.constant 1 : index
    %c0_37 = arith.constant 0 : index
    %50 = vector.load %arg2[%c1_35, %c1_36, %c0_37] : memref<3x66x132xf32, #tpu.memory_space<vmem>>, vector<1x64x132xf32>
    %51 = vector.shape_cast %50 : vector<1x64x132xf32> to vector<64x132xf32>
    %c1_38 = arith.constant 1 : index
    %c1_39 = arith.constant 1 : index
    %c0_40 = arith.constant 0 : index
    %52 = vector.load %arg3[%c1_38, %c1_39, %c0_40] : memref<3x66x132xf32, #tpu.memory_space<vmem>>, vector<1x64x132xf32>
    %53 = vector.shape_cast %52 : vector<1x64x132xf32> to vector<64x132xf32>
    %54 = arith.subf %51, %53 : vector<64x132xf32>
    %cst_41 = arith.constant 0.522011459 : f32
    %55 = vector.broadcast %cst_41 : f32 to vector<64x132xf32>
    %56 = arith.mulf %55, %54 : vector<64x132xf32>
    %c1_42 = arith.constant 1 : index
    %c0_43 = arith.constant 0 : index
    %c0_44 = arith.constant 0 : index
    %57 = vector.load %arg2[%c1_42, %c0_43, %c0_44] : memref<3x66x132xf32, #tpu.memory_space<vmem>>, vector<1x64x132xf32>
    %58 = vector.shape_cast %57 : vector<1x64x132xf32> to vector<64x132xf32>
    %c1_45 = arith.constant 1 : index
    %c0_46 = arith.constant 0 : index
    %c0_47 = arith.constant 0 : index
    %59 = vector.load %arg3[%c1_45, %c0_46, %c0_47] : memref<3x66x132xf32, #tpu.memory_space<vmem>>, vector<1x64x132xf32>
    %60 = vector.shape_cast %59 : vector<1x64x132xf32> to vector<64x132xf32>
    %61 = arith.subf %58, %60 : vector<64x132xf32>
    %c1_48 = arith.constant 1 : index
    %c2_49 = arith.constant 2 : index
    %c0_50 = arith.constant 0 : index
    %62 = vector.load %arg2[%c1_48, %c2_49, %c0_50] : memref<3x66x132xf32, #tpu.memory_space<vmem>>, vector<1x64x132xf32>
    %63 = vector.shape_cast %62 : vector<1x64x132xf32> to vector<64x132xf32>
    %c1_51 = arith.constant 1 : index
    %c2_52 = arith.constant 2 : index
    %c0_53 = arith.constant 0 : index
    %64 = vector.load %arg3[%c1_51, %c2_52, %c0_53] : memref<3x66x132xf32, #tpu.memory_space<vmem>>, vector<1x64x132xf32>
    %65 = vector.shape_cast %64 : vector<1x64x132xf32> to vector<64x132xf32>
    %66 = arith.subf %63, %65 : vector<64x132xf32>
    %67 = arith.addf %61, %66 : vector<64x132xf32>
    %cst_54 = arith.constant 0.238994271 : f32
    %68 = vector.broadcast %cst_54 : f32 to vector<64x132xf32>
    %69 = arith.mulf %68, %67 : vector<64x132xf32>
    %70 = arith.addf %56, %69 : vector<64x132xf32>
    %c0_55 = arith.constant 0 : index
    %c0_56 = arith.constant 0 : index
    %71 = vector.load %arg6[%c0_55, %c0_56] : memref<64x132xf32, #tpu.memory_space<vmem>>, vector<64x132xf32>
    tpu.vector_store %arg6[%c0_55, %c0_56], %70 {strides = array<i32>} : memref<64x132xf32, #tpu.memory_space<vmem>>, vector<64x132xf32>,
    %c0_57 = arith.constant 0 : index
    %c1_58 = arith.constant 1 : index
    %72 = vector.load %arg6[%c0_57, %c1_58] : memref<64x132xf32, #tpu.memory_space<vmem>>, vector<64x64xf32>
    %cst_59 = arith.constant 0.522011459 : f32
    %73 = vector.broadcast %cst_59 : f32 to vector<64x64xf32>
    %74 = arith.mulf %73, %72 : vector<64x64xf32>
    %c0_60 = arith.constant 0 : index
    %c0_61 = arith.constant 0 : index
    %75 = vector.load %arg6[%c0_60, %c0_61] : memref<64x132xf32, #tpu.memory_space<vmem>>, vector<64x64xf32>
    %c0_62 = arith.constant 0 : index
    %c2_63 = arith.constant 2 : index
    %76 = vector.load %arg6[%c0_62, %c2_63] : memref<64x132xf32, #tpu.memory_space<vmem>>, vector<64x64xf32>
    %77 = arith.addf %75, %76 : vector<64x64xf32>
    %cst_64 = arith.constant 0.238994271 : f32
    %78 = vector.broadcast %cst_64 : f32 to vector<64x64xf32>
    %79 = arith.mulf %78, %77 : vector<64x64xf32>
    %80 = arith.addf %74, %79 : vector<64x64xf32>
    %81 = math.absf %80 : vector<64x64xf32>
    %cst_65 = arith.constant 5.870000e-01 : f32
    %82 = vector.broadcast %cst_65 : f32 to vector<64x64xf32>
    %83 = arith.mulf %82, %81 : vector<64x64xf32>
    %84 = arith.addf %36, %83 : vector<64x64xf32>
    %c0_66 = arith.constant 0 : index
    %c67_67 = arith.constant 67 : index
    %85 = vector.load %arg6[%c0_66, %c67_67] : memref<64x132xf32, #tpu.memory_space<vmem>>, vector<64x64xf32>
    %cst_68 = arith.constant 0.522011459 : f32
    %86 = vector.broadcast %cst_68 : f32 to vector<64x64xf32>
    %87 = arith.mulf %86, %85 : vector<64x64xf32>
    %c0_69 = arith.constant 0 : index
    %c66_70 = arith.constant 66 : index
    %88 = vector.load %arg6[%c0_69, %c66_70] : memref<64x132xf32, #tpu.memory_space<vmem>>, vector<64x64xf32>
    %c0_71 = arith.constant 0 : index
    %c68_72 = arith.constant 68 : index
    %89 = vector.load %arg6[%c0_71, %c68_72] : memref<64x132xf32, #tpu.memory_space<vmem>>, vector<64x64xf32>
    %90 = arith.addf %88, %89 : vector<64x64xf32>
    %cst_73 = arith.constant 0.238994271 : f32
    %91 = vector.broadcast %cst_73 : f32 to vector<64x64xf32>
    %92 = arith.mulf %91, %90 : vector<64x64xf32>
    %93 = arith.addf %87, %92 : vector<64x64xf32>
    %94 = math.absf %93 : vector<64x64xf32>
    %cst_74 = arith.constant 5.870000e-01 : f32
    %95 = vector.broadcast %cst_74 : f32 to vector<64x64xf32>
    %96 = arith.mulf %95, %94 : vector<64x64xf32>
    %97 = arith.addf %49, %96 : vector<64x64xf32>
    %c2_75 = arith.constant 2 : index
    %c1_76 = arith.constant 1 : index
    %c0_77 = arith.constant 0 : index
    %98 = vector.load %arg2[%c2_75, %c1_76, %c0_77] : memref<3x66x132xf32, #tpu.memory_space<vmem>>, vector<1x64x132xf32>
    %99 = vector.shape_cast %98 : vector<1x64x132xf32> to vector<64x132xf32>
    %c2_78 = arith.constant 2 : index
    %c1_79 = arith.constant 1 : index
    %c0_80 = arith.constant 0 : index
    %100 = vector.load %arg3[%c2_78, %c1_79, %c0_80] : memref<3x66x132xf32, #tpu.memory_space<vmem>>, vector<1x64x132xf32>
    %101 = vector.shape_cast %100 : vector<1x64x132xf32> to vector<64x132xf32>
    %102 = arith.subf %99, %101 : vector<64x132xf32>
    %cst_81 = arith.constant 0.522011459 : f32
    %103 = vector.broadcast %cst_81 : f32 to vector<64x132xf32>
    %104 = arith.mulf %103, %102 : vector<64x132xf32>
    %c2_82 = arith.constant 2 : index
    %c0_83 = arith.constant 0 : index
    %c0_84 = arith.constant 0 : index
    %105 = vector.load %arg2[%c2_82, %c0_83, %c0_84] : memref<3x66x132xf32, #tpu.memory_space<vmem>>, vector<1x64x132xf32>
    %106 = vector.shape_cast %105 : vector<1x64x132xf32> to vector<64x132xf32>
    %c2_85 = arith.constant 2 : index
    %c0_86 = arith.constant 0 : index
    %c0_87 = arith.constant 0 : index
    %107 = vector.load %arg3[%c2_85, %c0_86, %c0_87] : memref<3x66x132xf32, #tpu.memory_space<vmem>>, vector<1x64x132xf32>
    %108 = vector.shape_cast %107 : vector<1x64x132xf32> to vector<64x132xf32>
    %109 = arith.subf %106, %108 : vector<64x132xf32>
    %c2_88 = arith.constant 2 : index
    %c2_89 = arith.constant 2 : index
    %c0_90 = arith.constant 0 : index
    %110 = vector.load %arg2[%c2_88, %c2_89, %c0_90] : memref<3x66x132xf32, #tpu.memory_space<vmem>>, vector<1x64x132xf32>
    %111 = vector.shape_cast %110 : vector<1x64x132xf32> to vector<64x132xf32>
    %c2_91 = arith.constant 2 : index
    %c2_92 = arith.constant 2 : index
    %c0_93 = arith.constant 0 : index
    %112 = vector.load %arg3[%c2_91, %c2_92, %c0_93] : memref<3x66x132xf32, #tpu.memory_space<vmem>>, vector<1x64x132xf32>
    %113 = vector.shape_cast %112 : vector<1x64x132xf32> to vector<64x132xf32>
    %114 = arith.subf %111, %113 : vector<64x132xf32>
    %115 = arith.addf %109, %114 : vector<64x132xf32>
    %cst_94 = arith.constant 0.238994271 : f32
    %116 = vector.broadcast %cst_94 : f32 to vector<64x132xf32>
    %117 = arith.mulf %116, %115 : vector<64x132xf32>
    %118 = arith.addf %104, %117 : vector<64x132xf32>
    %c0_95 = arith.constant 0 : index
    %c0_96 = arith.constant 0 : index
    %119 = vector.load %arg6[%c0_95, %c0_96] : memref<64x132xf32, #tpu.memory_space<vmem>>, vector<64x132xf32>
    tpu.vector_store %arg6[%c0_95, %c0_96], %118 {strides = array<i32>} : memref<64x132xf32, #tpu.memory_space<vmem>>, vector<64x132xf32>,
    %c0_97 = arith.constant 0 : index
    %c1_98 = arith.constant 1 : index
    %120 = vector.load %arg6[%c0_97, %c1_98] : memref<64x132xf32, #tpu.memory_space<vmem>>, vector<64x64xf32>
    %cst_99 = arith.constant 0.522011459 : f32
    %121 = vector.broadcast %cst_99 : f32 to vector<64x64xf32>
    %122 = arith.mulf %121, %120 : vector<64x64xf32>
    %c0_100 = arith.constant 0 : index
    %c0_101 = arith.constant 0 : index
    %123 = vector.load %arg6[%c0_100, %c0_101] : memref<64x132xf32, #tpu.memory_space<vmem>>, vector<64x64xf32>
    %c0_102 = arith.constant 0 : index
    %c2_103 = arith.constant 2 : index
    %124 = vector.load %arg6[%c0_102, %c2_103] : memref<64x132xf32, #tpu.memory_space<vmem>>, vector<64x64xf32>
    %125 = arith.addf %123, %124 : vector<64x64xf32>
    %cst_104 = arith.constant 0.238994271 : f32
    %126 = vector.broadcast %cst_104 : f32 to vector<64x64xf32>
    %127 = arith.mulf %126, %125 : vector<64x64xf32>
    %128 = arith.addf %122, %127 : vector<64x64xf32>
    %129 = math.absf %128 : vector<64x64xf32>
    %cst_105 = arith.constant 1.140000e-01 : f32
    %130 = vector.broadcast %cst_105 : f32 to vector<64x64xf32>
    %131 = arith.mulf %130, %129 : vector<64x64xf32>
    %132 = arith.addf %84, %131 : vector<64x64xf32>
    %c0_106 = arith.constant 0 : index
    %c67_107 = arith.constant 67 : index
    %133 = vector.load %arg6[%c0_106, %c67_107] : memref<64x132xf32, #tpu.memory_space<vmem>>, vector<64x64xf32>
    %cst_108 = arith.constant 0.522011459 : f32
    %134 = vector.broadcast %cst_108 : f32 to vector<64x64xf32>
    %135 = arith.mulf %134, %133 : vector<64x64xf32>
    %c0_109 = arith.constant 0 : index
    %c66_110 = arith.constant 66 : index
    %136 = vector.load %arg6[%c0_109, %c66_110] : memref<64x132xf32, #tpu.memory_space<vmem>>, vector<64x64xf32>
    %c0_111 = arith.constant 0 : index
    %c68_112 = arith.constant 68 : index
    %137 = vector.load %arg6[%c0_111, %c68_112] : memref<64x132xf32, #tpu.memory_space<vmem>>, vector<64x64xf32>
    %138 = arith.addf %136, %137 : vector<64x64xf32>
    %cst_113 = arith.constant 0.238994271 : f32
    %139 = vector.broadcast %cst_113 : f32 to vector<64x64xf32>
    %140 = arith.mulf %139, %138 : vector<64x64xf32>
    %141 = arith.addf %135, %140 : vector<64x64xf32>
    %142 = math.absf %141 : vector<64x64xf32>
    %cst_114 = arith.constant 1.140000e-01 : f32
    %143 = vector.broadcast %cst_114 : f32 to vector<64x64xf32>
    %144 = arith.mulf %143, %142 : vector<64x64xf32>
    %145 = arith.addf %97, %144 : vector<64x64xf32>
    %146 = tpu.iota {dimensions = array<i32: 0>} : vector<64x64xi32>
    %147 = tpu.iota {dimensions = array<i32: 1>} : vector<64x64xi32>
    %148 = tpu.iota {dimensions = array<i32: 0>} : vector<64x1xi32>
    %149 = tpu.iota {dimensions = array<i32: 1>} : vector<1x64xi32>
    %c0_i32 = arith.constant 0 : i32
    %150 = vector.broadcast %c0_i32 : i32 to vector<64x1xi32>
    %c0_i32_115 = arith.constant 0 : i32
    %151 = vector.broadcast %c0_i32_115 : i32 to vector<1x64xi32>
    %c0_116 = arith.constant 0 : index
    %c0_117 = arith.constant 0 : index
    %c0_118 = arith.constant 0 : index
    %152 = memref.load %arg1[%c0_116, %c0_117, %c0_118] : memref<2x8x4xi32, #tpu.memory_space<smem>>
    %c0_119 = arith.constant 0 : index
    %c0_120 = arith.constant 0 : index
    %c1_121 = arith.constant 1 : index
    %153 = memref.load %arg1[%c0_119, %c0_120, %c1_121] : memref<2x8x4xi32, #tpu.memory_space<smem>>
    %c0_122 = arith.constant 0 : index
    %c0_123 = arith.constant 0 : index
    %c2_124 = arith.constant 2 : index
    %154 = memref.load %arg1[%c0_122, %c0_123, %c2_124] : memref<2x8x4xi32, #tpu.memory_space<smem>>
    %c0_125 = arith.constant 0 : index
    %c0_126 = arith.constant 0 : index
    %c3 = arith.constant 3 : index
    %155 = memref.load %arg1[%c0_125, %c0_126, %c3] : memref<2x8x4xi32, #tpu.memory_space<smem>>
    %156 = vector.broadcast %153 : i32 to vector<64x1xi32>
    %157 = arith.cmpi sge, %148, %156 : vector<64x1xi32>
    %158 = vector.broadcast %155 : i32 to vector<64x1xi32>
    %159 = arith.cmpi sle, %148, %158 : vector<64x1xi32>
    %160 = arith.andi %157, %159 : vector<64x1xi1>
    %c1_i32 = arith.constant 1 : i32
    %c0_i32_127 = arith.constant 0 : i32
    %161 = vector.broadcast %c1_i32 : i32 to vector<64x1xi32>
    %162 = vector.broadcast %c0_i32_127 : i32 to vector<64x1xi32>
    %163 = arith.select %160, %161, %162 : vector<64x1xi1>, vector<64x1xi32>
    %164 = arith.ori %150, %163 : vector<64x1xi32>
    %165 = vector.broadcast %152 : i32 to vector<1x64xi32>
    %166 = arith.cmpi sge, %149, %165 : vector<1x64xi32>
    %167 = vector.broadcast %154 : i32 to vector<1x64xi32>
    %168 = arith.cmpi sle, %149, %167 : vector<1x64xi32>
    %169 = arith.andi %166, %168 : vector<1x64xi1>
    %c1_i32_128 = arith.constant 1 : i32
    %c0_i32_129 = arith.constant 0 : i32
    %170 = vector.broadcast %c1_i32_128 : i32 to vector<1x64xi32>
    %171 = vector.broadcast %c0_i32_129 : i32 to vector<1x64xi32>
    %172 = arith.select %169, %170, %171 : vector<1x64xi1>, vector<1x64xi32>
    %173 = arith.ori %151, %172 : vector<1x64xi32>
    %c0_130 = arith.constant 0 : index
    %c1_131 = arith.constant 1 : index
    %c0_132 = arith.constant 0 : index
    %174 = memref.load %arg1[%c0_130, %c1_131, %c0_132] : memref<2x8x4xi32, #tpu.memory_space<smem>>
    %c0_133 = arith.constant 0 : index
    %c1_134 = arith.constant 1 : index
    %c1_135 = arith.constant 1 : index
    %175 = memref.load %arg1[%c0_133, %c1_134, %c1_135] : memref<2x8x4xi32, #tpu.memory_space<smem>>
    %c0_136 = arith.constant 0 : index
    %c1_137 = arith.constant 1 : index
    %c2_138 = arith.constant 2 : index
    %176 = memref.load %arg1[%c0_136, %c1_137, %c2_138] : memref<2x8x4xi32, #tpu.memory_space<smem>>
    %c0_139 = arith.constant 0 : index
    %c1_140 = arith.constant 1 : index
    %c3_141 = arith.constant 3 : index
    %177 = memref.load %arg1[%c0_139, %c1_140, %c3_141] : memref<2x8x4xi32, #tpu.memory_space<smem>>
    %178 = vector.broadcast %175 : i32 to vector<64x1xi32>
    %179 = arith.cmpi sge, %148, %178 : vector<64x1xi32>
    %180 = vector.broadcast %177 : i32 to vector<64x1xi32>
    %181 = arith.cmpi sle, %148, %180 : vector<64x1xi32>
    %182 = arith.andi %179, %181 : vector<64x1xi1>
    %c2_i32 = arith.constant 2 : i32
    %c0_i32_142 = arith.constant 0 : i32
    %183 = vector.broadcast %c2_i32 : i32 to vector<64x1xi32>
    %184 = vector.broadcast %c0_i32_142 : i32 to vector<64x1xi32>
    %185 = arith.select %182, %183, %184 : vector<64x1xi1>, vector<64x1xi32>
    %186 = arith.ori %164, %185 : vector<64x1xi32>
    %187 = vector.broadcast %174 : i32 to vector<1x64xi32>
    %188 = arith.cmpi sge, %149, %187 : vector<1x64xi32>
    %189 = vector.broadcast %176 : i32 to vector<1x64xi32>
    %190 = arith.cmpi sle, %149, %189 : vector<1x64xi32>
    %191 = arith.andi %188, %190 : vector<1x64xi1>
    %c2_i32_143 = arith.constant 2 : i32
    %c0_i32_144 = arith.constant 0 : i32
    %192 = vector.broadcast %c2_i32_143 : i32 to vector<1x64xi32>
    %193 = vector.broadcast %c0_i32_144 : i32 to vector<1x64xi32>
    %194 = arith.select %191, %192, %193 : vector<1x64xi1>, vector<1x64xi32>
    %195 = arith.ori %173, %194 : vector<1x64xi32>
    %c0_145 = arith.constant 0 : index
    %c2_146 = arith.constant 2 : index
    %c0_147 = arith.constant 0 : index
    %196 = memref.load %arg1[%c0_145, %c2_146, %c0_147] : memref<2x8x4xi32, #tpu.memory_space<smem>>
    %c0_148 = arith.constant 0 : index
    %c2_149 = arith.constant 2 : index
    %c1_150 = arith.constant 1 : index
    %197 = memref.load %arg1[%c0_148, %c2_149, %c1_150] : memref<2x8x4xi32, #tpu.memory_space<smem>>
    %c0_151 = arith.constant 0 : index
    %c2_152 = arith.constant 2 : index
    %c2_153 = arith.constant 2 : index
    %198 = memref.load %arg1[%c0_151, %c2_152, %c2_153] : memref<2x8x4xi32, #tpu.memory_space<smem>>
    %c0_154 = arith.constant 0 : index
    %c2_155 = arith.constant 2 : index
    %c3_156 = arith.constant 3 : index
    %199 = memref.load %arg1[%c0_154, %c2_155, %c3_156] : memref<2x8x4xi32, #tpu.memory_space<smem>>
    %200 = vector.broadcast %197 : i32 to vector<64x1xi32>
    %201 = arith.cmpi sge, %148, %200 : vector<64x1xi32>
    %202 = vector.broadcast %199 : i32 to vector<64x1xi32>
    %203 = arith.cmpi sle, %148, %202 : vector<64x1xi32>
    %204 = arith.andi %201, %203 : vector<64x1xi1>
    %c4_i32 = arith.constant 4 : i32
    %c0_i32_157 = arith.constant 0 : i32
    %205 = vector.broadcast %c4_i32 : i32 to vector<64x1xi32>
    %206 = vector.broadcast %c0_i32_157 : i32 to vector<64x1xi32>
    %207 = arith.select %204, %205, %206 : vector<64x1xi1>, vector<64x1xi32>
    %208 = arith.ori %186, %207 : vector<64x1xi32>
    %209 = vector.broadcast %196 : i32 to vector<1x64xi32>
    %210 = arith.cmpi sge, %149, %209 : vector<1x64xi32>
    %211 = vector.broadcast %198 : i32 to vector<1x64xi32>
    %212 = arith.cmpi sle, %149, %211 : vector<1x64xi32>
    %213 = arith.andi %210, %212 : vector<1x64xi1>
    %c4_i32_158 = arith.constant 4 : i32
    %c0_i32_159 = arith.constant 0 : i32
    %214 = vector.broadcast %c4_i32_158 : i32 to vector<1x64xi32>
    %215 = vector.broadcast %c0_i32_159 : i32 to vector<1x64xi32>
    %216 = arith.select %213, %214, %215 : vector<1x64xi1>, vector<1x64xi32>
    %217 = arith.ori %195, %216 : vector<1x64xi32>
    %c0_160 = arith.constant 0 : index
    %c3_161 = arith.constant 3 : index
    %c0_162 = arith.constant 0 : index
    %218 = memref.load %arg1[%c0_160, %c3_161, %c0_162] : memref<2x8x4xi32, #tpu.memory_space<smem>>
    %c0_163 = arith.constant 0 : index
    %c3_164 = arith.constant 3 : index
    %c1_165 = arith.constant 1 : index
    %219 = memref.load %arg1[%c0_163, %c3_164, %c1_165] : memref<2x8x4xi32, #tpu.memory_space<smem>>
    %c0_166 = arith.constant 0 : index
    %c3_167 = arith.constant 3 : index
    %c2_168 = arith.constant 2 : index
    %220 = memref.load %arg1[%c0_166, %c3_167, %c2_168] : memref<2x8x4xi32, #tpu.memory_space<smem>>
    %c0_169 = arith.constant 0 : index
    %c3_170 = arith.constant 3 : index
    %c3_171 = arith.constant 3 : index
    %221 = memref.load %arg1[%c0_169, %c3_170, %c3_171] : memref<2x8x4xi32, #tpu.memory_space<smem>>
    %222 = vector.broadcast %219 : i32 to vector<64x1xi32>
    %223 = arith.cmpi sge, %148, %222 : vector<64x1xi32>
    %224 = vector.broadcast %221 : i32 to vector<64x1xi32>
    %225 = arith.cmpi sle, %148, %224 : vector<64x1xi32>
    %226 = arith.andi %223, %225 : vector<64x1xi1>
    %c8_i32 = arith.constant 8 : i32
    %c0_i32_172 = arith.constant 0 : i32
    %227 = vector.broadcast %c8_i32 : i32 to vector<64x1xi32>
    %228 = vector.broadcast %c0_i32_172 : i32 to vector<64x1xi32>
    %229 = arith.select %226, %227, %228 : vector<64x1xi1>, vector<64x1xi32>
    %230 = arith.ori %208, %229 : vector<64x1xi32>
    %231 = vector.broadcast %218 : i32 to vector<1x64xi32>
    %232 = arith.cmpi sge, %149, %231 : vector<1x64xi32>
    %233 = vector.broadcast %220 : i32 to vector<1x64xi32>
    %234 = arith.cmpi sle, %149, %233 : vector<1x64xi32>
    %235 = arith.andi %232, %234 : vector<1x64xi1>
    %c8_i32_173 = arith.constant 8 : i32
    %c0_i32_174 = arith.constant 0 : i32
    %236 = vector.broadcast %c8_i32_173 : i32 to vector<1x64xi32>
    %237 = vector.broadcast %c0_i32_174 : i32 to vector<1x64xi32>
    %238 = arith.select %235, %236, %237 : vector<1x64xi1>, vector<1x64xi32>
    %239 = arith.ori %217, %238 : vector<1x64xi32>
    %c0_175 = arith.constant 0 : index
    %c4 = arith.constant 4 : index
    %c0_176 = arith.constant 0 : index
    %240 = memref.load %arg1[%c0_175, %c4, %c0_176] : memref<2x8x4xi32, #tpu.memory_space<smem>>
    %c0_177 = arith.constant 0 : index
    %c4_178 = arith.constant 4 : index
    %c1_179 = arith.constant 1 : index
    %241 = memref.load %arg1[%c0_177, %c4_178, %c1_179] : memref<2x8x4xi32, #tpu.memory_space<smem>>
    %c0_180 = arith.constant 0 : index
    %c4_181 = arith.constant 4 : index
    %c2_182 = arith.constant 2 : index
    %242 = memref.load %arg1[%c0_180, %c4_181, %c2_182] : memref<2x8x4xi32, #tpu.memory_space<smem>>
    %c0_183 = arith.constant 0 : index
    %c4_184 = arith.constant 4 : index
    %c3_185 = arith.constant 3 : index
    %243 = memref.load %arg1[%c0_183, %c4_184, %c3_185] : memref<2x8x4xi32, #tpu.memory_space<smem>>
    %244 = vector.broadcast %241 : i32 to vector<64x1xi32>
    %245 = arith.cmpi sge, %148, %244 : vector<64x1xi32>
    %246 = vector.broadcast %243 : i32 to vector<64x1xi32>
    %247 = arith.cmpi sle, %148, %246 : vector<64x1xi32>
    %248 = arith.andi %245, %247 : vector<64x1xi1>
    %c16_i32 = arith.constant 16 : i32
    %c0_i32_186 = arith.constant 0 : i32
    %249 = vector.broadcast %c16_i32 : i32 to vector<64x1xi32>
    %250 = vector.broadcast %c0_i32_186 : i32 to vector<64x1xi32>
    %251 = arith.select %248, %249, %250 : vector<64x1xi1>, vector<64x1xi32>
    %252 = arith.ori %230, %251 : vector<64x1xi32>
    %253 = vector.broadcast %240 : i32 to vector<1x64xi32>
    %254 = arith.cmpi sge, %149, %253 : vector<1x64xi32>
    %255 = vector.broadcast %242 : i32 to vector<1x64xi32>
    %256 = arith.cmpi sle, %149, %255 : vector<1x64xi32>
    %257 = arith.andi %254, %256 : vector<1x64xi1>
    %c16_i32_187 = arith.constant 16 : i32
    %c0_i32_188 = arith.constant 0 : i32
    %258 = vector.broadcast %c16_i32_187 : i32 to vector<1x64xi32>
    %259 = vector.broadcast %c0_i32_188 : i32 to vector<1x64xi32>
    %260 = arith.select %257, %258, %259 : vector<1x64xi1>, vector<1x64xi32>
    %261 = arith.ori %239, %260 : vector<1x64xi32>
    %c0_189 = arith.constant 0 : index
    %c5 = arith.constant 5 : index
    %c0_190 = arith.constant 0 : index
    %262 = memref.load %arg1[%c0_189, %c5, %c0_190] : memref<2x8x4xi32, #tpu.memory_space<smem>>
    %c0_191 = arith.constant 0 : index
    %c5_192 = arith.constant 5 : index
    %c1_193 = arith.constant 1 : index
    %263 = memref.load %arg1[%c0_191, %c5_192, %c1_193] : memref<2x8x4xi32, #tpu.memory_space<smem>>
    %c0_194 = arith.constant 0 : index
    %c5_195 = arith.constant 5 : index
    %c2_196 = arith.constant 2 : index
    %264 = memref.load %arg1[%c0_194, %c5_195, %c2_196] : memref<2x8x4xi32, #tpu.memory_space<smem>>
    %c0_197 = arith.constant 0 : index
    %c5_198 = arith.constant 5 : index
    %c3_199 = arith.constant 3 : index
    %265 = memref.load %arg1[%c0_197, %c5_198, %c3_199] : memref<2x8x4xi32, #tpu.memory_space<smem>>
    %266 = vector.broadcast %263 : i32 to vector<64x1xi32>
    %267 = arith.cmpi sge, %148, %266 : vector<64x1xi32>
    %268 = vector.broadcast %265 : i32 to vector<64x1xi32>
    %269 = arith.cmpi sle, %148, %268 : vector<64x1xi32>
    %270 = arith.andi %267, %269 : vector<64x1xi1>
    %c32_i32 = arith.constant 32 : i32
    %c0_i32_200 = arith.constant 0 : i32
    %271 = vector.broadcast %c32_i32 : i32 to vector<64x1xi32>
    %272 = vector.broadcast %c0_i32_200 : i32 to vector<64x1xi32>
    %273 = arith.select %270, %271, %272 : vector<64x1xi1>, vector<64x1xi32>
    %274 = arith.ori %252, %273 : vector<64x1xi32>
    %275 = vector.broadcast %262 : i32 to vector<1x64xi32>
    %276 = arith.cmpi sge, %149, %275 : vector<1x64xi32>
    %277 = vector.broadcast %264 : i32 to vector<1x64xi32>
    %278 = arith.cmpi sle, %149, %277 : vector<1x64xi32>
    %279 = arith.andi %276, %278 : vector<1x64xi1>
    %c32_i32_201 = arith.constant 32 : i32
    %c0_i32_202 = arith.constant 0 : i32
    %280 = vector.broadcast %c32_i32_201 : i32 to vector<1x64xi32>
    %281 = vector.broadcast %c0_i32_202 : i32 to vector<1x64xi32>
    %282 = arith.select %279, %280, %281 : vector<1x64xi1>, vector<1x64xi32>
    %283 = arith.ori %261, %282 : vector<1x64xi32>
    %c0_203 = arith.constant 0 : index
    %c6 = arith.constant 6 : index
    %c0_204 = arith.constant 0 : index
    %284 = memref.load %arg1[%c0_203, %c6, %c0_204] : memref<2x8x4xi32, #tpu.memory_space<smem>>
    %c0_205 = arith.constant 0 : index
    %c6_206 = arith.constant 6 : index
    %c1_207 = arith.constant 1 : index
    %285 = memref.load %arg1[%c0_205, %c6_206, %c1_207] : memref<2x8x4xi32, #tpu.memory_space<smem>>
    %c0_208 = arith.constant 0 : index
    %c6_209 = arith.constant 6 : index
    %c2_210 = arith.constant 2 : index
    %286 = memref.load %arg1[%c0_208, %c6_209, %c2_210] : memref<2x8x4xi32, #tpu.memory_space<smem>>
    %c0_211 = arith.constant 0 : index
    %c6_212 = arith.constant 6 : index
    %c3_213 = arith.constant 3 : index
    %287 = memref.load %arg1[%c0_211, %c6_212, %c3_213] : memref<2x8x4xi32, #tpu.memory_space<smem>>
    %288 = vector.broadcast %285 : i32 to vector<64x1xi32>
    %289 = arith.cmpi sge, %148, %288 : vector<64x1xi32>
    %290 = vector.broadcast %287 : i32 to vector<64x1xi32>
    %291 = arith.cmpi sle, %148, %290 : vector<64x1xi32>
    %292 = arith.andi %289, %291 : vector<64x1xi1>
    %c64_i32 = arith.constant 64 : i32
    %c0_i32_214 = arith.constant 0 : i32
    %293 = vector.broadcast %c64_i32 : i32 to vector<64x1xi32>
    %294 = vector.broadcast %c0_i32_214 : i32 to vector<64x1xi32>
    %295 = arith.select %292, %293, %294 : vector<64x1xi1>, vector<64x1xi32>
    %296 = arith.ori %274, %295 : vector<64x1xi32>
    %297 = vector.broadcast %284 : i32 to vector<1x64xi32>
    %298 = arith.cmpi sge, %149, %297 : vector<1x64xi32>
    %299 = vector.broadcast %286 : i32 to vector<1x64xi32>
    %300 = arith.cmpi sle, %149, %299 : vector<1x64xi32>
    %301 = arith.andi %298, %300 : vector<1x64xi1>
    %c64_i32_215 = arith.constant 64 : i32
    %c0_i32_216 = arith.constant 0 : i32
    %302 = vector.broadcast %c64_i32_215 : i32 to vector<1x64xi32>
    %303 = vector.broadcast %c0_i32_216 : i32 to vector<1x64xi32>
    %304 = arith.select %301, %302, %303 : vector<1x64xi1>, vector<1x64xi32>
    %305 = arith.ori %283, %304 : vector<1x64xi32>
    %c0_217 = arith.constant 0 : index
    %c7 = arith.constant 7 : index
    %c0_218 = arith.constant 0 : index
    %306 = memref.load %arg1[%c0_217, %c7, %c0_218] : memref<2x8x4xi32, #tpu.memory_space<smem>>
    %c0_219 = arith.constant 0 : index
    %c7_220 = arith.constant 7 : index
    %c1_221 = arith.constant 1 : index
    %307 = memref.load %arg1[%c0_219, %c7_220, %c1_221] : memref<2x8x4xi32, #tpu.memory_space<smem>>
    %c0_222 = arith.constant 0 : index
    %c7_223 = arith.constant 7 : index
    %c2_224 = arith.constant 2 : index
    %308 = memref.load %arg1[%c0_222, %c7_223, %c2_224] : memref<2x8x4xi32, #tpu.memory_space<smem>>
    %c0_225 = arith.constant 0 : index
    %c7_226 = arith.constant 7 : index
    %c3_227 = arith.constant 3 : index
    %309 = memref.load %arg1[%c0_225, %c7_226, %c3_227] : memref<2x8x4xi32, #tpu.memory_space<smem>>
    %310 = vector.broadcast %307 : i32 to vector<64x1xi32>
    %311 = arith.cmpi sge, %148, %310 : vector<64x1xi32>
    %312 = vector.broadcast %309 : i32 to vector<64x1xi32>
    %313 = arith.cmpi sle, %148, %312 : vector<64x1xi32>
    %314 = arith.andi %311, %313 : vector<64x1xi1>
    %c128_i32 = arith.constant 128 : i32
    %c0_i32_228 = arith.constant 0 : i32
    %315 = vector.broadcast %c128_i32 : i32 to vector<64x1xi32>
    %316 = vector.broadcast %c0_i32_228 : i32 to vector<64x1xi32>
    %317 = arith.select %314, %315, %316 : vector<64x1xi1>, vector<64x1xi32>
    %318 = arith.ori %296, %317 : vector<64x1xi32>
    %319 = vector.broadcast %306 : i32 to vector<1x64xi32>
    %320 = arith.cmpi sge, %149, %319 : vector<1x64xi32>
    %321 = vector.broadcast %308 : i32 to vector<1x64xi32>
    %322 = arith.cmpi sle, %149, %321 : vector<1x64xi32>
    %323 = arith.andi %320, %322 : vector<1x64xi1>
    %c128_i32_229 = arith.constant 128 : i32
    %c0_i32_230 = arith.constant 0 : i32
    %324 = vector.broadcast %c128_i32_229 : i32 to vector<1x64xi32>
    %325 = vector.broadcast %c0_i32_230 : i32 to vector<1x64xi32>
    %326 = arith.select %323, %324, %325 : vector<1x64xi1>, vector<1x64xi32>
    %327 = arith.ori %305, %326 : vector<1x64xi32>
    %328 = vector.broadcast %318 : vector<64x1xi32> to vector<64x64xi32>
    %329 = vector.broadcast %327 : vector<1x64xi32> to vector<64x64xi32>
    %330 = arith.andi %328, %329 : vector<64x64xi32>
    %c0_i32_231 = arith.constant 0 : i32
    %331 = vector.broadcast %c0_i32_231 : i32 to vector<64x64xi32>
    %332 = arith.cmpi ne, %330, %331 : vector<64x64xi32>
    %cst_232 = arith.constant 0.0705882385 : f32
    %333 = vector.broadcast %cst_232 : f32 to vector<64x64xf32>
    %334 = arith.cmpf ogt, %132, %333 : vector<64x64xf32>
    %cst_233 = arith.constant dense<true> : vector<64x64xi1>
    %335 = arith.xori %332, %cst_233 : vector<64x64xi1>
    %336 = arith.andi %334, %335 : vector<64x64xi1>
    %337 = arith.extui %336 : vector<64x64xi1> to vector<64x64xi32>
    %c0_234 = arith.constant 0 : index
    %c0_235 = arith.constant 0 : index
    %338 = vector.load %arg4[%c0_234, %c0_235] : memref<64x128xi32, #tpu.memory_space<vmem>>, vector<64x64xi32>
    tpu.vector_store %arg4[%c0_234, %c0_235], %337 {strides = array<i32>} : memref<64x128xi32, #tpu.memory_space<vmem>>, vector<64x64xi32>,
    %c1000000_i32 = arith.constant 1000000 : i32
    %339 = vector.broadcast %c1000000_i32 : i32 to vector<64x64xi32>
    %340 = arith.select %336, %147, %339 : vector<64x64xi1>, vector<64x64xi32>
    %341 = vector.shape_cast %340 : vector<64x64xi32> to vector<1x64x64xi32>
    %cst_236 = arith.constant dense<2147483647> : vector<1xi32>
    %342 = vector.multi_reduction <minsi>, %341, %cst_236 [1, 2] : vector<1x64x64xi32> to vector<1xi32>
    %343 = vector.shape_cast %342 : vector<1xi32> to vector<1x1x1xi32>
    %344 = vector.extract %343[0, 0, 0] : i32 from vector<1x1x1xi32>
    %c0_237 = arith.constant 0 : index
    %c0_238 = arith.constant 0 : index
    %345 = memref.load %arg5[%c0_237, %c0_238] : memref<2x4xi32, #tpu.memory_space<smem>>
    memref.store %344, %arg5[%c0_237, %c0_238] : memref<2x4xi32, #tpu.memory_space<smem>>
    %c1000000_i32_239 = arith.constant 1000000 : i32
    %346 = vector.broadcast %c1000000_i32_239 : i32 to vector<64x64xi32>
    %347 = arith.select %336, %146, %346 : vector<64x64xi1>, vector<64x64xi32>
    %348 = vector.shape_cast %347 : vector<64x64xi32> to vector<1x64x64xi32>
    %cst_240 = arith.constant dense<2147483647> : vector<1xi32>
    %349 = vector.multi_reduction <minsi>, %348, %cst_240 [1, 2] : vector<1x64x64xi32> to vector<1xi32>
    %350 = vector.shape_cast %349 : vector<1xi32> to vector<1x1x1xi32>
    %351 = vector.extract %350[0, 0, 0] : i32 from vector<1x1x1xi32>
    %c0_241 = arith.constant 0 : index
    %c1_242 = arith.constant 1 : index
    %352 = memref.load %arg5[%c0_241, %c1_242] : memref<2x4xi32, #tpu.memory_space<smem>>
    memref.store %351, %arg5[%c0_241, %c1_242] : memref<2x4xi32, #tpu.memory_space<smem>>
    %c-1000000_i32 = arith.constant -1000000 : i32
    %353 = vector.broadcast %c-1000000_i32 : i32 to vector<64x64xi32>
    %354 = arith.select %336, %147, %353 : vector<64x64xi1>, vector<64x64xi32>
    %355 = vector.shape_cast %354 : vector<64x64xi32> to vector<1x64x64xi32>
    %cst_243 = arith.constant dense<-2147483648> : vector<1xi32>
    %356 = vector.multi_reduction <maxsi>, %355, %cst_243 [1, 2] : vector<1x64x64xi32> to vector<1xi32>
    %357 = vector.shape_cast %356 : vector<1xi32> to vector<1x1x1xi32>
    %358 = vector.extract %357[0, 0, 0] : i32 from vector<1x1x1xi32>
    %c0_244 = arith.constant 0 : index
    %c2_245 = arith.constant 2 : index
    %359 = memref.load %arg5[%c0_244, %c2_245] : memref<2x4xi32, #tpu.memory_space<smem>>
    memref.store %358, %arg5[%c0_244, %c2_245] : memref<2x4xi32, #tpu.memory_space<smem>>
    %c-1000000_i32_246 = arith.constant -1000000 : i32
    %360 = vector.broadcast %c-1000000_i32_246 : i32 to vector<64x64xi32>
    %361 = arith.select %336, %146, %360 : vector<64x64xi1>, vector<64x64xi32>
    %362 = vector.shape_cast %361 : vector<64x64xi32> to vector<1x64x64xi32>
    %cst_247 = arith.constant dense<-2147483648> : vector<1xi32>
    %363 = vector.multi_reduction <maxsi>, %362, %cst_247 [1, 2] : vector<1x64x64xi32> to vector<1xi32>
    %364 = vector.shape_cast %363 : vector<1xi32> to vector<1x1x1xi32>
    %365 = vector.extract %364[0, 0, 0] : i32 from vector<1x1x1xi32>
    %c0_248 = arith.constant 0 : index
    %c3_249 = arith.constant 3 : index
    %366 = memref.load %arg5[%c0_248, %c3_249] : memref<2x4xi32, #tpu.memory_space<smem>>
    memref.store %365, %arg5[%c0_248, %c3_249] : memref<2x4xi32, #tpu.memory_space<smem>>
    %c0_i32_250 = arith.constant 0 : i32
    %367 = vector.broadcast %c0_i32_250 : i32 to vector<64x1xi32>
    %c0_i32_251 = arith.constant 0 : i32
    %368 = vector.broadcast %c0_i32_251 : i32 to vector<1x64xi32>
    %c1_252 = arith.constant 1 : index
    %c0_253 = arith.constant 0 : index
    %c0_254 = arith.constant 0 : index
    %369 = memref.load %arg1[%c1_252, %c0_253, %c0_254] : memref<2x8x4xi32, #tpu.memory_space<smem>>
    %c1_255 = arith.constant 1 : index
    %c0_256 = arith.constant 0 : index
    %c1_257 = arith.constant 1 : index
    %370 = memref.load %arg1[%c1_255, %c0_256, %c1_257] : memref<2x8x4xi32, #tpu.memory_space<smem>>
    %c1_258 = arith.constant 1 : index
    %c0_259 = arith.constant 0 : index
    %c2_260 = arith.constant 2 : index
    %371 = memref.load %arg1[%c1_258, %c0_259, %c2_260] : memref<2x8x4xi32, #tpu.memory_space<smem>>
    %c1_261 = arith.constant 1 : index
    %c0_262 = arith.constant 0 : index
    %c3_263 = arith.constant 3 : index
    %372 = memref.load %arg1[%c1_261, %c0_262, %c3_263] : memref<2x8x4xi32, #tpu.memory_space<smem>>
    %373 = vector.broadcast %370 : i32 to vector<64x1xi32>
    %374 = arith.cmpi sge, %148, %373 : vector<64x1xi32>
    %375 = vector.broadcast %372 : i32 to vector<64x1xi32>
    %376 = arith.cmpi sle, %148, %375 : vector<64x1xi32>
    %377 = arith.andi %374, %376 : vector<64x1xi1>
    %c1_i32_264 = arith.constant 1 : i32
    %c0_i32_265 = arith.constant 0 : i32
    %378 = vector.broadcast %c1_i32_264 : i32 to vector<64x1xi32>
    %379 = vector.broadcast %c0_i32_265 : i32 to vector<64x1xi32>
    %380 = arith.select %377, %378, %379 : vector<64x1xi1>, vector<64x1xi32>
    %381 = arith.ori %367, %380 : vector<64x1xi32>
    %382 = vector.broadcast %369 : i32 to vector<1x64xi32>
    %383 = arith.cmpi sge, %149, %382 : vector<1x64xi32>
    %384 = vector.broadcast %371 : i32 to vector<1x64xi32>
    %385 = arith.cmpi sle, %149, %384 : vector<1x64xi32>
    %386 = arith.andi %383, %385 : vector<1x64xi1>
    %c1_i32_266 = arith.constant 1 : i32
    %c0_i32_267 = arith.constant 0 : i32
    %387 = vector.broadcast %c1_i32_266 : i32 to vector<1x64xi32>
    %388 = vector.broadcast %c0_i32_267 : i32 to vector<1x64xi32>
    %389 = arith.select %386, %387, %388 : vector<1x64xi1>, vector<1x64xi32>
    %390 = arith.ori %368, %389 : vector<1x64xi32>
    %c1_268 = arith.constant 1 : index
    %c1_269 = arith.constant 1 : index
    %c0_270 = arith.constant 0 : index
    %391 = memref.load %arg1[%c1_268, %c1_269, %c0_270] : memref<2x8x4xi32, #tpu.memory_space<smem>>
    %c1_271 = arith.constant 1 : index
    %c1_272 = arith.constant 1 : index
    %c1_273 = arith.constant 1 : index
    %392 = memref.load %arg1[%c1_271, %c1_272, %c1_273] : memref<2x8x4xi32, #tpu.memory_space<smem>>
    %c1_274 = arith.constant 1 : index
    %c1_275 = arith.constant 1 : index
    %c2_276 = arith.constant 2 : index
    %393 = memref.load %arg1[%c1_274, %c1_275, %c2_276] : memref<2x8x4xi32, #tpu.memory_space<smem>>
    %c1_277 = arith.constant 1 : index
    %c1_278 = arith.constant 1 : index
    %c3_279 = arith.constant 3 : index
    %394 = memref.load %arg1[%c1_277, %c1_278, %c3_279] : memref<2x8x4xi32, #tpu.memory_space<smem>>
    %395 = vector.broadcast %392 : i32 to vector<64x1xi32>
    %396 = arith.cmpi sge, %148, %395 : vector<64x1xi32>
    %397 = vector.broadcast %394 : i32 to vector<64x1xi32>
    %398 = arith.cmpi sle, %148, %397 : vector<64x1xi32>
    %399 = arith.andi %396, %398 : vector<64x1xi1>
    %c2_i32_280 = arith.constant 2 : i32
    %c0_i32_281 = arith.constant 0 : i32
    %400 = vector.broadcast %c2_i32_280 : i32 to vector<64x1xi32>
    %401 = vector.broadcast %c0_i32_281 : i32 to vector<64x1xi32>
    %402 = arith.select %399, %400, %401 : vector<64x1xi1>, vector<64x1xi32>
    %403 = arith.ori %381, %402 : vector<64x1xi32>
    %404 = vector.broadcast %391 : i32 to vector<1x64xi32>
    %405 = arith.cmpi sge, %149, %404 : vector<1x64xi32>
    %406 = vector.broadcast %393 : i32 to vector<1x64xi32>
    %407 = arith.cmpi sle, %149, %406 : vector<1x64xi32>
    %408 = arith.andi %405, %407 : vector<1x64xi1>
    %c2_i32_282 = arith.constant 2 : i32
    %c0_i32_283 = arith.constant 0 : i32
    %409 = vector.broadcast %c2_i32_282 : i32 to vector<1x64xi32>
    %410 = vector.broadcast %c0_i32_283 : i32 to vector<1x64xi32>
    %411 = arith.select %408, %409, %410 : vector<1x64xi1>, vector<1x64xi32>
    %412 = arith.ori %390, %411 : vector<1x64xi32>
    %c1_284 = arith.constant 1 : index
    %c2_285 = arith.constant 2 : index
    %c0_286 = arith.constant 0 : index
    %413 = memref.load %arg1[%c1_284, %c2_285, %c0_286] : memref<2x8x4xi32, #tpu.memory_space<smem>>
    %c1_287 = arith.constant 1 : index
    %c2_288 = arith.constant 2 : index
    %c1_289 = arith.constant 1 : index
    %414 = memref.load %arg1[%c1_287, %c2_288, %c1_289] : memref<2x8x4xi32, #tpu.memory_space<smem>>
    %c1_290 = arith.constant 1 : index
    %c2_291 = arith.constant 2 : index
    %c2_292 = arith.constant 2 : index
    %415 = memref.load %arg1[%c1_290, %c2_291, %c2_292] : memref<2x8x4xi32, #tpu.memory_space<smem>>
    %c1_293 = arith.constant 1 : index
    %c2_294 = arith.constant 2 : index
    %c3_295 = arith.constant 3 : index
    %416 = memref.load %arg1[%c1_293, %c2_294, %c3_295] : memref<2x8x4xi32, #tpu.memory_space<smem>>
    %417 = vector.broadcast %414 : i32 to vector<64x1xi32>
    %418 = arith.cmpi sge, %148, %417 : vector<64x1xi32>
    %419 = vector.broadcast %416 : i32 to vector<64x1xi32>
    %420 = arith.cmpi sle, %148, %419 : vector<64x1xi32>
    %421 = arith.andi %418, %420 : vector<64x1xi1>
    %c4_i32_296 = arith.constant 4 : i32
    %c0_i32_297 = arith.constant 0 : i32
    %422 = vector.broadcast %c4_i32_296 : i32 to vector<64x1xi32>
    %423 = vector.broadcast %c0_i32_297 : i32 to vector<64x1xi32>
    %424 = arith.select %421, %422, %423 : vector<64x1xi1>, vector<64x1xi32>
    %425 = arith.ori %403, %424 : vector<64x1xi32>
    %426 = vector.broadcast %413 : i32 to vector<1x64xi32>
    %427 = arith.cmpi sge, %149, %426 : vector<1x64xi32>
    %428 = vector.broadcast %415 : i32 to vector<1x64xi32>
    %429 = arith.cmpi sle, %149, %428 : vector<1x64xi32>
    %430 = arith.andi %427, %429 : vector<1x64xi1>
    %c4_i32_298 = arith.constant 4 : i32
    %c0_i32_299 = arith.constant 0 : i32
    %431 = vector.broadcast %c4_i32_298 : i32 to vector<1x64xi32>
    %432 = vector.broadcast %c0_i32_299 : i32 to vector<1x64xi32>
    %433 = arith.select %430, %431, %432 : vector<1x64xi1>, vector<1x64xi32>
    %434 = arith.ori %412, %433 : vector<1x64xi32>
    %c1_300 = arith.constant 1 : index
    %c3_301 = arith.constant 3 : index
    %c0_302 = arith.constant 0 : index
    %435 = memref.load %arg1[%c1_300, %c3_301, %c0_302] : memref<2x8x4xi32, #tpu.memory_space<smem>>
    %c1_303 = arith.constant 1 : index
    %c3_304 = arith.constant 3 : index
    %c1_305 = arith.constant 1 : index
    %436 = memref.load %arg1[%c1_303, %c3_304, %c1_305] : memref<2x8x4xi32, #tpu.memory_space<smem>>
    %c1_306 = arith.constant 1 : index
    %c3_307 = arith.constant 3 : index
    %c2_308 = arith.constant 2 : index
    %437 = memref.load %arg1[%c1_306, %c3_307, %c2_308] : memref<2x8x4xi32, #tpu.memory_space<smem>>
    %c1_309 = arith.constant 1 : index
    %c3_310 = arith.constant 3 : index
    %c3_311 = arith.constant 3 : index
    %438 = memref.load %arg1[%c1_309, %c3_310, %c3_311] : memref<2x8x4xi32, #tpu.memory_space<smem>>
    %439 = vector.broadcast %436 : i32 to vector<64x1xi32>
    %440 = arith.cmpi sge, %148, %439 : vector<64x1xi32>
    %441 = vector.broadcast %438 : i32 to vector<64x1xi32>
    %442 = arith.cmpi sle, %148, %441 : vector<64x1xi32>
    %443 = arith.andi %440, %442 : vector<64x1xi1>
    %c8_i32_312 = arith.constant 8 : i32
    %c0_i32_313 = arith.constant 0 : i32
    %444 = vector.broadcast %c8_i32_312 : i32 to vector<64x1xi32>
    %445 = vector.broadcast %c0_i32_313 : i32 to vector<64x1xi32>
    %446 = arith.select %443, %444, %445 : vector<64x1xi1>, vector<64x1xi32>
    %447 = arith.ori %425, %446 : vector<64x1xi32>
    %448 = vector.broadcast %435 : i32 to vector<1x64xi32>
    %449 = arith.cmpi sge, %149, %448 : vector<1x64xi32>
    %450 = vector.broadcast %437 : i32 to vector<1x64xi32>
    %451 = arith.cmpi sle, %149, %450 : vector<1x64xi32>
    %452 = arith.andi %449, %451 : vector<1x64xi1>
    %c8_i32_314 = arith.constant 8 : i32
    %c0_i32_315 = arith.constant 0 : i32
    %453 = vector.broadcast %c8_i32_314 : i32 to vector<1x64xi32>
    %454 = vector.broadcast %c0_i32_315 : i32 to vector<1x64xi32>
    %455 = arith.select %452, %453, %454 : vector<1x64xi1>, vector<1x64xi32>
    %456 = arith.ori %434, %455 : vector<1x64xi32>
    %c1_316 = arith.constant 1 : index
    %c4_317 = arith.constant 4 : index
    %c0_318 = arith.constant 0 : index
    %457 = memref.load %arg1[%c1_316, %c4_317, %c0_318] : memref<2x8x4xi32, #tpu.memory_space<smem>>
    %c1_319 = arith.constant 1 : index
    %c4_320 = arith.constant 4 : index
    %c1_321 = arith.constant 1 : index
    %458 = memref.load %arg1[%c1_319, %c4_320, %c1_321] : memref<2x8x4xi32, #tpu.memory_space<smem>>
    %c1_322 = arith.constant 1 : index
    %c4_323 = arith.constant 4 : index
    %c2_324 = arith.constant 2 : index
    %459 = memref.load %arg1[%c1_322, %c4_323, %c2_324] : memref<2x8x4xi32, #tpu.memory_space<smem>>
    %c1_325 = arith.constant 1 : index
    %c4_326 = arith.constant 4 : index
    %c3_327 = arith.constant 3 : index
    %460 = memref.load %arg1[%c1_325, %c4_326, %c3_327] : memref<2x8x4xi32, #tpu.memory_space<smem>>
    %461 = vector.broadcast %458 : i32 to vector<64x1xi32>
    %462 = arith.cmpi sge, %148, %461 : vector<64x1xi32>
    %463 = vector.broadcast %460 : i32 to vector<64x1xi32>
    %464 = arith.cmpi sle, %148, %463 : vector<64x1xi32>
    %465 = arith.andi %462, %464 : vector<64x1xi1>
    %c16_i32_328 = arith.constant 16 : i32
    %c0_i32_329 = arith.constant 0 : i32
    %466 = vector.broadcast %c16_i32_328 : i32 to vector<64x1xi32>
    %467 = vector.broadcast %c0_i32_329 : i32 to vector<64x1xi32>
    %468 = arith.select %465, %466, %467 : vector<64x1xi1>, vector<64x1xi32>
    %469 = arith.ori %447, %468 : vector<64x1xi32>
    %470 = vector.broadcast %457 : i32 to vector<1x64xi32>
    %471 = arith.cmpi sge, %149, %470 : vector<1x64xi32>
    %472 = vector.broadcast %459 : i32 to vector<1x64xi32>
    %473 = arith.cmpi sle, %149, %472 : vector<1x64xi32>
    %474 = arith.andi %471, %473 : vector<1x64xi1>
    %c16_i32_330 = arith.constant 16 : i32
    %c0_i32_331 = arith.constant 0 : i32
    %475 = vector.broadcast %c16_i32_330 : i32 to vector<1x64xi32>
    %476 = vector.broadcast %c0_i32_331 : i32 to vector<1x64xi32>
    %477 = arith.select %474, %475, %476 : vector<1x64xi1>, vector<1x64xi32>
    %478 = arith.ori %456, %477 : vector<1x64xi32>
    %c1_332 = arith.constant 1 : index
    %c5_333 = arith.constant 5 : index
    %c0_334 = arith.constant 0 : index
    %479 = memref.load %arg1[%c1_332, %c5_333, %c0_334] : memref<2x8x4xi32, #tpu.memory_space<smem>>
    %c1_335 = arith.constant 1 : index
    %c5_336 = arith.constant 5 : index
    %c1_337 = arith.constant 1 : index
    %480 = memref.load %arg1[%c1_335, %c5_336, %c1_337] : memref<2x8x4xi32, #tpu.memory_space<smem>>
    %c1_338 = arith.constant 1 : index
    %c5_339 = arith.constant 5 : index
    %c2_340 = arith.constant 2 : index
    %481 = memref.load %arg1[%c1_338, %c5_339, %c2_340] : memref<2x8x4xi32, #tpu.memory_space<smem>>
    %c1_341 = arith.constant 1 : index
    %c5_342 = arith.constant 5 : index
    %c3_343 = arith.constant 3 : index
    %482 = memref.load %arg1[%c1_341, %c5_342, %c3_343] : memref<2x8x4xi32, #tpu.memory_space<smem>>
    %483 = vector.broadcast %480 : i32 to vector<64x1xi32>
    %484 = arith.cmpi sge, %148, %483 : vector<64x1xi32>
    %485 = vector.broadcast %482 : i32 to vector<64x1xi32>
    %486 = arith.cmpi sle, %148, %485 : vector<64x1xi32>
    %487 = arith.andi %484, %486 : vector<64x1xi1>
    %c32_i32_344 = arith.constant 32 : i32
    %c0_i32_345 = arith.constant 0 : i32
    %488 = vector.broadcast %c32_i32_344 : i32 to vector<64x1xi32>
    %489 = vector.broadcast %c0_i32_345 : i32 to vector<64x1xi32>
    %490 = arith.select %487, %488, %489 : vector<64x1xi1>, vector<64x1xi32>
    %491 = arith.ori %469, %490 : vector<64x1xi32>
    %492 = vector.broadcast %479 : i32 to vector<1x64xi32>
    %493 = arith.cmpi sge, %149, %492 : vector<1x64xi32>
    %494 = vector.broadcast %481 : i32 to vector<1x64xi32>
    %495 = arith.cmpi sle, %149, %494 : vector<1x64xi32>
    %496 = arith.andi %493, %495 : vector<1x64xi1>
    %c32_i32_346 = arith.constant 32 : i32
    %c0_i32_347 = arith.constant 0 : i32
    %497 = vector.broadcast %c32_i32_346 : i32 to vector<1x64xi32>
    %498 = vector.broadcast %c0_i32_347 : i32 to vector<1x64xi32>
    %499 = arith.select %496, %497, %498 : vector<1x64xi1>, vector<1x64xi32>
    %500 = arith.ori %478, %499 : vector<1x64xi32>
    %c1_348 = arith.constant 1 : index
    %c6_349 = arith.constant 6 : index
    %c0_350 = arith.constant 0 : index
    %501 = memref.load %arg1[%c1_348, %c6_349, %c0_350] : memref<2x8x4xi32, #tpu.memory_space<smem>>
    %c1_351 = arith.constant 1 : index
    %c6_352 = arith.constant 6 : index
    %c1_353 = arith.constant 1 : index
    %502 = memref.load %arg1[%c1_351, %c6_352, %c1_353] : memref<2x8x4xi32, #tpu.memory_space<smem>>
    %c1_354 = arith.constant 1 : index
    %c6_355 = arith.constant 6 : index
    %c2_356 = arith.constant 2 : index
    %503 = memref.load %arg1[%c1_354, %c6_355, %c2_356] : memref<2x8x4xi32, #tpu.memory_space<smem>>
    %c1_357 = arith.constant 1 : index
    %c6_358 = arith.constant 6 : index
    %c3_359 = arith.constant 3 : index
    %504 = memref.load %arg1[%c1_357, %c6_358, %c3_359] : memref<2x8x4xi32, #tpu.memory_space<smem>>
    %505 = vector.broadcast %502 : i32 to vector<64x1xi32>
    %506 = arith.cmpi sge, %148, %505 : vector<64x1xi32>
    %507 = vector.broadcast %504 : i32 to vector<64x1xi32>
    %508 = arith.cmpi sle, %148, %507 : vector<64x1xi32>
    %509 = arith.andi %506, %508 : vector<64x1xi1>
    %c64_i32_360 = arith.constant 64 : i32
    %c0_i32_361 = arith.constant 0 : i32
    %510 = vector.broadcast %c64_i32_360 : i32 to vector<64x1xi32>
    %511 = vector.broadcast %c0_i32_361 : i32 to vector<64x1xi32>
    %512 = arith.select %509, %510, %511 : vector<64x1xi1>, vector<64x1xi32>
    %513 = arith.ori %491, %512 : vector<64x1xi32>
    %514 = vector.broadcast %501 : i32 to vector<1x64xi32>
    %515 = arith.cmpi sge, %149, %514 : vector<1x64xi32>
    %516 = vector.broadcast %503 : i32 to vector<1x64xi32>
    %517 = arith.cmpi sle, %149, %516 : vector<1x64xi32>
    %518 = arith.andi %515, %517 : vector<1x64xi1>
    %c64_i32_362 = arith.constant 64 : i32
    %c0_i32_363 = arith.constant 0 : i32
    %519 = vector.broadcast %c64_i32_362 : i32 to vector<1x64xi32>
    %520 = vector.broadcast %c0_i32_363 : i32 to vector<1x64xi32>
    %521 = arith.select %518, %519, %520 : vector<1x64xi1>, vector<1x64xi32>
    %522 = arith.ori %500, %521 : vector<1x64xi32>
    %c1_364 = arith.constant 1 : index
    %c7_365 = arith.constant 7 : index
    %c0_366 = arith.constant 0 : index
    %523 = memref.load %arg1[%c1_364, %c7_365, %c0_366] : memref<2x8x4xi32, #tpu.memory_space<smem>>
    %c1_367 = arith.constant 1 : index
    %c7_368 = arith.constant 7 : index
    %c1_369 = arith.constant 1 : index
    %524 = memref.load %arg1[%c1_367, %c7_368, %c1_369] : memref<2x8x4xi32, #tpu.memory_space<smem>>
    %c1_370 = arith.constant 1 : index
    %c7_371 = arith.constant 7 : index
    %c2_372 = arith.constant 2 : index
    %525 = memref.load %arg1[%c1_370, %c7_371, %c2_372] : memref<2x8x4xi32, #tpu.memory_space<smem>>
    %c1_373 = arith.constant 1 : index
    %c7_374 = arith.constant 7 : index
    %c3_375 = arith.constant 3 : index
    %526 = memref.load %arg1[%c1_373, %c7_374, %c3_375] : memref<2x8x4xi32, #tpu.memory_space<smem>>
    %527 = vector.broadcast %524 : i32 to vector<64x1xi32>
    %528 = arith.cmpi sge, %148, %527 : vector<64x1xi32>
    %529 = vector.broadcast %526 : i32 to vector<64x1xi32>
    %530 = arith.cmpi sle, %148, %529 : vector<64x1xi32>
    %531 = arith.andi %528, %530 : vector<64x1xi1>
    %c128_i32_376 = arith.constant 128 : i32
    %c0_i32_377 = arith.constant 0 : i32
    %532 = vector.broadcast %c128_i32_376 : i32 to vector<64x1xi32>
    %533 = vector.broadcast %c0_i32_377 : i32 to vector<64x1xi32>
    %534 = arith.select %531, %532, %533 : vector<64x1xi1>, vector<64x1xi32>
    %535 = arith.ori %513, %534 : vector<64x1xi32>
    %536 = vector.broadcast %523 : i32 to vector<1x64xi32>
    %537 = arith.cmpi sge, %149, %536 : vector<1x64xi32>
    %538 = vector.broadcast %525 : i32 to vector<1x64xi32>
    %539 = arith.cmpi sle, %149, %538 : vector<1x64xi32>
    %540 = arith.andi %537, %539 : vector<1x64xi1>
    %c128_i32_378 = arith.constant 128 : i32
    %c0_i32_379 = arith.constant 0 : i32
    %541 = vector.broadcast %c128_i32_378 : i32 to vector<1x64xi32>
    %542 = vector.broadcast %c0_i32_379 : i32 to vector<1x64xi32>
    %543 = arith.select %540, %541, %542 : vector<1x64xi1>, vector<1x64xi32>
    %544 = arith.ori %522, %543 : vector<1x64xi32>
    %545 = vector.broadcast %535 : vector<64x1xi32> to vector<64x64xi32>
    %546 = vector.broadcast %544 : vector<1x64xi32> to vector<64x64xi32>
    %547 = arith.andi %545, %546 : vector<64x64xi32>
    %c0_i32_380 = arith.constant 0 : i32
    %548 = vector.broadcast %c0_i32_380 : i32 to vector<64x64xi32>
    %549 = arith.cmpi ne, %547, %548 : vector<64x64xi32>
    %cst_381 = arith.constant 0.0705882385 : f32
    %550 = vector.broadcast %cst_381 : f32 to vector<64x64xf32>
    %551 = arith.cmpf ogt, %145, %550 : vector<64x64xf32>
    %cst_382 = arith.constant dense<true> : vector<64x64xi1>
    %552 = arith.xori %549, %cst_382 : vector<64x64xi1>
    %553 = arith.andi %551, %552 : vector<64x64xi1>
    %554 = arith.extui %553 : vector<64x64xi1> to vector<64x64xi32>
    %c0_383 = arith.constant 0 : index
    %c64 = arith.constant 64 : index
    %555 = vector.load %arg4[%c0_383, %c64] : memref<64x128xi32, #tpu.memory_space<vmem>>, vector<64x64xi32>
    tpu.vector_store %arg4[%c0_383, %c64], %554 {strides = array<i32>} : memref<64x128xi32, #tpu.memory_space<vmem>>, vector<64x64xi32>,
    %c1000000_i32_384 = arith.constant 1000000 : i32
    %556 = vector.broadcast %c1000000_i32_384 : i32 to vector<64x64xi32>
    %557 = arith.select %553, %147, %556 : vector<64x64xi1>, vector<64x64xi32>
    %558 = vector.shape_cast %557 : vector<64x64xi32> to vector<1x64x64xi32>
    %cst_385 = arith.constant dense<2147483647> : vector<1xi32>
    %559 = vector.multi_reduction <minsi>, %558, %cst_385 [1, 2] : vector<1x64x64xi32> to vector<1xi32>
    %560 = vector.shape_cast %559 : vector<1xi32> to vector<1x1x1xi32>
    %561 = vector.extract %560[0, 0, 0] : i32 from vector<1x1x1xi32>
    %c1_386 = arith.constant 1 : index
    %c0_387 = arith.constant 0 : index
    %562 = memref.load %arg5[%c1_386, %c0_387] : memref<2x4xi32, #tpu.memory_space<smem>>
    memref.store %561, %arg5[%c1_386, %c0_387] : memref<2x4xi32, #tpu.memory_space<smem>>
    %c1000000_i32_388 = arith.constant 1000000 : i32
    %563 = vector.broadcast %c1000000_i32_388 : i32 to vector<64x64xi32>
    %564 = arith.select %553, %146, %563 : vector<64x64xi1>, vector<64x64xi32>
    %565 = vector.shape_cast %564 : vector<64x64xi32> to vector<1x64x64xi32>
    %cst_389 = arith.constant dense<2147483647> : vector<1xi32>
    %566 = vector.multi_reduction <minsi>, %565, %cst_389 [1, 2] : vector<1x64x64xi32> to vector<1xi32>
    %567 = vector.shape_cast %566 : vector<1xi32> to vector<1x1x1xi32>
    %568 = vector.extract %567[0, 0, 0] : i32 from vector<1x1x1xi32>
    %c1_390 = arith.constant 1 : index
    %c1_391 = arith.constant 1 : index
    %569 = memref.load %arg5[%c1_390, %c1_391] : memref<2x4xi32, #tpu.memory_space<smem>>
    memref.store %568, %arg5[%c1_390, %c1_391] : memref<2x4xi32, #tpu.memory_space<smem>>
    %c-1000000_i32_392 = arith.constant -1000000 : i32
    %570 = vector.broadcast %c-1000000_i32_392 : i32 to vector<64x64xi32>
    %571 = arith.select %553, %147, %570 : vector<64x64xi1>, vector<64x64xi32>
    %572 = vector.shape_cast %571 : vector<64x64xi32> to vector<1x64x64xi32>
    %cst_393 = arith.constant dense<-2147483648> : vector<1xi32>
    %573 = vector.multi_reduction <maxsi>, %572, %cst_393 [1, 2] : vector<1x64x64xi32> to vector<1xi32>
    %574 = vector.shape_cast %573 : vector<1xi32> to vector<1x1x1xi32>
    %575 = vector.extract %574[0, 0, 0] : i32 from vector<1x1x1xi32>
    %c1_394 = arith.constant 1 : index
    %c2_395 = arith.constant 2 : index
    %576 = memref.load %arg5[%c1_394, %c2_395] : memref<2x4xi32, #tpu.memory_space<smem>>
    memref.store %575, %arg5[%c1_394, %c2_395] : memref<2x4xi32, #tpu.memory_space<smem>>
    %c-1000000_i32_396 = arith.constant -1000000 : i32
    %577 = vector.broadcast %c-1000000_i32_396 : i32 to vector<64x64xi32>
    %578 = arith.select %553, %146, %577 : vector<64x64xi1>, vector<64x64xi32>
    %579 = vector.shape_cast %578 : vector<64x64xi32> to vector<1x64x64xi32>
    %cst_397 = arith.constant dense<-2147483648> : vector<1xi32>
    %580 = vector.multi_reduction <maxsi>, %579, %cst_397 [1, 2] : vector<1x64x64xi32> to vector<1xi32>
    %581 = vector.shape_cast %580 : vector<1xi32> to vector<1x1x1xi32>
    %582 = vector.extract %581[0, 0, 0] : i32 from vector<1x1x1xi32>
    %c1_398 = arith.constant 1 : index
    %c3_399 = arith.constant 3 : index
    %583 = memref.load %arg5[%c1_398, %c3_399] : memref<2x4xi32, #tpu.memory_space<smem>>
    memref.store %582, %arg5[%c1_398, %c3_399] : memref<2x4xi32, #tpu.memory_space<smem>>
    return
  }
  func.func @transform_0(%arg0: i32, %arg1: memref<2x8x4xi32, #tpu.memory_space<smem>>) -> (i32, i32, i32) {
    %c0_i32 = arith.constant 0 : i32
    %c0_i32_0 = arith.constant 0 : i32
    %c0_i32_1 = arith.constant 0 : i32
    %c0_i32_2 = arith.constant 0 : i32
    return %c0_i32, %c0_i32_0, %c0_i32_1 : i32, i32, i32
  }
  func.func @transform_1(%arg0: i32, %arg1: memref<2x8x4xi32, #tpu.memory_space<smem>>) -> (i32, i32, i32) {
    %c0_i32 = arith.constant 0 : i32
    %c0_i32_0 = arith.constant 0 : i32
    %c0_i32_1 = arith.constant 0 : i32
    %c0_i32_2 = arith.constant 0 : i32
    return %c0_i32, %c0_i32_0, %c0_i32_1 : i32, i32, i32
  }
  func.func @transform_2(%arg0: i32, %arg1: memref<2x8x4xi32, #tpu.memory_space<smem>>) -> (i32, i32) {
    %c0_i32 = arith.constant 0 : i32
    %c0_i32_0 = arith.constant 0 : i32
    %c0_i32_1 = arith.constant 0 : i32
    return %c0_i32, %c0_i32_0 : i32, i32
  }
  func.func @transform_3(%arg0: i32, %arg1: memref<2x8x4xi32, #tpu.memory_space<smem>>) -> (i32, i32) {
    %c0_i32 = arith.constant 0 : i32
    %c0_i32_0 = arith.constant 0 : i32
    %c0_i32_1 = arith.constant 0 : i32
    return %c0_i32, %c0_i32_0 : i32, i32
  }
}

</mosaic_0001>

<llo_original>
// kernel: tpu_custom_call.1
$region0: #{tpu_custom_call.1}
  #allocation0 [shape = 'u32[]', space=smem, size = 0x4, offset = 0x4, fixed_abs, tag = 'smem constant byte address 0x4 - core index']
  #allocation1 [shape = 'u32[144,128]{1,0:T(1,128)}', space=vmem, size = 0x12000, scoped, tag = 'internal scratch']
  #allocation2 [shape = 'f32[64,132]{1,0:T(8,128)}', space=vmem, size = 0x10000, scoped, tag = 'scratch operand']
  #allocation3 [shape = 's32[1]{0}', space=sflag, size = 0x4, scoped, tag = 'scoped memory for tpu_custom_call.1']
  #allocation4 [shape = 'u8[8192]{0}', space=smem, size = 0x2000, scoped, tag = 'prefetched SMEM operand 0']
  %s0 = inlined_call_operand.vmem [shape: s32[2,8,4], index: 0, kind: input, shape index: {}]
  %s1 = inlined_call_operand.vmem [shape: f32[3,66,132], index: 1, kind: input, shape index: {}]
  %s2 = inlined_call_operand.vmem [shape: f32[3,66,132], index: 2, kind: input, shape index: {}]
  %s3 = inlined_call_operand.hbm [shape: s32[64,128], index: 3, kind: output, shape index: {0}]
  %s4 = inlined_call_operand.hbm [shape: s32[2,4], index: 4, kind: output, shape index: {1}]
  %5 = xla_tuple %s3, %s4
  %s6 = sld [smem:[#allocation0]]
  $region26: #{tpu_custom_call.1} parent=0
    _
  %s8 = ssub.s32 1, %s6
  %s9 = scalar_select 0, %s8, %s6
  %s10 = sshll.u32 %s0, 4
  %s11 = int_to_ptr.vmem [resolvable:$true] %s10
  %13 = dma.vmem_to_smem %s11, 256, [#allocation4], [#allocation3]
  %14 = dma.done [#allocation3], 256
  %15 = sfence
  $region1: #{tpu_custom_call.1} parent=0
    #allocation5 [shape = 'u8[32768]{0}', space=vmem, size = 0x8000, scoped, tag = 'output window, operand 0, single buffered']
    #allocation6 [shape = 's32[1]{0}', space=sflag, size = 0x4, scoped, tag = 'scoped memory for tpu_custom_call.1']
    #allocation7 [shape = 's32[1]{0}', space=sflag, size = 0x4, scoped, tag = 'scoped memory for tpu_custom_call.1']
    #allocation8 [shape = 'u8[1024]{0}', space=smem, size = 0x400, scoped, tag = 'output window, operand 1, single buffered']
    %16 = vsyncpa [#allocation6], 0
    %17 = vsyncpa [#allocation7], 0
    // Predicated region
    $region2: #{tpu_custom_call.1} parent=1 // pred_check
      _
    $region3: #{tpu_custom_call.1} parent=1 // pred_check_branch
      %19 = sbr.rel (0) target = $region5
    $region4: #{tpu_custom_call.1} parent=1 // pred_region
      _
    $region5: #{tpu_custom_call.1} parent=1 // pred_fallthru
      _
    // Predicated region
    $region6: #{tpu_custom_call.1} parent=1 // pred_check
      _
    $region7: #{tpu_custom_call.1} parent=1 // pred_check_branch
      %21 = sbr.rel (0) target = $region9
    $region8: #{tpu_custom_call.1} parent=1 // pred_region
      _
    $region9: #{tpu_custom_call.1} parent=1 // pred_fallthru
      _
    %v22 = vld [vmem:[%s1] sm:$0xfe]
    %v23 = vld [vmem:[%s1 + $0x8] sm:$0xfe]
    %v24 = vld [vmem:[%s1 + $0x10] sm:$0xff]
    %v25 = vld [vmem:[%s1 + $0x18] sm:$0xff]
    %v26 = vld [vmem:[%s1 + $0x20] sm:$0xff]
    %v27 = vld [vmem:[%s1 + $0x28] sm:$0xff]
    %v28 = vld [vmem:[%s1 + $0x30] sm:$0xff]
    %v29 = vld [vmem:[%s1 + $0x38] sm:$0xff]
    %v30 = vld [vmem:[%s1 + $0x40] sm:$0xff]
    %v31 = vld [vmem:[%s1 + $0x48] sm:$0xff]
    %v32 = vld [vmem:[%s1 + $0x50] sm:$0xff]
    %v33 = vld [vmem:[%s1 + $0x58] sm:$0xff]
    %v34 = vld [vmem:[%s1 + $0x60] sm:$0xff]
    %v35 = vld [vmem:[%s1 + $0x68] sm:$0xff]
    %v36 = vld [vmem:[%s1 + $0x70] sm:$0xff]
    %v37 = vld [vmem:[%s1 + $0x78] sm:$0xff]
    %v38 = vld [vmem:[%s1 + $0x80] sm:$0x1]
    %v39 = vld [vmem:[%s1 + $0x88] sm:$0x1]
    %v40 = vld [vmem:[%s2] sm:$0xfe]
    %v41 = vld [vmem:[%s2 + $0x8] sm:$0xfe]
    %v42 = vld [vmem:[%s2 + $0x10] sm:$0xff]
    %v43 = vld [vmem:[%s2 + $0x18] sm:$0xff]
    %v44 = vld [vmem:[%s2 + $0x20] sm:$0xff]
    %v45 = vld [vmem:[%s2 + $0x28] sm:$0xff]
    %v46 = vld [vmem:[%s2 + $0x30] sm:$0xff]
    %v47 = vld [vmem:[%s2 + $0x38] sm:$0xff]
    %v48 = vld [vmem:[%s2 + $0x40] sm:$0xff]
    %v49 = vld [vmem:[%s2 + $0x48] sm:$0xff]
    %v50 = vld [vmem:[%s2 + $0x50] sm:$0xff]
    %v51 = vld [vmem:[%s2 + $0x58] sm:$0xff]
    %v52 = vld [vmem:[%s2 + $0x60] sm:$0xff]
    %v53 = vld [vmem:[%s2 + $0x68] sm:$0xff]
    %v54 = vld [vmem:[%s2 + $0x70] sm:$0xff]
    %v55 = vld [vmem:[%s2 + $0x78] sm:$0xff]
    %v56 = vld [vmem:[%s2 + $0x80] sm:$0x1]
    %v57 = vld [vmem:[%s2 + $0x88] sm:$0x1]
    %v58 = vsub.f32 %v22, %v40
    %v59 = vsub.f32 %v23, %v41
    %v60 = vsub.f32 %v24, %v42
    %v61 = vsub.f32 %v25, %v43
    %v62 = vsub.f32 %v26, %v44
    %v63 = vsub.f32 %v27, %v45
    %v64 = vsub.f32 %v28, %v46
    %v65 = vsub.f32 %v29, %v47
    %v66 = vsub.f32 %v30, %v48
    %v67 = vsub.f32 %v31, %v49
    %v68 = vsub.f32 %v32, %v50
    %v69 = vsub.f32 %v33, %v51
    %v70 = vsub.f32 %v34, %v52
    %v71 = vsub.f32 %v35, %v53
    %v72 = vsub.f32 %v36, %v54
    %v73 = vsub.f32 %v37, %v55
    %v74 = vsub.f32 %v38, %v56
    %v75 = vsub.f32 %v39, %v57
    %v76 = vmul.f32 %v58, 0.52201146
    %v77 = vmul.f32 %v59, 0.52201146
    %v78 = vmul.f32 %v60, 0.52201146
    %v79 = vmul.f32 %v61, 0.52201146
    %v80 = vmul.f32 %v62, 0.52201146
    %v81 = vmul.f32 %v63, 0.52201146
    %v82 = vmul.f32 %v64, 0.52201146
    %v83 = vmul.f32 %v65, 0.52201146
    %v84 = vmul.f32 %v66, 0.52201146
    %v85 = vmul.f32 %v67, 0.52201146
    %v86 = vmul.f32 %v68, 0.52201146
    %v87 = vmul.f32 %v69, 0.52201146
    %v88 = vmul.f32 %v70, 0.52201146
    %v89 = vmul.f32 %v71, 0.52201146
    %v90 = vmul.f32 %v72, 0.52201146
    %v91 = vmul.f32 %v73, 0.52201146
    %v92 = vmul.f32 %v74, 0.52201146
    %v93 = vmul.f32 %v75, 0.52201146
    %v94 = vld [vmem:[%s1] sm:$0xff]
    %v95 = vld [vmem:[%s1 + $0x8] sm:$0xff]
    %v96 = vld [vmem:[%s2] sm:$0xff]
    %v97 = vld [vmem:[%s2 + $0x8] sm:$0xff]
    %v98 = vsub.f32 %v94, %v96
    %v99 = vsub.f32 %v95, %v97
    %v100 = vld [vmem:[%s1] sm:$0xfc]
    %v101 = vld [vmem:[%s1 + $0x8] sm:$0xfc]
    %v102 = vld [vmem:[%s1 + $0x80] sm:$0x3]
    %v103 = vld [vmem:[%s1 + $0x88] sm:$0x3]
    %v104 = vld [vmem:[%s2] sm:$0xfc]
    %v105 = vld [vmem:[%s2 + $0x8] sm:$0xfc]
    %v106 = vld [vmem:[%s2 + $0x80] sm:$0x3]
    %v107 = vld [vmem:[%s2 + $0x88] sm:$0x3]
    %v108 = vsub.f32 %v100, %v104
    %v109 = vsub.f32 %v101, %v105
    %v110 = vsub.f32 %v102, %v106
    %v111 = vsub.f32 %v103, %v107
    %vm130 = vcmask 1045504
    %v131 = vrot.slane %v108, 2
    %v132 = vrot.slane %v60, 2
    %v133 = vsel %vm130, %v131, %v132
    %v134 = vrot.slane %v109, 2
    %v135 = vrot.slane %v61, 2
    %v136 = vsel %vm130, %v134, %v135
    %v137 = vrot.slane %v62, 2
    %v138 = vsel %vm130, %v132, %v137
    %v139 = vrot.slane %v63, 2
    %v140 = vsel %vm130, %v135, %v139
    %v141 = vrot.slane %v64, 2
    %v142 = vsel %vm130, %v137, %v141
    %v143 = vrot.slane %v65, 2
    %v144 = vsel %vm130, %v139, %v143
    %v145 = vrot.slane %v66, 2
    %v146 = vsel %vm130, %v141, %v145
    %v147 = vrot.slane %v67, 2
    %v148 = vsel %vm130, %v143, %v147
    %v149 = vrot.slane %v68, 2
    %v150 = vsel %vm130, %v145, %v149
    %v151 = vrot.slane %v69, 2
    %v152 = vsel %vm130, %v147, %v151
    %v153 = vrot.slane %v70, 2
    %v154 = vsel %vm130, %v149, %v153
    %v155 = vrot.slane %v71, 2
    %v156 = vsel %vm130, %v151, %v155
    %v157 = vrot.slane %v72, 2
    %v158 = vsel %vm130, %v153, %v157
    %v159 = vrot.slane %v73, 2
    %v160 = vsel %vm130, %v155, %v159
    %v161 = vrot.slane %v110, 2
    %v162 = vsel %vm130, %v157, %v161
    %v163 = vrot.slane %v111, 2
    %v164 = vsel %vm130, %v159, %v163
    %v181 = vadd.f32 %v98, %v133
    %v182 = vadd.f32 %v99, %v136
    %v183 = vadd.f32 %v60, %v138
    %v184 = vadd.f32 %v61, %v140
    %v185 = vadd.f32 %v62, %v142
    %v186 = vadd.f32 %v63, %v144
    %v187 = vadd.f32 %v64, %v146
    %v188 = vadd.f32 %v65, %v148
    %v189 = vadd.f32 %v66, %v150
    %v190 = vadd.f32 %v67, %v152
    %v191 = vadd.f32 %v68, %v154
    %v192 = vadd.f32 %v69, %v156
    %v193 = vadd.f32 %v70, %v158
    %v194 = vadd.f32 %v71, %v160
    %v195 = vadd.f32 %v72, %v162
    %v196 = vadd.f32 %v73, %v164
    %v197 = vmul.f32 %v181, 0.23899427
    %v198 = vmul.f32 %v182, 0.23899427
    %v199 = vmul.f32 %v183, 0.23899427
    %v200 = vmul.f32 %v184, 0.23899427
    %v201 = vmul.f32 %v185, 0.23899427
    %v202 = vmul.f32 %v186, 0.23899427
    %v203 = vmul.f32 %v187, 0.23899427
    %v204 = vmul.f32 %v188, 0.23899427
    %v205 = vmul.f32 %v189, 0.23899427
    %v206 = vmul.f32 %v190, 0.23899427
    %v207 = vmul.f32 %v191, 0.23899427
    %v208 = vmul.f32 %v192, 0.23899427
    %v209 = vmul.f32 %v193, 0.23899427
    %v210 = vmul.f32 %v194, 0.23899427
    %v211 = vmul.f32 %v195, 0.23899427
    %v212 = vmul.f32 %v196, 0.23899427
    %vm229 = vcmask 1040384
    %v230 = vrot.slane %v197, 7
    %v231 = vrot.slane %v198, 7
    %v232 = vrot.slane %v199, 7
    %v233 = vsel %vm229, %v230, %v232
    %v234 = vrot.slane %v200, 7
    %v235 = vsel %vm229, %v231, %v234
    %v236 = vrot.slane %v201, 7
    %v237 = vsel %vm229, %v232, %v236
    %v238 = vrot.slane %v202, 7
    %v239 = vsel %vm229, %v234, %v238
    %v240 = vrot.slane %v203, 7
    %v241 = vsel %vm229, %v236, %v240
    %v242 = vrot.slane %v204, 7
    %v243 = vsel %vm229, %v238, %v242
    %v244 = vrot.slane %v205, 7
    %v245 = vsel %vm229, %v240, %v244
    %v246 = vrot.slane %v206, 7
    %v247 = vsel %vm229, %v242, %v246
    %v248 = vrot.slane %v207, 7
    %v249 = vsel %vm229, %v244, %v248
    %v250 = vrot.slane %v208, 7
    %v251 = vsel %vm229, %v246, %v250
    %v252 = vrot.slane %v209, 7
    %v253 = vsel %vm229, %v248, %v252
    %v254 = vrot.slane %v210, 7
    %v255 = vsel %vm229, %v250, %v254
    %v256 = vrot.slane %v211, 7
    %v257 = vsel %vm229, %v252, %v256
    %v258 = vrot.slane %v212, 7
    %v259 = vsel %vm229, %v254, %v258
    %v278 = vadd.f32 %v76, %v230
    %v279 = vadd.f32 %v77, %v231
    %v280 = vadd.f32 %v78, %v233
    %v281 = vadd.f32 %v79, %v235
    %v282 = vadd.f32 %v80, %v237
    %v283 = vadd.f32 %v81, %v239
    %v284 = vadd.f32 %v82, %v241
    %v285 = vadd.f32 %v83, %v243
    %v286 = vadd.f32 %v84, %v245
    %v287 = vadd.f32 %v85, %v247
    %v288 = vadd.f32 %v86, %v249
    %v289 = vadd.f32 %v87, %v251
    %v290 = vadd.f32 %v88, %v253
    %v291 = vadd.f32 %v89, %v255
    %v292 = vadd.f32 %v90, %v257
    %v293 = vadd.f32 %v91, %v259
    %v294 = vadd.f32 %v92, %v256
    %v295 = vadd.f32 %v93, %v258
    %vm314 = vcmask 1046528
    %v315 = vrot.slane %v278, 1
    %v316 = vrot.slane %v280, 1
    %v317 = vsel %vm314, %v315, %v316
    %v318 = vrot.slane %v279, 1
    %v319 = vrot.slane %v281, 1
    %v320 = vsel %vm314, %v318, %v319
    %v321 = vrot.slane %v282, 1
    %v322 = vsel %vm314, %v316, %v321
    %v323 = vrot.slane %v283, 1
    %v324 = vsel %vm314, %v319, %v323
    %v325 = vrot.slane %v284, 1
    %v326 = vsel %vm314, %v321, %v325
    %v327 = vrot.slane %v285, 1
    %v328 = vsel %vm314, %v323, %v327
    %v329 = vrot.slane %v286, 1
    %v330 = vsel %vm314, %v325, %v329
    %v331 = vrot.slane %v287, 1
    %v332 = vsel %vm314, %v327, %v331
    %v333 = vrot.slane %v288, 1
    %v334 = vsel %vm314, %v329, %v333
    %v335 = vrot.slane %v289, 1
    %v336 = vsel %vm314, %v331, %v335
    %v337 = vrot.slane %v290, 1
    %v338 = vsel %vm314, %v333, %v337
    %v339 = vrot.slane %v291, 1
    %v340 = vsel %vm314, %v335, %v339
    %v341 = vrot.slane %v292, 1
    %v342 = vsel %vm314, %v337, %v341
    %v343 = vrot.slane %v293, 1
    %v344 = vsel %vm314, %v339, %v343
    %v345 = vrot.slane %v294, 1
    %v346 = vsel %vm314, %v341, %v345
    %v347 = vrot.slane %v295, 1
    %v348 = vsel %vm314, %v343, %v347
    %365 = vst [vmem:[#allocation2] sm:$0xff] %v317
    %vm366 = vcmask 31744
    %367 = vst.msk [vmem:[#allocation2 + $0x8] sm:$0xff] %vm366, %v320
    %368 = vst [vmem:[#allocation2 + $0x10] sm:$0xff] %v322
    %369 = vst.msk [vmem:[#allocation2 + $0x18] sm:$0xff] %vm366, %v324
    %370 = vst [vmem:[#allocation2 + $0x20] sm:$0xff] %v326
    %371 = vst.msk [vmem:[#allocation2 + $0x28] sm:$0xff] %vm366, %v328
    %372 = vst [vmem:[#allocation2 + $0x30] sm:$0xff] %v330
    %373 = vst.msk [vmem:[#allocation2 + $0x38] sm:$0xff] %vm366, %v332
    %374 = vst [vmem:[#allocation2 + $0x40] sm:$0xff] %v334
    %375 = vst.msk [vmem:[#allocation2 + $0x48] sm:$0xff] %vm366, %v336
    %376 = vst [vmem:[#allocation2 + $0x50] sm:$0xff] %v338
    %377 = vst.msk [vmem:[#allocation2 + $0x58] sm:$0xff] %vm366, %v340
    %378 = vst [vmem:[#allocation2 + $0x60] sm:$0xff] %v342
    %379 = vst.msk [vmem:[#allocation2 + $0x68] sm:$0xff] %vm366, %v344
    %380 = vst [vmem:[#allocation2 + $0x70] sm:$0xff] %v346
    %381 = vst.msk [vmem:[#allocation2 + $0x78] sm:$0xff] %vm366, %v348
    %v382 = vld [vmem:[#allocation2] sm:$0xff]
    %v383 = vld [vmem:[#allocation2 + $0x10] sm:$0xff]
    %v384 = vld [vmem:[#allocation2 + $0x20] sm:$0xff]
    %v385 = vld [vmem:[#allocation2 + $0x30] sm:$0xff]
    %v386 = vld [vmem:[#allocation2 + $0x40] sm:$0xff]
    %v387 = vld [vmem:[#allocation2 + $0x50] sm:$0xff]
    %v388 = vld [vmem:[#allocation2 + $0x60] sm:$0xff]
    %v389 = vld [vmem:[#allocation2 + $0x70] sm:$0xff]
    %v390 = vmul.f32 %v382, 0.52201146
    %v391 = vmul.f32 %v383, 0.52201146
    %v392 = vmul.f32 %v384, 0.52201146
    %v393 = vmul.f32 %v385, 0.52201146
    %v394 = vmul.f32 %v386, 0.52201146
    %v395 = vmul.f32 %v387, 0.52201146
    %v396 = vmul.f32 %v388, 0.52201146
    %v397 = vmul.f32 %v389, 0.52201146
    %406 = vrot.lane.b32.xlu0 %v382, 126
    %v407 = vpop.permute.xlu0 %406
    %408 = vrot.lane.b32.xlu0 %v383, 126
    %v409 = vpop.permute.xlu0 %408
    %410 = vrot.lane.b32.xlu0 %v384, 126
    %v411 = vpop.permute.xlu0 %410
    %412 = vrot.lane.b32.xlu0 %v385, 126
    %v413 = vpop.permute.xlu0 %412
    %414 = vrot.lane.b32.xlu0 %v386, 126
    %v415 = vpop.permute.xlu0 %414
    %416 = vrot.lane.b32.xlu0 %v387, 126
    %v417 = vpop.permute.xlu0 %416
    %418 = vrot.lane.b32.xlu0 %v388, 126
    %v419 = vpop.permute.xlu0 %418
    %420 = vrot.lane.b32.xlu0 %v389, 126
    %v421 = vpop.permute.xlu0 %420
    %v430 = vadd.f32 %v382, %v407
    %v431 = vadd.f32 %v383, %v409
    %v432 = vadd.f32 %v384, %v411
    %v433 = vadd.f32 %v385, %v413
    %v434 = vadd.f32 %v386, %v415
    %v435 = vadd.f32 %v387, %v417
    %v436 = vadd.f32 %v388, %v419
    %v437 = vadd.f32 %v389, %v421
    %v438 = vmul.f32 %v430, 0.23899427
    %v439 = vmul.f32 %v431, 0.23899427
    %v440 = vmul.f32 %v432, 0.23899427
    %v441 = vmul.f32 %v433, 0.23899427
    %v442 = vmul.f32 %v434, 0.23899427
    %v443 = vmul.f32 %v435, 0.23899427
    %v444 = vmul.f32 %v436, 0.23899427
    %v445 = vmul.f32 %v437, 0.23899427
    %454 = vrot.lane.b32.xlu0 %v438, 1
    %v455 = vpop.permute.xlu0 %454
    %456 = vrot.lane.b32.xlu0 %v439, 1
    %v457 = vpop.permute.xlu0 %456
    %458 = vrot.lane.b32.xlu0 %v440, 1
    %v459 = vpop.permute.xlu0 %458
    %460 = vrot.lane.b32.xlu0 %v441, 1
    %v461 = vpop.permute.xlu0 %460
    %462 = vrot.lane.b32.xlu0 %v442, 1
    %v463 = vpop.permute.xlu0 %462
    %464 = vrot.lane.b32.xlu0 %v443, 1
    %v465 = vpop.permute.xlu0 %464
    %466 = vrot.lane.b32.xlu0 %v444, 1
    %v467 = vpop.permute.xlu0 %466
    %468 = vrot.lane.b32.xlu0 %v445, 1
    %v469 = vpop.permute.xlu0 %468
    %v478 = vadd.f32 %v390, %v455
    %v479 = vadd.f32 %v391, %v457
    %v480 = vadd.f32 %v392, %v459
    %v481 = vadd.f32 %v393, %v461
    %v482 = vadd.f32 %v394, %v463
    %v483 = vadd.f32 %v395, %v465
    %v484 = vadd.f32 %v396, %v467
    %v485 = vadd.f32 %v397, %v469
    %v486 = vand.u32 2147483647, %v478
    %v487 = vand.u32 2147483647, %v479
    %v488 = vand.u32 2147483647, %v480
    %v489 = vand.u32 2147483647, %v481
    %v490 = vand.u32 2147483647, %v482
    %v491 = vand.u32 2147483647, %v483
    %v492 = vand.u32 2147483647, %v484
    %v493 = vand.u32 2147483647, %v485
    %v494 = vmul.f32 %v486, 0.2989
    %v495 = vmul.f32 %v487, 0.2989
    %v496 = vmul.f32 %v488, 0.2989
    %v497 = vmul.f32 %v489, 0.2989
    %v498 = vmul.f32 %v490, 0.2989
    %v499 = vmul.f32 %v491, 0.2989
    %v500 = vmul.f32 %v492, 0.2989
    %v501 = vmul.f32 %v493, 0.2989
    %v502 = vadd.f32 %v494, 0.0
    %v503 = vadd.f32 %v495, 0.0
    %v504 = vadd.f32 %v496, 0.0
    %v505 = vadd.f32 %v497, 0.0
    %v506 = vadd.f32 %v498, 0.0
    %v507 = vadd.f32 %v499, 0.0
    %v508 = vadd.f32 %v500, 0.0
    %v509 = vadd.f32 %v501, 0.0
    %v510 = vld [vmem:[#allocation2 + $0x8] sm:$0xff]
    %v511 = vld [vmem:[#allocation2 + $0x18] sm:$0xff]
    %v512 = vld [vmem:[#allocation2 + $0x28] sm:$0xff]
    %v513 = vld [vmem:[#allocation2 + $0x38] sm:$0xff]
    %v514 = vld [vmem:[#allocation2 + $0x48] sm:$0xff]
    %v515 = vld [vmem:[#allocation2 + $0x58] sm:$0xff]
    %v516 = vld [vmem:[#allocation2 + $0x68] sm:$0xff]
    %v517 = vld [vmem:[#allocation2 + $0x78] sm:$0xff]
    %v518 = vmul.f32 %v510, 0.52201146
    %v519 = vmul.f32 %v511, 0.52201146
    %v520 = vmul.f32 %v512, 0.52201146
    %v521 = vmul.f32 %v513, 0.52201146
    %v522 = vmul.f32 %v514, 0.52201146
    %v523 = vmul.f32 %v515, 0.52201146
    %v524 = vmul.f32 %v516, 0.52201146
    %v525 = vmul.f32 %v517, 0.52201146
    %534 = vrot.lane.b32.xlu0 %v510, 126
    %v535 = vpop.permute.xlu0 %534
    %536 = vrot.lane.b32.xlu0 %v511, 126
    %v537 = vpop.permute.xlu0 %536
    %538 = vrot.lane.b32.xlu0 %v512, 126
    %v539 = vpop.permute.xlu0 %538
    %540 = vrot.lane.b32.xlu0 %v513, 126
    %v541 = vpop.permute.xlu0 %540
    %542 = vrot.lane.b32.xlu0 %v514, 126
    %v543 = vpop.permute.xlu0 %542
    %544 = vrot.lane.b32.xlu0 %v515, 126
    %v545 = vpop.permute.xlu0 %544
    %546 = vrot.lane.b32.xlu0 %v516, 126
    %v547 = vpop.permute.xlu0 %546
    %548 = vrot.lane.b32.xlu0 %v517, 126
    %v549 = vpop.permute.xlu0 %548
    %vm550 = vcmask 1031168
    %v551 = vsel %vm550, %v407, %v535
    %v552 = vsel %vm550, %v409, %v537
    %v553 = vsel %vm550, %v411, %v539
    %v554 = vsel %vm550, %v413, %v541
    %v555 = vsel %vm550, %v415, %v543
    %v556 = vsel %vm550, %v417, %v545
    %v557 = vsel %vm550, %v419, %v547
    %v558 = vsel %vm550, %v421, %v549
    %v575 = vadd.f32 %v382, %v551
    %v576 = vadd.f32 %v510, %v535
    %v577 = vadd.f32 %v383, %v552
    %v578 = vadd.f32 %v511, %v537
    %v579 = vadd.f32 %v384, %v553
    %v580 = vadd.f32 %v512, %v539
    %v581 = vadd.f32 %v385, %v554
    %v582 = vadd.f32 %v513, %v541
    %v583 = vadd.f32 %v386, %v555
    %v584 = vadd.f32 %v514, %v543
    %v585 = vadd.f32 %v387, %v556
    %v586 = vadd.f32 %v515, %v545
    %v587 = vadd.f32 %v388, %v557
    %v588 = vadd.f32 %v516, %v547
    %v589 = vadd.f32 %v389, %v558
    %v590 = vadd.f32 %v517, %v549
    %v591 = vmul.f32 %v575, 0.23899427
    %v592 = vmul.f32 %v576, 0.23899427
    %v593 = vmul.f32 %v577, 0.23899427
    %v594 = vmul.f32 %v578, 0.23899427
    %v595 = vmul.f32 %v579, 0.23899427
    %v596 = vmul.f32 %v580, 0.23899427
    %v597 = vmul.f32 %v581, 0.23899427
    %v598 = vmul.f32 %v582, 0.23899427
    %v599 = vmul.f32 %v583, 0.23899427
    %v600 = vmul.f32 %v584, 0.23899427
    %v601 = vmul.f32 %v585, 0.23899427
    %v602 = vmul.f32 %v586, 0.23899427
    %v603 = vmul.f32 %v587, 0.23899427
    %v604 = vmul.f32 %v588, 0.23899427
    %v605 = vmul.f32 %v589, 0.23899427
    %v606 = vmul.f32 %v590, 0.23899427
    %623 = vrot.lane.b32.xlu0 %v591, 1
    %v624 = vpop.permute.xlu0 %623
    %625 = vrot.lane.b32.xlu0 %v592, 1
    %v626 = vpop.permute.xlu0 %625
    %627 = vrot.lane.b32.xlu0 %v593, 1
    %v628 = vpop.permute.xlu0 %627
    %629 = vrot.lane.b32.xlu0 %v594, 1
    %v630 = vpop.permute.xlu0 %629
    %631 = vrot.lane.b32.xlu0 %v595, 1
    %v632 = vpop.permute.xlu0 %631
    %633 = vrot.lane.b32.xlu0 %v596, 1
    %v634 = vpop.permute.xlu0 %633
    %635 = vrot.lane.b32.xlu0 %v597, 1
    %v636 = vpop.permute.xlu0 %635
    %637 = vrot.lane.b32.xlu0 %v598, 1
    %v638 = vpop.permute.xlu0 %637
    %639 = vrot.lane.b32.xlu0 %v599, 1
    %v640 = vpop.permute.xlu0 %639
    %641 = vrot.lane.b32.xlu0 %v600, 1
    %v642 = vpop.permute.xlu0 %641
    %643 = vrot.lane.b32.xlu0 %v601, 1
    %v644 = vpop.permute.xlu0 %643
    %645 = vrot.lane.b32.xlu0 %v602, 1
    %v646 = vpop.permute.xlu0 %645
    %647 = vrot.lane.b32.xlu0 %v603, 1
    %v648 = vpop.permute.xlu0 %647
    %649 = vrot.lane.b32.xlu0 %v604, 1
    %v650 = vpop.permute.xlu0 %649
    %651 = vrot.lane.b32.xlu0 %v605, 1
    %v652 = vpop.permute.xlu0 %651
    %653 = vrot.lane.b32.xlu0 %v606, 1
    %v654 = vpop.permute.xlu0 %653
    %vm655 = vcmask 7168
    %v656 = vsel %vm655, %v624, %v626
    %v657 = vsel %vm655, %v628, %v630
    %v658 = vsel %vm655, %v632, %v634
    %v659 = vsel %vm655, %v636, %v638
    %v660 = vsel %vm655, %v640, %v642
    %v661 = vsel %vm655, %v644, %v646
    %v662 = vsel %vm655, %v648, %v650
    %v663 = vsel %vm655, %v652, %v654
    %v680 = vadd.f32 %v390, %v624
    %v681 = vadd.f32 %v518, %v656
    %v682 = vadd.f32 %v391, %v628
    %v683 = vadd.f32 %v519, %v657
    %v684 = vadd.f32 %v392, %v632
    %v685 = vadd.f32 %v520, %v658
    %v686 = vadd.f32 %v393, %v636
    %v687 = vadd.f32 %v521, %v659
    %v688 = vadd.f32 %v394, %v640
    %v689 = vadd.f32 %v522, %v660
    %v690 = vadd.f32 %v395, %v644
    %v691 = vadd.f32 %v523, %v661
    %v692 = vadd.f32 %v396, %v648
    %v693 = vadd.f32 %v524, %v662
    %v694 = vadd.f32 %v397, %v652
    %v695 = vadd.f32 %v525, %v663
    %v696 = vand.u32 2147483647, %v680
    %v697 = vand.u32 2147483647, %v681
    %v698 = vand.u32 2147483647, %v682
    %v699 = vand.u32 2147483647, %v683
    %v700 = vand.u32 2147483647, %v684
    %v701 = vand.u32 2147483647, %v685
    %v702 = vand.u32 2147483647, %v686
    %v703 = vand.u32 2147483647, %v687
    %v704 = vand.u32 2147483647, %v688
    %v705 = vand.u32 2147483647, %v689
    %v706 = vand.u32 2147483647, %v690
    %v707 = vand.u32 2147483647, %v691
    %v708 = vand.u32 2147483647, %v692
    %v709 = vand.u32 2147483647, %v693
    %v710 = vand.u32 2147483647, %v694
    %v711 = vand.u32 2147483647, %v695
    %v712 = vmul.f32 %v696, 0.2989
    %v713 = vmul.f32 %v697, 0.2989
    %v714 = vmul.f32 %v698, 0.2989
    %v715 = vmul.f32 %v699, 0.2989
    %v716 = vmul.f32 %v700, 0.2989
    %v717 = vmul.f32 %v701, 0.2989
    %v718 = vmul.f32 %v702, 0.2989
    %v719 = vmul.f32 %v703, 0.2989
    %v720 = vmul.f32 %v704, 0.2989
    %v721 = vmul.f32 %v705, 0.2989
    %v722 = vmul.f32 %v706, 0.2989
    %v723 = vmul.f32 %v707, 0.2989
    %v724 = vmul.f32 %v708, 0.2989
    %v725 = vmul.f32 %v709, 0.2989
    %v726 = vmul.f32 %v710, 0.2989
    %v727 = vmul.f32 %v711, 0.2989
    %v728 = vadd.f32 %v712, 0.0
    %v729 = vadd.f32 %v713, 0.0
    %v730 = vadd.f32 %v714, 0.0
    %v731 = vadd.f32 %v715, 0.0
    %v732 = vadd.f32 %v716, 0.0
    %v733 = vadd.f32 %v717, 0.0
    %v734 = vadd.f32 %v718, 0.0
    %v735 = vadd.f32 %v719, 0.0
    %v736 = vadd.f32 %v720, 0.0
    %v737 = vadd.f32 %v721, 0.0
    %v738 = vadd.f32 %v722, 0.0
    %v739 = vadd.f32 %v723, 0.0
    %v740 = vadd.f32 %v724, 0.0
    %v741 = vadd.f32 %v725, 0.0
    %v742 = vadd.f32 %v726, 0.0
    %v743 = vadd.f32 %v727, 0.0
    %s744 = scalar_lea.vmem %s1, 144
    %v745 = vld [vmem:[%s744] sm:$0xfe]
    %v746 = vld [vmem:[%s744 + $0x8] sm:$0xfe]
    %v747 = vld [vmem:[%s744 + $0x10] sm:$0xff]
    %v748 = vld [vmem:[%s744 + $0x18] sm:$0xff]
    %v749 = vld [vmem:[%s744 + $0x20] sm:$0xff]
    %v750 = vld [vmem:[%s744 + $0x28] sm:$0xff]
    %v751 = vld [vmem:[%s744 + $0x30] sm:$0xff]
    %v752 = vld [vmem:[%s744 + $0x38] sm:$0xff]
    %v753 = vld [vmem:[%s744 + $0x40] sm:$0xff]
    %v754 = vld [vmem:[%s744 + $0x48] sm:$0xff]
    %v755 = vld [vmem:[%s744 + $0x50] sm:$0xff]
    %v756 = vld [vmem:[%s744 + $0x58] sm:$0xff]
    %v757 = vld [vmem:[%s744 + $0x60] sm:$0xff]
    %v758 = vld [vmem:[%s744 + $0x68] sm:$0xff]
    %v759 = vld [vmem:[%s744 + $0x70] sm:$0xff]
    %v760 = vld [vmem:[%s744 + $0x78] sm:$0xff]
    %v761 = vld [vmem:[%s744 + $0x80] sm:$0x1]
    %v762 = vld [vmem:[%s744 + $0x88] sm:$0x1]
    %s763 = scalar_lea.vmem %s2, 144
    %v764 = vld [vmem:[%s763] sm:$0xfe]
    %v765 = vld [vmem:[%s763 + $0x8] sm:$0xfe]
    %v766 = vld [vmem:[%s763 + $0x10] sm:$0xff]
    %v767 = vld [vmem:[%s763 + $0x18] sm:$0xff]
    %v768 = vld [vmem:[%s763 + $0x20] sm:$0xff]
    %v769 = vld [vmem:[%s763 + $0x28] sm:$0xff]
    %v770 = vld [vmem:[%s763 + $0x30] sm:$0xff]
    %v771 = vld [vmem:[%s763 + $0x38] sm:$0xff]
    %v772 = vld [vmem:[%s763 + $0x40] sm:$0xff]
    %v773 = vld [vmem:[%s763 + $0x48] sm:$0xff]
    %v774 = vld [vmem:[%s763 + $0x50] sm:$0xff]
    %v775 = vld [vmem:[%s763 + $0x58] sm:$0xff]
    %v776 = vld [vmem:[%s763 + $0x60] sm:$0xff]
    %v777 = vld [vmem:[%s763 + $0x68] sm:$0xff]
    %v778 = vld [vmem:[%s763 + $0x70] sm:$0xff]
    %v779 = vld [vmem:[%s763 + $0x78] sm:$0xff]
    %v780 = vld [vmem:[%s763 + $0x80] sm:$0x1]
    %v781 = vld [vmem:[%s763 + $0x88] sm:$0x1]
    %v782 = vsub.f32 %v745, %v764
    %v783 = vsub.f32 %v746, %v765
    %v784 = vsub.f32 %v747, %v766
    %v785 = vsub.f32 %v748, %v767
    %v786 = vsub.f32 %v749, %v768
    %v787 = vsub.f32 %v750, %v769
    %v788 = vsub.f32 %v751, %v770
    %v789 = vsub.f32 %v752, %v771
    %v790 = vsub.f32 %v753, %v772
    %v791 = vsub.f32 %v754, %v773
    %v792 = vsub.f32 %v755, %v774
    %v793 = vsub.f32 %v756, %v775
    %v794 = vsub.f32 %v757, %v776
    %v795 = vsub.f32 %v758, %v777
    %v796 = vsub.f32 %v759, %v778
    %v797 = vsub.f32 %v760, %v779
    %v798 = vsub.f32 %v761, %v780
    %v799 = vsub.f32 %v762, %v781
    %v800 = vmul.f32 %v782, 0.52201146
    %v801 = vmul.f32 %v783, 0.52201146
    %v802 = vmul.f32 %v784, 0.52201146
    %v803 = vmul.f32 %v785, 0.52201146
    %v804 = vmul.f32 %v786, 0.52201146
    %v805 = vmul.f32 %v787, 0.52201146
    %v806 = vmul.f32 %v788, 0.52201146
    %v807 = vmul.f32 %v789, 0.52201146
    %v808 = vmul.f32 %v790, 0.52201146
    %v809 = vmul.f32 %v791, 0.52201146
    %v810 = vmul.f32 %v792, 0.52201146
    %v811 = vmul.f32 %v793, 0.52201146
    %v812 = vmul.f32 %v794, 0.52201146
    %v813 = vmul.f32 %v795, 0.52201146
    %v814 = vmul.f32 %v796, 0.52201146
    %v815 = vmul.f32 %v797, 0.52201146
    %v816 = vmul.f32 %v798, 0.52201146
    %v817 = vmul.f32 %v799, 0.52201146
    %v818 = vld [vmem:[%s744] sm:$0xff]
    %v819 = vld [vmem:[%s744 + $0x8] sm:$0xff]
    %v820 = vld [vmem:[%s763] sm:$0xff]
    %v821 = vld [vmem:[%s763 + $0x8] sm:$0xff]
    %v822 = vsub.f32 %v818, %v820
    %v823 = vsub.f32 %v819, %v821
    %v824 = vld [vmem:[%s744] sm:$0xfc]
    %v825 = vld [vmem:[%s744 + $0x8] sm:$0xfc]
    %v826 = vld [vmem:[%s744 + $0x80] sm:$0x3]
    %v827 = vld [vmem:[%s744 + $0x88] sm:$0x3]
    %v828 = vld [vmem:[%s763] sm:$0xfc]
    %v829 = vld [vmem:[%s763 + $0x8] sm:$0xfc]
    %v830 = vld [vmem:[%s763 + $0x80] sm:$0x3]
    %v831 = vld [vmem:[%s763 + $0x88] sm:$0x3]
    %v832 = vsub.f32 %v824, %v828
    %v833 = vsub.f32 %v825, %v829
    %v834 = vsub.f32 %v826, %v830
    %v835 = vsub.f32 %v827, %v831
    %v854 = vrot.slane %v832, 2
    %v855 = vrot.slane %v784, 2
    %v856 = vsel %vm130, %v854, %v855
    %v857 = vrot.slane %v833, 2
    %v858 = vrot.slane %v785, 2
    %v859 = vsel %vm130, %v857, %v858
    %v860 = vrot.slane %v786, 2
    %v861 = vsel %vm130, %v855, %v860
    %v862 = vrot.slane %v787, 2
    %v863 = vsel %vm130, %v858, %v862
    %v864 = vrot.slane %v788, 2
    %v865 = vsel %vm130, %v860, %v864
    %v866 = vrot.slane %v789, 2
    %v867 = vsel %vm130, %v862, %v866
    %v868 = vrot.slane %v790, 2
    %v869 = vsel %vm130, %v864, %v868
    %v870 = vrot.slane %v791, 2
    %v871 = vsel %vm130, %v866, %v870
    %v872 = vrot.slane %v792, 2
    %v873 = vsel %vm130, %v868, %v872
    %v874 = vrot.slane %v793, 2
    %v875 = vsel %vm130, %v870, %v874
    %v876 = vrot.slane %v794, 2
    %v877 = vsel %vm130, %v872, %v876
    %v878 = vrot.slane %v795, 2
    %v879 = vsel %vm130, %v874, %v878
    %v880 = vrot.slane %v796, 2
    %v881 = vsel %vm130, %v876, %v880
    %v882 = vrot.slane %v797, 2
    %v883 = vsel %vm130, %v878, %v882
    %v884 = vrot.slane %v834, 2
    %v885 = vsel %vm130, %v880, %v884
    %v886 = vrot.slane %v835, 2
    %v887 = vsel %vm130, %v882, %v886
    %v904 = vadd.f32 %v822, %v856
    %v905 = vadd.f32 %v823, %v859
    %v906 = vadd.f32 %v784, %v861
    %v907 = vadd.f32 %v785, %v863
    %v908 = vadd.f32 %v786, %v865
    %v909 = vadd.f32 %v787, %v867
    %v910 = vadd.f32 %v788, %v869
    %v911 = vadd.f32 %v789, %v871
    %v912 = vadd.f32 %v790, %v873
    %v913 = vadd.f32 %v791, %v875
    %v914 = vadd.f32 %v792, %v877
    %v915 = vadd.f32 %v793, %v879
    %v916 = vadd.f32 %v794, %v881
    %v917 = vadd.f32 %v795, %v883
    %v918 = vadd.f32 %v796, %v885
    %v919 = vadd.f32 %v797, %v887
    %v920 = vmul.f32 %v904, 0.23899427
    %v921 = vmul.f32 %v905, 0.23899427
    %v922 = vmul.f32 %v906, 0.23899427
    %v923 = vmul.f32 %v907, 0.23899427
    %v924 = vmul.f32 %v908, 0.23899427
    %v925 = vmul.f32 %v909, 0.23899427
    %v926 = vmul.f32 %v910, 0.23899427
    %v927 = vmul.f32 %v911, 0.23899427
    %v928 = vmul.f32 %v912, 0.23899427
    %v929 = vmul.f32 %v913, 0.23899427
    %v930 = vmul.f32 %v914, 0.23899427
    %v931 = vmul.f32 %v915, 0.23899427
    %v932 = vmul.f32 %v916, 0.23899427
    %v933 = vmul.f32 %v917, 0.23899427
    %v934 = vmul.f32 %v918, 0.23899427
    %v935 = vmul.f32 %v919, 0.23899427
    %v952 = vrot.slane %v920, 7
    %v953 = vrot.slane %v921, 7
    %v954 = vrot.slane %v922, 7
    %v955 = vsel %vm229, %v952, %v954
    %v956 = vrot.slane %v923, 7
    %v957 = vsel %vm229, %v953, %v956
    %v958 = vrot.slane %v924, 7
    %v959 = vsel %vm229, %v954, %v958
    %v960 = vrot.slane %v925, 7
    %v961 = vsel %vm229, %v956, %v960
    %v962 = vrot.slane %v926, 7
    %v963 = vsel %vm229, %v958, %v962
    %v964 = vrot.slane %v927, 7
    %v965 = vsel %vm229, %v960, %v964
    %v966 = vrot.slane %v928, 7
    %v967 = vsel %vm229, %v962, %v966
    %v968 = vrot.slane %v929, 7
    %v969 = vsel %vm229, %v964, %v968
    %v970 = vrot.slane %v930, 7
    %v971 = vsel %vm229, %v966, %v970
    %v972 = vrot.slane %v931, 7
    %v973 = vsel %vm229, %v968, %v972
    %v974 = vrot.slane %v932, 7
    %v975 = vsel %vm229, %v970, %v974
    %v976 = vrot.slane %v933, 7
    %v977 = vsel %vm229, %v972, %v976
    %v978 = vrot.slane %v934, 7
    %v979 = vsel %vm229, %v974, %v978
    %v980 = vrot.slane %v935, 7
    %v981 = vsel %vm229, %v976, %v980
    %v1000 = vadd.f32 %v800, %v952
    %v1001 = vadd.f32 %v801, %v953
    %v1002 = vadd.f32 %v802, %v955
    %v1003 = vadd.f32 %v803, %v957
    %v1004 = vadd.f32 %v804, %v959
    %v1005 = vadd.f32 %v805, %v961
    %v1006 = vadd.f32 %v806, %v963
    %v1007 = vadd.f32 %v807, %v965
    %v1008 = vadd.f32 %v808, %v967
    %v1009 = vadd.f32 %v809, %v969
    %v1010 = vadd.f32 %v810, %v971
    %v1011 = vadd.f32 %v811, %v973
    %v1012 = vadd.f32 %v812, %v975
    %v1013 = vadd.f32 %v813, %v977
    %v1014 = vadd.f32 %v814, %v979
    %v1015 = vadd.f32 %v815, %v981
    %v1016 = vadd.f32 %v816, %v978
    %v1017 = vadd.f32 %v817, %v980
    %v1036 = vrot.slane %v1000, 1
    %v1037 = vrot.slane %v1002, 1
    %v1038 = vsel %vm314, %v1036, %v1037
    %v1039 = vrot.slane %v1001, 1
    %v1040 = vrot.slane %v1003, 1
    %v1041 = vsel %vm314, %v1039, %v1040
    %v1042 = vrot.slane %v1004, 1
    %v1043 = vsel %vm314, %v1037, %v1042
    %v1044 = vrot.slane %v1005, 1
    %v1045 = vsel %vm314, %v1040, %v1044
    %v1046 = vrot.slane %v1006, 1
    %v1047 = vsel %vm314, %v1042, %v1046
    %v1048 = vrot.slane %v1007, 1
    %v1049 = vsel %vm314, %v1044, %v1048
    %v1050 = vrot.slane %v1008, 1
    %v1051 = vsel %vm314, %v1046, %v1050
    %v1052 = vrot.slane %v1009, 1
    %v1053 = vsel %vm314, %v1048, %v1052
    %v1054 = vrot.slane %v1010, 1
    %v1055 = vsel %vm314, %v1050, %v1054
    %v1056 = vrot.slane %v1011, 1
    %v1057 = vsel %vm314, %v1052, %v1056
    %v1058 = vrot.slane %v1012, 1
    %v1059 = vsel %vm314, %v1054, %v1058
    %v1060 = vrot.slane %v1013, 1
    %v1061 = vsel %vm314, %v1056, %v1060
    %v1062 = vrot.slane %v1014, 1
    %v1063 = vsel %vm314, %v1058, %v1062
    %v1064 = vrot.slane %v1015, 1
    %v1065 = vsel %vm314, %v1060, %v1064
    %v1066 = vrot.slane %v1016, 1
    %v1067 = vsel %vm314, %v1062, %v1066
    %v1068 = vrot.slane %v1017, 1
    %v1069 = vsel %vm314, %v1064, %v1068
    %1086 = vst [vmem:[#allocation2] sm:$0xff] %v1038
    %1087 = vst.msk [vmem:[#allocation2 + $0x8] sm:$0xff] %vm366, %v1041
    %1088 = vst [vmem:[#allocation2 + $0x10] sm:$0xff] %v1043
    %1089 = vst.msk [vmem:[#allocation2 + $0x18] sm:$0xff] %vm366, %v1045
    %1090 = vst [vmem:[#allocation2 + $0x20] sm:$0xff] %v1047
    %1091 = vst.msk [vmem:[#allocation2 + $0x28] sm:$0xff] %vm366, %v1049
    %1092 = vst [vmem:[#allocation2 + $0x30] sm:$0xff] %v1051
    %1093 = vst.msk [vmem:[#allocation2 + $0x38] sm:$0xff] %vm366, %v1053
    %1094 = vst [vmem:[#allocation2 + $0x40] sm:$0xff] %v1055
    %1095 = vst.msk [vmem:[#allocation2 + $0x48] sm:$0xff] %vm366, %v1057
    %1096 = vst [vmem:[#allocation2 + $0x50] sm:$0xff] %v1059
    %1097 = vst.msk [vmem:[#allocation2 + $0x58] sm:$0xff] %vm366, %v1061
    %1098 = vst [vmem:[#allocation2 + $0x60] sm:$0xff] %v1063
    %1099 = vst.msk [vmem:[#allocation2 + $0x68] sm:$0xff] %vm366, %v1065
    %1100 = vst [vmem:[#allocation2 + $0x70] sm:$0xff] %v1067
    %1101 = vst.msk [vmem:[#allocation2 + $0x78] sm:$0xff] %vm366, %v1069
    %v1102 = vld [vmem:[#allocation2] sm:$0xff]
    %v1103 = vld [vmem:[#allocation2 + $0x10] sm:$0xff]
    %v1104 = vld [vmem:[#allocation2 + $0x20] sm:$0xff]
    %v1105 = vld [vmem:[#allocation2 + $0x30] sm:$0xff]
    %v1106 = vld [vmem:[#allocation2 + $0x40] sm:$0xff]
    %v1107 = vld [vmem:[#allocation2 + $0x50] sm:$0xff]
    %v1108 = vld [vmem:[#allocation2 + $0x60] sm:$0xff]
    %v1109 = vld [vmem:[#allocation2 + $0x70] sm:$0xff]
    %v1110 = vmul.f32 %v1102, 0.52201146
    %v1111 = vmul.f32 %v1103, 0.52201146
    %v1112 = vmul.f32 %v1104, 0.52201146
    %v1113 = vmul.f32 %v1105, 0.52201146
    %v1114 = vmul.f32 %v1106, 0.52201146
    %v1115 = vmul.f32 %v1107, 0.52201146
    %v1116 = vmul.f32 %v1108, 0.52201146
    %v1117 = vmul.f32 %v1109, 0.52201146
    %1126 = vrot.lane.b32.xlu0 %v1102, 126
    %v1127 = vpop.permute.xlu0 %1126
    %1128 = vrot.lane.b32.xlu0 %v1103, 126
    %v1129 = vpop.permute.xlu0 %1128
    %1130 = vrot.lane.b32.xlu0 %v1104, 126
    %v1131 = vpop.permute.xlu0 %1130
    %1132 = vrot.lane.b32.xlu0 %v1105, 126
    %v1133 = vpop.permute.xlu0 %1132
    %1134 = vrot.lane.b32.xlu0 %v1106, 126
    %v1135 = vpop.permute.xlu0 %1134
    %1136 = vrot.lane.b32.xlu0 %v1107, 126
    %v1137 = vpop.permute.xlu0 %1136
    %1138 = vrot.lane.b32.xlu0 %v1108, 126
    %v1139 = vpop.permute.xlu0 %1138
    %1140 = vrot.lane.b32.xlu0 %v1109, 126
    %v1141 = vpop.permute.xlu0 %1140
    %v1150 = vadd.f32 %v1102, %v1127
    %v1151 = vadd.f32 %v1103, %v1129
    %v1152 = vadd.f32 %v1104, %v1131
    %v1153 = vadd.f32 %v1105, %v1133
    %v1154 = vadd.f32 %v1106, %v1135
    %v1155 = vadd.f32 %v1107, %v1137
    %v1156 = vadd.f32 %v1108, %v1139
    %v1157 = vadd.f32 %v1109, %v1141
    %v1158 = vmul.f32 %v1150, 0.23899427
    %v1159 = vmul.f32 %v1151, 0.23899427
    %v1160 = vmul.f32 %v1152, 0.23899427
    %v1161 = vmul.f32 %v1153, 0.23899427
    %v1162 = vmul.f32 %v1154, 0.23899427
    %v1163 = vmul.f32 %v1155, 0.23899427
    %v1164 = vmul.f32 %v1156, 0.23899427
    %v1165 = vmul.f32 %v1157, 0.23899427
    %1174 = vrot.lane.b32.xlu0 %v1158, 1
    %v1175 = vpop.permute.xlu0 %1174
    %1176 = vrot.lane.b32.xlu0 %v1159, 1
    %v1177 = vpop.permute.xlu0 %1176
    %1178 = vrot.lane.b32.xlu0 %v1160, 1
    %v1179 = vpop.permute.xlu0 %1178
    %1180 = vrot.lane.b32.xlu0 %v1161, 1
    %v1181 = vpop.permute.xlu0 %1180
    %1182 = vrot.lane.b32.xlu0 %v1162, 1
    %v1183 = vpop.permute.xlu0 %1182
    %1184 = vrot.lane.b32.xlu0 %v1163, 1
    %v1185 = vpop.permute.xlu0 %1184
    %1186 = vrot.lane.b32.xlu0 %v1164, 1
    %v1187 = vpop.permute.xlu0 %1186
    %1188 = vrot.lane.b32.xlu0 %v1165, 1
    %v1189 = vpop.permute.xlu0 %1188
    %v1198 = vadd.f32 %v1110, %v1175
    %v1199 = vadd.f32 %v1111, %v1177
    %v1200 = vadd.f32 %v1112, %v1179
    %v1201 = vadd.f32 %v1113, %v1181
    %v1202 = vadd.f32 %v1114, %v1183
    %v1203 = vadd.f32 %v1115, %v1185
    %v1204 = vadd.f32 %v1116, %v1187
    %v1205 = vadd.f32 %v1117, %v1189
    %v1206 = vand.u32 2147483647, %v1198
    %v1207 = vand.u32 2147483647, %v1199
    %v1208 = vand.u32 2147483647, %v1200
    %v1209 = vand.u32 2147483647, %v1201
    %v1210 = vand.u32 2147483647, %v1202
    %v1211 = vand.u32 2147483647, %v1203
    %v1212 = vand.u32 2147483647, %v1204
    %v1213 = vand.u32 2147483647, %v1205
    %v1214 = vmul.f32 %v1206, 0.587
    %v1215 = vmul.f32 %v1207, 0.587
    %v1216 = vmul.f32 %v1208, 0.587
    %v1217 = vmul.f32 %v1209, 0.587
    %v1218 = vmul.f32 %v1210, 0.587
    %v1219 = vmul.f32 %v1211, 0.587
    %v1220 = vmul.f32 %v1212, 0.587
    %v1221 = vmul.f32 %v1213, 0.587
    %v1222 = vadd.f32 %v502, %v1214
    %v1223 = vadd.f32 %v503, %v1215
    %v1224 = vadd.f32 %v504, %v1216
    %v1225 = vadd.f32 %v505, %v1217
    %v1226 = vadd.f32 %v506, %v1218
    %v1227 = vadd.f32 %v507, %v1219
    %v1228 = vadd.f32 %v508, %v1220
    %v1229 = vadd.f32 %v509, %v1221
    %v1230 = vld [vmem:[#allocation2 + $0x8] sm:$0xff]
    %v1231 = vld [vmem:[#allocation2 + $0x18] sm:$0xff]
    %v1232 = vld [vmem:[#allocation2 + $0x28] sm:$0xff]
    %v1233 = vld [vmem:[#allocation2 + $0x38] sm:$0xff]
    %v1234 = vld [vmem:[#allocation2 + $0x48] sm:$0xff]
    %v1235 = vld [vmem:[#allocation2 + $0x58] sm:$0xff]
    %v1236 = vld [vmem:[#allocation2 + $0x68] sm:$0xff]
    %v1237 = vld [vmem:[#allocation2 + $0x78] sm:$0xff]
    %v1238 = vmul.f32 %v1230, 0.52201146
    %v1239 = vmul.f32 %v1231, 0.52201146
    %v1240 = vmul.f32 %v1232, 0.52201146
    %v1241 = vmul.f32 %v1233, 0.52201146
    %v1242 = vmul.f32 %v1234, 0.52201146
    %v1243 = vmul.f32 %v1235, 0.52201146
    %v1244 = vmul.f32 %v1236, 0.52201146
    %v1245 = vmul.f32 %v1237, 0.52201146
    %1254 = vrot.lane.b32.xlu0 %v1230, 126
    %v1255 = vpop.permute.xlu0 %1254
    %1256 = vrot.lane.b32.xlu0 %v1231, 126
    %v1257 = vpop.permute.xlu0 %1256
    %1258 = vrot.lane.b32.xlu0 %v1232, 126
    %v1259 = vpop.permute.xlu0 %1258
    %1260 = vrot.lane.b32.xlu0 %v1233, 126
    %v1261 = vpop.permute.xlu0 %1260
    %1262 = vrot.lane.b32.xlu0 %v1234, 126
    %v1263 = vpop.permute.xlu0 %1262
    %1264 = vrot.lane.b32.xlu0 %v1235, 126
    %v1265 = vpop.permute.xlu0 %1264
    %1266 = vrot.lane.b32.xlu0 %v1236, 126
    %v1267 = vpop.permute.xlu0 %1266
    %1268 = vrot.lane.b32.xlu0 %v1237, 126
    %v1269 = vpop.permute.xlu0 %1268
    %v1270 = vsel %vm550, %v1127, %v1255
    %v1271 = vsel %vm550, %v1129, %v1257
    %v1272 = vsel %vm550, %v1131, %v1259
    %v1273 = vsel %vm550, %v1133, %v1261
    %v1274 = vsel %vm550, %v1135, %v1263
    %v1275 = vsel %vm550, %v1137, %v1265
    %v1276 = vsel %vm550, %v1139, %v1267
    %v1277 = vsel %vm550, %v1141, %v1269
    %v1294 = vadd.f32 %v1102, %v1270
    %v1295 = vadd.f32 %v1230, %v1255
    %v1296 = vadd.f32 %v1103, %v1271
    %v1297 = vadd.f32 %v1231, %v1257
    %v1298 = vadd.f32 %v1104, %v1272
    %v1299 = vadd.f32 %v1232, %v1259
    %v1300 = vadd.f32 %v1105, %v1273
    %v1301 = vadd.f32 %v1233, %v1261
    %v1302 = vadd.f32 %v1106, %v1274
    %v1303 = vadd.f32 %v1234, %v1263
    %v1304 = vadd.f32 %v1107, %v1275
    %v1305 = vadd.f32 %v1235, %v1265
    %v1306 = vadd.f32 %v1108, %v1276
    %v1307 = vadd.f32 %v1236, %v1267
    %v1308 = vadd.f32 %v1109, %v1277
    %v1309 = vadd.f32 %v1237, %v1269
    %v1310 = vmul.f32 %v1294, 0.23899427
    %v1311 = vmul.f32 %v1295, 0.23899427
    %v1312 = vmul.f32 %v1296, 0.23899427
    %v1313 = vmul.f32 %v1297, 0.23899427
    %v1314 = vmul.f32 %v1298, 0.23899427
    %v1315 = vmul.f32 %v1299, 0.23899427
    %v1316 = vmul.f32 %v1300, 0.23899427
    %v1317 = vmul.f32 %v1301, 0.23899427
    %v1318 = vmul.f32 %v1302, 0.23899427
    %v1319 = vmul.f32 %v1303, 0.23899427
    %v1320 = vmul.f32 %v1304, 0.23899427
    %v1321 = vmul.f32 %v1305, 0.23899427
    %v1322 = vmul.f32 %v1306, 0.23899427
    %v1323 = vmul.f32 %v1307, 0.23899427
    %v1324 = vmul.f32 %v1308, 0.23899427
    %v1325 = vmul.f32 %v1309, 0.23899427
    %1342 = vrot.lane.b32.xlu0 %v1310, 1
    %v1343 = vpop.permute.xlu0 %1342
    %1344 = vrot.lane.b32.xlu0 %v1311, 1
    %v1345 = vpop.permute.xlu0 %1344
    %1346 = vrot.lane.b32.xlu0 %v1312, 1
    %v1347 = vpop.permute.xlu0 %1346
    %1348 = vrot.lane.b32.xlu0 %v1313, 1
    %v1349 = vpop.permute.xlu0 %1348
    %1350 = vrot.lane.b32.xlu0 %v1314, 1
    %v1351 = vpop.permute.xlu0 %1350
    %1352 = vrot.lane.b32.xlu0 %v1315, 1
    %v1353 = vpop.permute.xlu0 %1352
    %1354 = vrot.lane.b32.xlu0 %v1316, 1
    %v1355 = vpop.permute.xlu0 %1354
    %1356 = vrot.lane.b32.xlu0 %v1317, 1
    %v1357 = vpop.permute.xlu0 %1356
    %1358 = vrot.lane.b32.xlu0 %v1318, 1
    %v1359 = vpop.permute.xlu0 %1358
    %1360 = vrot.lane.b32.xlu0 %v1319, 1
    %v1361 = vpop.permute.xlu0 %1360
    %1362 = vrot.lane.b32.xlu0 %v1320, 1
    %v1363 = vpop.permute.xlu0 %1362
    %1364 = vrot.lane.b32.xlu0 %v1321, 1
    %v1365 = vpop.permute.xlu0 %1364
    %1366 = vrot.lane.b32.xlu0 %v1322, 1
    %v1367 = vpop.permute.xlu0 %1366
    %1368 = vrot.lane.b32.xlu0 %v1323, 1
    %v1369 = vpop.permute.xlu0 %1368
    %1370 = vrot.lane.b32.xlu0 %v1324, 1
    %v1371 = vpop.permute.xlu0 %1370
    %1372 = vrot.lane.b32.xlu0 %v1325, 1
    %v1373 = vpop.permute.xlu0 %1372
    %v1374 = vsel %vm655, %v1343, %v1345
    %v1375 = vsel %vm655, %v1347, %v1349
    %v1376 = vsel %vm655, %v1351, %v1353
    %v1377 = vsel %vm655, %v1355, %v1357
    %v1378 = vsel %vm655, %v1359, %v1361
    %v1379 = vsel %vm655, %v1363, %v1365
    %v1380 = vsel %vm655, %v1367, %v1369
    %v1381 = vsel %vm655, %v1371, %v1373
    %v1398 = vadd.f32 %v1110, %v1343
    %v1399 = vadd.f32 %v1238, %v1374
    %v1400 = vadd.f32 %v1111, %v1347
    %v1401 = vadd.f32 %v1239, %v1375
    %v1402 = vadd.f32 %v1112, %v1351
    %v1403 = vadd.f32 %v1240, %v1376
    %v1404 = vadd.f32 %v1113, %v1355
    %v1405 = vadd.f32 %v1241, %v1377
    %v1406 = vadd.f32 %v1114, %v1359
    %v1407 = vadd.f32 %v1242, %v1378
    %v1408 = vadd.f32 %v1115, %v1363
    %v1409 = vadd.f32 %v1243, %v1379
    %v1410 = vadd.f32 %v1116, %v1367
    %v1411 = vadd.f32 %v1244, %v1380
    %v1412 = vadd.f32 %v1117, %v1371
    %v1413 = vadd.f32 %v1245, %v1381
    %v1414 = vand.u32 2147483647, %v1398
    %v1415 = vand.u32 2147483647, %v1399
    %v1416 = vand.u32 2147483647, %v1400
    %v1417 = vand.u32 2147483647, %v1401
    %v1418 = vand.u32 2147483647, %v1402
    %v1419 = vand.u32 2147483647, %v1403
    %v1420 = vand.u32 2147483647, %v1404
    %v1421 = vand.u32 2147483647, %v1405
    %v1422 = vand.u32 2147483647, %v1406
    %v1423 = vand.u32 2147483647, %v1407
    %v1424 = vand.u32 2147483647, %v1408
    %v1425 = vand.u32 2147483647, %v1409
    %v1426 = vand.u32 2147483647, %v1410
    %v1427 = vand.u32 2147483647, %v1411
    %v1428 = vand.u32 2147483647, %v1412
    %v1429 = vand.u32 2147483647, %v1413
    %v1430 = vmul.f32 %v1414, 0.587
    %v1431 = vmul.f32 %v1415, 0.587
    %v1432 = vmul.f32 %v1416, 0.587
    %v1433 = vmul.f32 %v1417, 0.587
    %v1434 = vmul.f32 %v1418, 0.587
    %v1435 = vmul.f32 %v1419, 0.587
    %v1436 = vmul.f32 %v1420, 0.587
    %v1437 = vmul.f32 %v1421, 0.587
    %v1438 = vmul.f32 %v1422, 0.587
    %v1439 = vmul.f32 %v1423, 0.587
    %v1440 = vmul.f32 %v1424, 0.587
    %v1441 = vmul.f32 %v1425, 0.587
    %v1442 = vmul.f32 %v1426, 0.587
    %v1443 = vmul.f32 %v1427, 0.587
    %v1444 = vmul.f32 %v1428, 0.587
    %v1445 = vmul.f32 %v1429, 0.587
    %v1446 = vadd.f32 %v728, %v1430
    %v1447 = vadd.f32 %v729, %v1431
    %v1448 = vadd.f32 %v730, %v1432
    %v1449 = vadd.f32 %v731, %v1433
    %v1450 = vadd.f32 %v732, %v1434
    %v1451 = vadd.f32 %v733, %v1435
    %v1452 = vadd.f32 %v734, %v1436
    %v1453 = vadd.f32 %v735, %v1437
    %v1454 = vadd.f32 %v736, %v1438
    %v1455 = vadd.f32 %v737, %v1439
    %v1456 = vadd.f32 %v738, %v1440
    %v1457 = vadd.f32 %v739, %v1441
    %v1458 = vadd.f32 %v740, %v1442
    %v1459 = vadd.f32 %v741, %v1443
    %v1460 = vadd.f32 %v742, %v1444
    %v1461 = vadd.f32 %v743, %v1445
    %s1462 = scalar_lea.vmem %s1, 288
    %v1463 = vld [vmem:[%s1462] sm:$0xfe]
    %v1464 = vld [vmem:[%s1462 + $0x8] sm:$0xfe]
    %v1465 = vld [vmem:[%s1462 + $0x10] sm:$0xff]
    %v1466 = vld [vmem:[%s1462 + $0x18] sm:$0xff]
    %v1467 = vld [vmem:[%s1462 + $0x20] sm:$0xff]
    %v1468 = vld [vmem:[%s1462 + $0x28] sm:$0xff]
    %v1469 = vld [vmem:[%s1462 + $0x30] sm:$0xff]
    %v1470 = vld [vmem:[%s1462 + $0x38] sm:$0xff]
    %v1471 = vld [vmem:[%s1462 + $0x40] sm:$0xff]
    %v1472 = vld [vmem:[%s1462 + $0x48] sm:$0xff]
    %v1473 = vld [vmem:[%s1462 + $0x50] sm:$0xff]
    %v1474 = vld [vmem:[%s1462 + $0x58] sm:$0xff]
    %v1475 = vld [vmem:[%s1462 + $0x60] sm:$0xff]
    %v1476 = vld [vmem:[%s1462 + $0x68] sm:$0xff]
    %v1477 = vld [vmem:[%s1462 + $0x70] sm:$0xff]
    %v1478 = vld [vmem:[%s1462 + $0x78] sm:$0xff]
    %v1479 = vld [vmem:[%s1462 + $0x80] sm:$0x1]
    %v1480 = vld [vmem:[%s1462 + $0x88] sm:$0x1]
    %s1481 = scalar_lea.vmem %s2, 288
    %v1482 = vld [vmem:[%s1481] sm:$0xfe]
    %v1483 = vld [vmem:[%s1481 + $0x8] sm:$0xfe]
    %v1484 = vld [vmem:[%s1481 + $0x10] sm:$0xff]
    %v1485 = vld [vmem:[%s1481 + $0x18] sm:$0xff]
    %v1486 = vld [vmem:[%s1481 + $0x20] sm:$0xff]
    %v1487 = vld [vmem:[%s1481 + $0x28] sm:$0xff]
    %v1488 = vld [vmem:[%s1481 + $0x30] sm:$0xff]
    %v1489 = vld [vmem:[%s1481 + $0x38] sm:$0xff]
    %v1490 = vld [vmem:[%s1481 + $0x40] sm:$0xff]
    %v1491 = vld [vmem:[%s1481 + $0x48] sm:$0xff]
    %v1492 = vld [vmem:[%s1481 + $0x50] sm:$0xff]
    %v1493 = vld [vmem:[%s1481 + $0x58] sm:$0xff]
    %v1494 = vld [vmem:[%s1481 + $0x60] sm:$0xff]
    %v1495 = vld [vmem:[%s1481 + $0x68] sm:$0xff]
    %v1496 = vld [vmem:[%s1481 + $0x70] sm:$0xff]
    %v1497 = vld [vmem:[%s1481 + $0x78] sm:$0xff]
    %v1498 = vld [vmem:[%s1481 + $0x80] sm:$0x1]
    %v1499 = vld [vmem:[%s1481 + $0x88] sm:$0x1]
    %v1500 = vsub.f32 %v1463, %v1482
    %v1501 = vsub.f32 %v1464, %v1483
    %v1502 = vsub.f32 %v1465, %v1484
    %v1503 = vsub.f32 %v1466, %v1485
    %v1504 = vsub.f32 %v1467, %v1486
    %v1505 = vsub.f32 %v1468, %v1487
    %v1506 = vsub.f32 %v1469, %v1488
    %v1507 = vsub.f32 %v1470, %v1489
    %v1508 = vsub.f32 %v1471, %v1490
    %v1509 = vsub.f32 %v1472, %v1491
    %v1510 = vsub.f32 %v1473, %v1492
    %v1511 = vsub.f32 %v1474, %v1493
    %v1512 = vsub.f32 %v1475, %v1494
    %v1513 = vsub.f32 %v1476, %v1495
    %v1514 = vsub.f32 %v1477, %v1496
    %v1515 = vsub.f32 %v1478, %v1497
    %v1516 = vsub.f32 %v1479, %v1498
    %v1517 = vsub.f32 %v1480, %v1499
    %v1518 = vmul.f32 %v1500, 0.52201146
    %v1519 = vmul.f32 %v1501, 0.52201146
    %v1520 = vmul.f32 %v1502, 0.52201146
    %v1521 = vmul.f32 %v1503, 0.52201146
    %v1522 = vmul.f32 %v1504, 0.52201146
    %v1523 = vmul.f32 %v1505, 0.52201146
    %v1524 = vmul.f32 %v1506, 0.52201146
    %v1525 = vmul.f32 %v1507, 0.52201146
    %v1526 = vmul.f32 %v1508, 0.52201146
    %v1527 = vmul.f32 %v1509, 0.52201146
    %v1528 = vmul.f32 %v1510, 0.52201146
    %v1529 = vmul.f32 %v1511, 0.52201146
    %v1530 = vmul.f32 %v1512, 0.52201146
    %v1531 = vmul.f32 %v1513, 0.52201146
    %v1532 = vmul.f32 %v1514, 0.52201146
    %v1533 = vmul.f32 %v1515, 0.52201146
    %v1534 = vmul.f32 %v1516, 0.52201146
    %v1535 = vmul.f32 %v1517, 0.52201146
    %v1536 = vld [vmem:[%s1462] sm:$0xff]
    %v1537 = vld [vmem:[%s1462 + $0x8] sm:$0xff]
    %v1538 = vld [vmem:[%s1481] sm:$0xff]
    %v1539 = vld [vmem:[%s1481 + $0x8] sm:$0xff]
    %v1540 = vsub.f32 %v1536, %v1538
    %v1541 = vsub.f32 %v1537, %v1539
    %v1542 = vld [vmem:[%s1462] sm:$0xfc]
    %v1543 = vld [vmem:[%s1462 + $0x8] sm:$0xfc]
    %v1544 = vld [vmem:[%s1462 + $0x80] sm:$0x3]
    %v1545 = vld [vmem:[%s1462 + $0x88] sm:$0x3]
    %v1546 = vld [vmem:[%s1481] sm:$0xfc]
    %v1547 = vld [vmem:[%s1481 + $0x8] sm:$0xfc]
    %v1548 = vld [vmem:[%s1481 + $0x80] sm:$0x3]
    %v1549 = vld [vmem:[%s1481 + $0x88] sm:$0x3]
    %v1550 = vsub.f32 %v1542, %v1546
    %v1551 = vsub.f32 %v1543, %v1547
    %v1552 = vsub.f32 %v1544, %v1548
    %v1553 = vsub.f32 %v1545, %v1549
    %v1572 = vrot.slane %v1550, 2
    %v1573 = vrot.slane %v1502, 2
    %v1574 = vsel %vm130, %v1572, %v1573
    %v1575 = vrot.slane %v1551, 2
    %v1576 = vrot.slane %v1503, 2
    %v1577 = vsel %vm130, %v1575, %v1576
    %v1578 = vrot.slane %v1504, 2
    %v1579 = vsel %vm130, %v1573, %v1578
    %v1580 = vrot.slane %v1505, 2
    %v1581 = vsel %vm130, %v1576, %v1580
    %v1582 = vrot.slane %v1506, 2
    %v1583 = vsel %vm130, %v1578, %v1582
    %v1584 = vrot.slane %v1507, 2
    %v1585 = vsel %vm130, %v1580, %v1584
    %v1586 = vrot.slane %v1508, 2
    %v1587 = vsel %vm130, %v1582, %v1586
    %v1588 = vrot.slane %v1509, 2
    %v1589 = vsel %vm130, %v1584, %v1588
    %v1590 = vrot.slane %v1510, 2
    %v1591 = vsel %vm130, %v1586, %v1590
    %v1592 = vrot.slane %v1511, 2
    %v1593 = vsel %vm130, %v1588, %v1592
    %v1594 = vrot.slane %v1512, 2
    %v1595 = vsel %vm130, %v1590, %v1594
    %v1596 = vrot.slane %v1513, 2
    %v1597 = vsel %vm130, %v1592, %v1596
    %v1598 = vrot.slane %v1514, 2
    %v1599 = vsel %vm130, %v1594, %v1598
    %v1600 = vrot.slane %v1515, 2
    %v1601 = vsel %vm130, %v1596, %v1600
    %v1602 = vrot.slane %v1552, 2
    %v1603 = vsel %vm130, %v1598, %v1602
    %v1604 = vrot.slane %v1553, 2
    %v1605 = vsel %vm130, %v1600, %v1604
    %v1622 = vadd.f32 %v1540, %v1574
    %v1623 = vadd.f32 %v1541, %v1577
    %v1624 = vadd.f32 %v1502, %v1579
    %v1625 = vadd.f32 %v1503, %v1581
    %v1626 = vadd.f32 %v1504, %v1583
    %v1627 = vadd.f32 %v1505, %v1585
    %v1628 = vadd.f32 %v1506, %v1587
    %v1629 = vadd.f32 %v1507, %v1589
    %v1630 = vadd.f32 %v1508, %v1591
    %v1631 = vadd.f32 %v1509, %v1593
    %v1632 = vadd.f32 %v1510, %v1595
    %v1633 = vadd.f32 %v1511, %v1597
    %v1634 = vadd.f32 %v1512, %v1599
    %v1635 = vadd.f32 %v1513, %v1601
    %v1636 = vadd.f32 %v1514, %v1603
    %v1637 = vadd.f32 %v1515, %v1605
    %v1638 = vmul.f32 %v1622, 0.23899427
    %v1639 = vmul.f32 %v1623, 0.23899427
    %v1640 = vmul.f32 %v1624, 0.23899427
    %v1641 = vmul.f32 %v1625, 0.23899427
    %v1642 = vmul.f32 %v1626, 0.23899427
    %v1643 = vmul.f32 %v1627, 0.23899427
    %v1644 = vmul.f32 %v1628, 0.23899427
    %v1645 = vmul.f32 %v1629, 0.23899427
    %v1646 = vmul.f32 %v1630, 0.23899427
    %v1647 = vmul.f32 %v1631, 0.23899427
    %v1648 = vmul.f32 %v1632, 0.23899427
    %v1649 = vmul.f32 %v1633, 0.23899427
    %v1650 = vmul.f32 %v1634, 0.23899427
    %v1651 = vmul.f32 %v1635, 0.23899427
    %v1652 = vmul.f32 %v1636, 0.23899427
    %v1653 = vmul.f32 %v1637, 0.23899427
    %v1670 = vrot.slane %v1638, 7
    %v1671 = vrot.slane %v1639, 7
    %v1672 = vrot.slane %v1640, 7
    %v1673 = vsel %vm229, %v1670, %v1672
    %v1674 = vrot.slane %v1641, 7
    %v1675 = vsel %vm229, %v1671, %v1674
    %v1676 = vrot.slane %v1642, 7
    %v1677 = vsel %vm229, %v1672, %v1676
    %v1678 = vrot.slane %v1643, 7
    %v1679 = vsel %vm229, %v1674, %v1678
    %v1680 = vrot.slane %v1644, 7
    %v1681 = vsel %vm229, %v1676, %v1680
    %v1682 = vrot.slane %v1645, 7
    %v1683 = vsel %vm229, %v1678, %v1682
    %v1684 = vrot.slane %v1646, 7
    %v1685 = vsel %vm229, %v1680, %v1684
    %v1686 = vrot.slane %v1647, 7
    %v1687 = vsel %vm229, %v1682, %v1686
    %v1688 = vrot.slane %v1648, 7
    %v1689 = vsel %vm229, %v1684, %v1688
    %v1690 = vrot.slane %v1649, 7
    %v1691 = vsel %vm229, %v1686, %v1690
    %v1692 = vrot.slane %v1650, 7
    %v1693 = vsel %vm229, %v1688, %v1692
    %v1694 = vrot.slane %v1651, 7
    %v1695 = vsel %vm229, %v1690, %v1694
    %v1696 = vrot.slane %v1652, 7
    %v1697 = vsel %vm229, %v1692, %v1696
    %v1698 = vrot.slane %v1653, 7
    %v1699 = vsel %vm229, %v1694, %v1698
    %v1718 = vadd.f32 %v1518, %v1670
    %v1719 = vadd.f32 %v1519, %v1671
    %v1720 = vadd.f32 %v1520, %v1673
    %v1721 = vadd.f32 %v1521, %v1675
    %v1722 = vadd.f32 %v1522, %v1677
    %v1723 = vadd.f32 %v1523, %v1679
    %v1724 = vadd.f32 %v1524, %v1681
    %v1725 = vadd.f32 %v1525, %v1683
    %v1726 = vadd.f32 %v1526, %v1685
    %v1727 = vadd.f32 %v1527, %v1687
    %v1728 = vadd.f32 %v1528, %v1689
    %v1729 = vadd.f32 %v1529, %v1691
    %v1730 = vadd.f32 %v1530, %v1693
    %v1731 = vadd.f32 %v1531, %v1695
    %v1732 = vadd.f32 %v1532, %v1697
    %v1733 = vadd.f32 %v1533, %v1699
    %v1734 = vadd.f32 %v1534, %v1696
    %v1735 = vadd.f32 %v1535, %v1698
    %v1754 = vrot.slane %v1718, 1
    %v1755 = vrot.slane %v1720, 1
    %v1756 = vsel %vm314, %v1754, %v1755
    %v1757 = vrot.slane %v1719, 1
    %v1758 = vrot.slane %v1721, 1
    %v1759 = vsel %vm314, %v1757, %v1758
    %v1760 = vrot.slane %v1722, 1
    %v1761 = vsel %vm314, %v1755, %v1760
    %v1762 = vrot.slane %v1723, 1
    %v1763 = vsel %vm314, %v1758, %v1762
    %v1764 = vrot.slane %v1724, 1
    %v1765 = vsel %vm314, %v1760, %v1764
    %v1766 = vrot.slane %v1725, 1
    %v1767 = vsel %vm314, %v1762, %v1766
    %v1768 = vrot.slane %v1726, 1
    %v1769 = vsel %vm314, %v1764, %v1768
    %v1770 = vrot.slane %v1727, 1
    %v1771 = vsel %vm314, %v1766, %v1770
    %v1772 = vrot.slane %v1728, 1
    %v1773 = vsel %vm314, %v1768, %v1772
    %v1774 = vrot.slane %v1729, 1
    %v1775 = vsel %vm314, %v1770, %v1774
    %v1776 = vrot.slane %v1730, 1
    %v1777 = vsel %vm314, %v1772, %v1776
    %v1778 = vrot.slane %v1731, 1
    %v1779 = vsel %vm314, %v1774, %v1778
    %v1780 = vrot.slane %v1732, 1
    %v1781 = vsel %vm314, %v1776, %v1780
    %v1782 = vrot.slane %v1733, 1
    %v1783 = vsel %vm314, %v1778, %v1782
    %v1784 = vrot.slane %v1734, 1
    %v1785 = vsel %vm314, %v1780, %v1784
    %v1786 = vrot.slane %v1735, 1
    %v1787 = vsel %vm314, %v1782, %v1786
    %1804 = vst [vmem:[#allocation2] sm:$0xff] %v1756
    %1805 = vst.msk [vmem:[#allocation2 + $0x8] sm:$0xff] %vm366, %v1759
    %1806 = vst [vmem:[#allocation2 + $0x10] sm:$0xff] %v1761
    %1807 = vst.msk [vmem:[#allocation2 + $0x18] sm:$0xff] %vm366, %v1763
    %1808 = vst [vmem:[#allocation2 + $0x20] sm:$0xff] %v1765
    %1809 = vst.msk [vmem:[#allocation2 + $0x28] sm:$0xff] %vm366, %v1767
    %1810 = vst [vmem:[#allocation2 + $0x30] sm:$0xff] %v1769
    %1811 = vst.msk [vmem:[#allocation2 + $0x38] sm:$0xff] %vm366, %v1771
    %1812 = vst [vmem:[#allocation2 + $0x40] sm:$0xff] %v1773
    %1813 = vst.msk [vmem:[#allocation2 + $0x48] sm:$0xff] %vm366, %v1775
    %1814 = vst [vmem:[#allocation2 + $0x50] sm:$0xff] %v1777
    %1815 = vst.msk [vmem:[#allocation2 + $0x58] sm:$0xff] %vm366, %v1779
    %1816 = vst [vmem:[#allocation2 + $0x60] sm:$0xff] %v1781
    %1817 = vst.msk [vmem:[#allocation2 + $0x68] sm:$0xff] %vm366, %v1783
    %1818 = vst [vmem:[#allocation2 + $0x70] sm:$0xff] %v1785
    %1819 = vst.msk [vmem:[#allocation2 + $0x78] sm:$0xff] %vm366, %v1787
    %v1820 = vld [vmem:[#allocation2] sm:$0xff]
    %v1821 = vld [vmem:[#allocation2 + $0x10] sm:$0xff]
    %v1822 = vld [vmem:[#allocation2 + $0x20] sm:$0xff]
    %v1823 = vld [vmem:[#allocation2 + $0x30] sm:$0xff]
    %v1824 = vld [vmem:[#allocation2 + $0x40] sm:$0xff]
    %v1825 = vld [vmem:[#allocation2 + $0x50] sm:$0xff]
    %v1826 = vld [vmem:[#allocation2 + $0x60] sm:$0xff]
    %v1827 = vld [vmem:[#allocation2 + $0x70] sm:$0xff]
    %v1828 = vmul.f32 %v1820, 0.52201146
    %v1829 = vmul.f32 %v1821, 0.52201146
    %v1830 = vmul.f32 %v1822, 0.52201146
    %v1831 = vmul.f32 %v1823, 0.52201146
    %v1832 = vmul.f32 %v1824, 0.52201146
    %v1833 = vmul.f32 %v1825, 0.52201146
    %v1834 = vmul.f32 %v1826, 0.52201146
    %v1835 = vmul.f32 %v1827, 0.52201146
    %1844 = vrot.lane.b32.xlu0 %v1820, 126
    %v1845 = vpop.permute.xlu0 %1844
    %1846 = vrot.lane.b32.xlu0 %v1821, 126
    %v1847 = vpop.permute.xlu0 %1846
    %1848 = vrot.lane.b32.xlu0 %v1822, 126
    %v1849 = vpop.permute.xlu0 %1848
    %1850 = vrot.lane.b32.xlu0 %v1823, 126
    %v1851 = vpop.permute.xlu0 %1850
    %1852 = vrot.lane.b32.xlu0 %v1824, 126
    %v1853 = vpop.permute.xlu0 %1852
    %1854 = vrot.lane.b32.xlu0 %v1825, 126
    %v1855 = vpop.permute.xlu0 %1854
    %1856 = vrot.lane.b32.xlu0 %v1826, 126
    %v1857 = vpop.permute.xlu0 %1856
    %1858 = vrot.lane.b32.xlu0 %v1827, 126
    %v1859 = vpop.permute.xlu0 %1858
    %v1868 = vadd.f32 %v1820, %v1845
    %v1869 = vadd.f32 %v1821, %v1847
    %v1870 = vadd.f32 %v1822, %v1849
    %v1871 = vadd.f32 %v1823, %v1851
    %v1872 = vadd.f32 %v1824, %v1853
    %v1873 = vadd.f32 %v1825, %v1855
    %v1874 = vadd.f32 %v1826, %v1857
    %v1875 = vadd.f32 %v1827, %v1859
    %v1876 = vmul.f32 %v1868, 0.23899427
    %v1877 = vmul.f32 %v1869, 0.23899427
    %v1878 = vmul.f32 %v1870, 0.23899427
    %v1879 = vmul.f32 %v1871, 0.23899427
    %v1880 = vmul.f32 %v1872, 0.23899427
    %v1881 = vmul.f32 %v1873, 0.23899427
    %v1882 = vmul.f32 %v1874, 0.23899427
    %v1883 = vmul.f32 %v1875, 0.23899427
    %1892 = vrot.lane.b32.xlu0 %v1876, 1
    %v1893 = vpop.permute.xlu0 %1892
    %1894 = vrot.lane.b32.xlu0 %v1877, 1
    %v1895 = vpop.permute.xlu0 %1894
    %1896 = vrot.lane.b32.xlu0 %v1878, 1
    %v1897 = vpop.permute.xlu0 %1896
    %1898 = vrot.lane.b32.xlu0 %v1879, 1
    %v1899 = vpop.permute.xlu0 %1898
    %1900 = vrot.lane.b32.xlu0 %v1880, 1
    %v1901 = vpop.permute.xlu0 %1900
    %1902 = vrot.lane.b32.xlu0 %v1881, 1
    %v1903 = vpop.permute.xlu0 %1902
    %1904 = vrot.lane.b32.xlu0 %v1882, 1
    %v1905 = vpop.permute.xlu0 %1904
    %1906 = vrot.lane.b32.xlu0 %v1883, 1
    %v1907 = vpop.permute.xlu0 %1906
    %v1916 = vadd.f32 %v1828, %v1893
    %v1917 = vadd.f32 %v1829, %v1895
    %v1918 = vadd.f32 %v1830, %v1897
    %v1919 = vadd.f32 %v1831, %v1899
    %v1920 = vadd.f32 %v1832, %v1901
    %v1921 = vadd.f32 %v1833, %v1903
    %v1922 = vadd.f32 %v1834, %v1905
    %v1923 = vadd.f32 %v1835, %v1907
    %v1924 = vand.u32 2147483647, %v1916
    %v1925 = vand.u32 2147483647, %v1917
    %v1926 = vand.u32 2147483647, %v1918
    %v1927 = vand.u32 2147483647, %v1919
    %v1928 = vand.u32 2147483647, %v1920
    %v1929 = vand.u32 2147483647, %v1921
    %v1930 = vand.u32 2147483647, %v1922
    %v1931 = vand.u32 2147483647, %v1923
    %v1932 = vmul.f32 %v1924, 0.114
    %v1933 = vmul.f32 %v1925, 0.114
    %v1934 = vmul.f32 %v1926, 0.114
    %v1935 = vmul.f32 %v1927, 0.114
    %v1936 = vmul.f32 %v1928, 0.114
    %v1937 = vmul.f32 %v1929, 0.114
    %v1938 = vmul.f32 %v1930, 0.114
    %v1939 = vmul.f32 %v1931, 0.114
    %v1940 = vadd.f32 %v1222, %v1932
    %v1941 = vadd.f32 %v1223, %v1933
    %v1942 = vadd.f32 %v1224, %v1934
    %v1943 = vadd.f32 %v1225, %v1935
    %v1944 = vadd.f32 %v1226, %v1936
    %v1945 = vadd.f32 %v1227, %v1937
    %v1946 = vadd.f32 %v1228, %v1938
    %v1947 = vadd.f32 %v1229, %v1939
    %v1948 = vld [vmem:[#allocation2 + $0x8] sm:$0xff]
    %v1949 = vld [vmem:[#allocation2 + $0x18] sm:$0xff]
    %v1950 = vld [vmem:[#allocation2 + $0x28] sm:$0xff]
    %v1951 = vld [vmem:[#allocation2 + $0x38] sm:$0xff]
    %v1952 = vld [vmem:[#allocation2 + $0x48] sm:$0xff]
    %v1953 = vld [vmem:[#allocation2 + $0x58] sm:$0xff]
    %v1954 = vld [vmem:[#allocation2 + $0x68] sm:$0xff]
    %v1955 = vld [vmem:[#allocation2 + $0x78] sm:$0xff]
    %v1956 = vmul.f32 %v1948, 0.52201146
    %v1957 = vmul.f32 %v1949, 0.52201146
    %v1958 = vmul.f32 %v1950, 0.52201146
    %v1959 = vmul.f32 %v1951, 0.52201146
    %v1960 = vmul.f32 %v1952, 0.52201146
    %v1961 = vmul.f32 %v1953, 0.52201146
    %v1962 = vmul.f32 %v1954, 0.52201146
    %v1963 = vmul.f32 %v1955, 0.52201146
    %1972 = vrot.lane.b32.xlu0 %v1948, 126
    %v1973 = vpop.permute.xlu0 %1972
    %1974 = vrot.lane.b32.xlu0 %v1949, 126
    %v1975 = vpop.permute.xlu0 %1974
    %1976 = vrot.lane.b32.xlu0 %v1950, 126
    %v1977 = vpop.permute.xlu0 %1976
    %1978 = vrot.lane.b32.xlu0 %v1951, 126
    %v1979 = vpop.permute.xlu0 %1978
    %1980 = vrot.lane.b32.xlu0 %v1952, 126
    %v1981 = vpop.permute.xlu0 %1980
    %1982 = vrot.lane.b32.xlu0 %v1953, 126
    %v1983 = vpop.permute.xlu0 %1982
    %1984 = vrot.lane.b32.xlu0 %v1954, 126
    %v1985 = vpop.permute.xlu0 %1984
    %1986 = vrot.lane.b32.xlu0 %v1955, 126
    %v1987 = vpop.permute.xlu0 %1986
    %v1988 = vsel %vm550, %v1845, %v1973
    %v1989 = vsel %vm550, %v1847, %v1975
    %v1990 = vsel %vm550, %v1849, %v1977
    %v1991 = vsel %vm550, %v1851, %v1979
    %v1992 = vsel %vm550, %v1853, %v1981
    %v1993 = vsel %vm550, %v1855, %v1983
    %v1994 = vsel %vm550, %v1857, %v1985
    %v1995 = vsel %vm550, %v1859, %v1987
    %v2012 = vadd.f32 %v1820, %v1988
    %v2013 = vadd.f32 %v1948, %v1973
    %v2014 = vadd.f32 %v1821, %v1989
    %v2015 = vadd.f32 %v1949, %v1975
    %v2016 = vadd.f32 %v1822, %v1990
    %v2017 = vadd.f32 %v1950, %v1977
    %v2018 = vadd.f32 %v1823, %v1991
    %v2019 = vadd.f32 %v1951, %v1979
    %v2020 = vadd.f32 %v1824, %v1992
    %v2021 = vadd.f32 %v1952, %v1981
    %v2022 = vadd.f32 %v1825, %v1993
    %v2023 = vadd.f32 %v1953, %v1983
    %v2024 = vadd.f32 %v1826, %v1994
    %v2025 = vadd.f32 %v1954, %v1985
    %v2026 = vadd.f32 %v1827, %v1995
    %v2027 = vadd.f32 %v1955, %v1987
    %v2028 = vmul.f32 %v2012, 0.23899427
    %v2029 = vmul.f32 %v2013, 0.23899427
    %v2030 = vmul.f32 %v2014, 0.23899427
    %v2031 = vmul.f32 %v2015, 0.23899427
    %v2032 = vmul.f32 %v2016, 0.23899427
    %v2033 = vmul.f32 %v2017, 0.23899427
    %v2034 = vmul.f32 %v2018, 0.23899427
    %v2035 = vmul.f32 %v2019, 0.23899427
    %v2036 = vmul.f32 %v2020, 0.23899427
    %v2037 = vmul.f32 %v2021, 0.23899427
    %v2038 = vmul.f32 %v2022, 0.23899427
    %v2039 = vmul.f32 %v2023, 0.23899427
    %v2040 = vmul.f32 %v2024, 0.23899427
    %v2041 = vmul.f32 %v2025, 0.23899427
    %v2042 = vmul.f32 %v2026, 0.23899427
    %v2043 = vmul.f32 %v2027, 0.23899427
    %2060 = vrot.lane.b32.xlu0 %v2028, 1
    %v2061 = vpop.permute.xlu0 %2060
    %2062 = vrot.lane.b32.xlu0 %v2029, 1
    %v2063 = vpop.permute.xlu0 %2062
    %2064 = vrot.lane.b32.xlu0 %v2030, 1
    %v2065 = vpop.permute.xlu0 %2064
    %2066 = vrot.lane.b32.xlu0 %v2031, 1
    %v2067 = vpop.permute.xlu0 %2066
    %2068 = vrot.lane.b32.xlu0 %v2032, 1
    %v2069 = vpop.permute.xlu0 %2068
    %2070 = vrot.lane.b32.xlu0 %v2033, 1
    %v2071 = vpop.permute.xlu0 %2070
    %2072 = vrot.lane.b32.xlu0 %v2034, 1
    %v2073 = vpop.permute.xlu0 %2072
    %2074 = vrot.lane.b32.xlu0 %v2035, 1
    %v2075 = vpop.permute.xlu0 %2074
    %2076 = vrot.lane.b32.xlu0 %v2036, 1
    %v2077 = vpop.permute.xlu0 %2076
    %2078 = vrot.lane.b32.xlu0 %v2037, 1
    %v2079 = vpop.permute.xlu0 %2078
    %2080 = vrot.lane.b32.xlu0 %v2038, 1
    %v2081 = vpop.permute.xlu0 %2080
    %2082 = vrot.lane.b32.xlu0 %v2039, 1
    %v2083 = vpop.permute.xlu0 %2082
    %2084 = vrot.lane.b32.xlu0 %v2040, 1
    %v2085 = vpop.permute.xlu0 %2084
    %2086 = vrot.lane.b32.xlu0 %v2041, 1
    %v2087 = vpop.permute.xlu0 %2086
    %2088 = vrot.lane.b32.xlu0 %v2042, 1
    %v2089 = vpop.permute.xlu0 %2088
    %2090 = vrot.lane.b32.xlu0 %v2043, 1
    %v2091 = vpop.permute.xlu0 %2090
    %v2092 = vsel %vm655, %v2061, %v2063
    %v2093 = vsel %vm655, %v2065, %v2067
    %v2094 = vsel %vm655, %v2069, %v2071
    %v2095 = vsel %vm655, %v2073, %v2075
    %v2096 = vsel %vm655, %v2077, %v2079
    %v2097 = vsel %vm655, %v2081, %v2083
    %v2098 = vsel %vm655, %v2085, %v2087
    %v2099 = vsel %vm655, %v2089, %v2091
    %v2116 = vadd.f32 %v1828, %v2061
    %v2117 = vadd.f32 %v1956, %v2092
    %v2118 = vadd.f32 %v1829, %v2065
    %v2119 = vadd.f32 %v1957, %v2093
    %v2120 = vadd.f32 %v1830, %v2069
    %v2121 = vadd.f32 %v1958, %v2094
    %v2122 = vadd.f32 %v1831, %v2073
    %v2123 = vadd.f32 %v1959, %v2095
    %v2124 = vadd.f32 %v1832, %v2077
    %v2125 = vadd.f32 %v1960, %v2096
    %v2126 = vadd.f32 %v1833, %v2081
    %v2127 = vadd.f32 %v1961, %v2097
    %v2128 = vadd.f32 %v1834, %v2085
    %v2129 = vadd.f32 %v1962, %v2098
    %v2130 = vadd.f32 %v1835, %v2089
    %v2131 = vadd.f32 %v1963, %v2099
    %v2132 = vand.u32 2147483647, %v2116
    %v2133 = vand.u32 2147483647, %v2117
    %v2134 = vand.u32 2147483647, %v2118
    %v2135 = vand.u32 2147483647, %v2119
    %v2136 = vand.u32 2147483647, %v2120
    %v2137 = vand.u32 2147483647, %v2121
    %v2138 = vand.u32 2147483647, %v2122
    %v2139 = vand.u32 2147483647, %v2123
    %v2140 = vand.u32 2147483647, %v2124
    %v2141 = vand.u32 2147483647, %v2125
    %v2142 = vand.u32 2147483647, %v2126
    %v2143 = vand.u32 2147483647, %v2127
    %v2144 = vand.u32 2147483647, %v2128
    %v2145 = vand.u32 2147483647, %v2129
    %v2146 = vand.u32 2147483647, %v2130
    %v2147 = vand.u32 2147483647, %v2131
    %v2148 = vmul.f32 %v2132, 0.114
    %v2149 = vmul.f32 %v2133, 0.114
    %v2150 = vmul.f32 %v2134, 0.114
    %v2151 = vmul.f32 %v2135, 0.114
    %v2152 = vmul.f32 %v2136, 0.114
    %v2153 = vmul.f32 %v2137, 0.114
    %v2154 = vmul.f32 %v2138, 0.114
    %v2155 = vmul.f32 %v2139, 0.114
    %v2156 = vmul.f32 %v2140, 0.114
    %v2157 = vmul.f32 %v2141, 0.114
    %v2158 = vmul.f32 %v2142, 0.114
    %v2159 = vmul.f32 %v2143, 0.114
    %v2160 = vmul.f32 %v2144, 0.114
    %v2161 = vmul.f32 %v2145, 0.114
    %v2162 = vmul.f32 %v2146, 0.114
    %v2163 = vmul.f32 %v2147, 0.114
    %v2164 = vadd.f32 %v1446, %v2148
    %v2165 = vadd.f32 %v1447, %v2149
    %v2166 = vadd.f32 %v1448, %v2150
    %v2167 = vadd.f32 %v1449, %v2151
    %v2168 = vadd.f32 %v1450, %v2152
    %v2169 = vadd.f32 %v1451, %v2153
    %v2170 = vadd.f32 %v1452, %v2154
    %v2171 = vadd.f32 %v1453, %v2155
    %v2172 = vadd.f32 %v1454, %v2156
    %v2173 = vadd.f32 %v1455, %v2157
    %v2174 = vadd.f32 %v1456, %v2158
    %v2175 = vadd.f32 %v1457, %v2159
    %v2176 = vadd.f32 %v1458, %v2160
    %v2177 = vadd.f32 %v1459, %v2161
    %v2178 = vadd.f32 %v1460, %v2162
    %v2179 = vadd.f32 %v1461, %v2163
    %v2180 = vlaneseq
    %v2181 = vshrl.u32 %v2180, 7
    %v2182 = vadd.s32 %v2181, 8
    %v2183 = vadd.s32 %v2181, 16
    %v2184 = vadd.s32 %v2181, 24
    %v2185 = vadd.s32 %v2181, 32
    %v2186 = vadd.s32 %v2181, 40
    %v2187 = vadd.s32 %v2181, 48
    %v2188 = vadd.s32 %v2181, 56
    %v2189 = vlaneseq
    %v2190 = vand.u32 %v2189, 127
    %s2191 = sld [smem:[#allocation4]]
    %s2192 = sld [smem:[#allocation4 + $0x1]]
    %s2193 = sld [smem:[#allocation4 + $0x2]]
    %s2194 = sld [smem:[#allocation4 + $0x3]]
    %v2195 = vstv %s2192
    %vm2196 = vcmp.ge.s32.totalorder %v2181, %v2195
    %vm2197 = vcmp.ge.s32.totalorder %v2182, %v2195
    %vm2198 = vcmp.ge.s32.totalorder %v2183, %v2195
    %vm2199 = vcmp.ge.s32.totalorder %v2184, %v2195
    %vm2200 = vcmp.ge.s32.totalorder %v2185, %v2195
    %vm2201 = vcmp.ge.s32.totalorder %v2186, %v2195
    %vm2202 = vcmp.ge.s32.totalorder %v2187, %v2195
    %vm2203 = vcmp.ge.s32.totalorder %v2188, %v2195
    %v2204 = vstv %s2194
    %vm2205 = vcmp.le.s32.totalorder %v2181, %v2204
    %vm2206 = vcmp.le.s32.totalorder %v2182, %v2204
    %vm2207 = vcmp.le.s32.totalorder %v2183, %v2204
    %vm2208 = vcmp.le.s32.totalorder %v2184, %v2204
    %vm2209 = vcmp.le.s32.totalorder %v2185, %v2204
    %vm2210 = vcmp.le.s32.totalorder %v2186, %v2204
    %vm2211 = vcmp.le.s32.totalorder %v2187, %v2204
    %vm2212 = vcmp.le.s32.totalorder %v2188, %v2204
    %vm2213 = vmand %vm2196, %vm2205
    %vm2214 = vmand %vm2197, %vm2206
    %vm2215 = vmand %vm2198, %vm2207
    %vm2216 = vmand %vm2199, %vm2208
    %vm2217 = vmand %vm2200, %vm2209
    %vm2218 = vmand %vm2201, %vm2210
    %vm2219 = vmand %vm2202, %vm2211
    %vm2220 = vmand %vm2203, %vm2212
    %v2221 = vsel %vm2213, 1, 0
    %v2222 = vsel %vm2214, 1, 0
    %v2223 = vsel %vm2215, 1, 0
    %v2224 = vsel %vm2216, 1, 0
    %v2225 = vsel %vm2217, 1, 0
    %v2226 = vsel %vm2218, 1, 0
    %v2227 = vsel %vm2219, 1, 0
    %v2228 = vsel %vm2220, 1, 0
    %v2229 = vstv %s2191
    %vm2230 = vcmp.ge.s32.totalorder %v2190, %v2229
    %v2231 = vstv %s2193
    %vm2232 = vcmp.le.s32.totalorder %v2190, %v2231
    %vm2233 = vmand %vm2230, %vm2232
    %v2234 = vsel %vm2233, 1, 0
    %s2235 = sld [smem:[#allocation4 + $0x80]]
    %s2236 = sld [smem:[#allocation4 + $0x81]]
    %s2237 = sld [smem:[#allocation4 + $0x82]]
    %s2238 = sld [smem:[#allocation4 + $0x83]]
    %v2239 = vstv %s2236
    %vm2240 = vcmp.ge.s32.totalorder %v2181, %v2239
    %vm2241 = vcmp.ge.s32.totalorder %v2182, %v2239
    %vm2242 = vcmp.ge.s32.totalorder %v2183, %v2239
    %vm2243 = vcmp.ge.s32.totalorder %v2184, %v2239
    %vm2244 = vcmp.ge.s32.totalorder %v2185, %v2239
    %vm2245 = vcmp.ge.s32.totalorder %v2186, %v2239
    %vm2246 = vcmp.ge.s32.totalorder %v2187, %v2239
    %vm2247 = vcmp.ge.s32.totalorder %v2188, %v2239
    %v2248 = vstv %s2238
    %vm2249 = vcmp.le.s32.totalorder %v2181, %v2248
    %vm2250 = vcmp.le.s32.totalorder %v2182, %v2248
    %vm2251 = vcmp.le.s32.totalorder %v2183, %v2248
    %vm2252 = vcmp.le.s32.totalorder %v2184, %v2248
    %vm2253 = vcmp.le.s32.totalorder %v2185, %v2248
    %vm2254 = vcmp.le.s32.totalorder %v2186, %v2248
    %vm2255 = vcmp.le.s32.totalorder %v2187, %v2248
    %vm2256 = vcmp.le.s32.totalorder %v2188, %v2248
    %vm2257 = vmand %vm2240, %vm2249
    %vm2258 = vmand %vm2241, %vm2250
    %vm2259 = vmand %vm2242, %vm2251
    %vm2260 = vmand %vm2243, %vm2252
    %vm2261 = vmand %vm2244, %vm2253
    %vm2262 = vmand %vm2245, %vm2254
    %vm2263 = vmand %vm2246, %vm2255
    %vm2264 = vmand %vm2247, %vm2256
    %v2265 = vsel %vm2257, 2, 0
    %v2266 = vsel %vm2258, 2, 0
    %v2267 = vsel %vm2259, 2, 0
    %v2268 = vsel %vm2260, 2, 0
    %v2269 = vsel %vm2261, 2, 0
    %v2270 = vsel %vm2262, 2, 0
    %v2271 = vsel %vm2263, 2, 0
    %v2272 = vsel %vm2264, 2, 0
    %v2273 = vor.u32 %v2221, %v2265
    %v2274 = vor.u32 %v2222, %v2266
    %v2275 = vor.u32 %v2223, %v2267
    %v2276 = vor.u32 %v2224, %v2268
    %v2277 = vor.u32 %v2225, %v2269
    %v2278 = vor.u32 %v2226, %v2270
    %v2279 = vor.u32 %v2227, %v2271
    %v2280 = vor.u32 %v2228, %v2272
    %v2281 = vstv %s2235
    %vm2282 = vcmp.ge.s32.totalorder %v2190, %v2281
    %v2283 = vstv %s2237
    %vm2284 = vcmp.le.s32.totalorder %v2190, %v2283
    %vm2285 = vmand %vm2282, %vm2284
    %v2286 = vsel %vm2285, 2, 0
    %v2287 = vor.u32 %v2234, %v2286
    %s2288 = sld [smem:[#allocation4 + $0x100]]
    %s2289 = sld [smem:[#allocation4 + $0x101]]
    %s2290 = sld [smem:[#allocation4 + $0x102]]
    %s2291 = sld [smem:[#allocation4 + $0x103]]
    %v2292 = vstv %s2289
    %vm2293 = vcmp.ge.s32.totalorder %v2181, %v2292
    %vm2294 = vcmp.ge.s32.totalorder %v2182, %v2292
    %vm2295 = vcmp.ge.s32.totalorder %v2183, %v2292
    %vm2296 = vcmp.ge.s32.totalorder %v2184, %v2292
    %vm2297 = vcmp.ge.s32.totalorder %v2185, %v2292
    %vm2298 = vcmp.ge.s32.totalorder %v2186, %v2292
    %vm2299 = vcmp.ge.s32.totalorder %v2187, %v2292
    %vm2300 = vcmp.ge.s32.totalorder %v2188, %v2292
    %v2301 = vstv %s2291
    %vm2302 = vcmp.le.s32.totalorder %v2181, %v2301
    %vm2303 = vcmp.le.s32.totalorder %v2182, %v2301
    %vm2304 = vcmp.le.s32.totalorder %v2183, %v2301
    %vm2305 = vcmp.le.s32.totalorder %v2184, %v2301
    %vm2306 = vcmp.le.s32.totalorder %v2185, %v2301
    %vm2307 = vcmp.le.s32.totalorder %v2186, %v2301
    %vm2308 = vcmp.le.s32.totalorder %v2187, %v2301
    %vm2309 = vcmp.le.s32.totalorder %v2188, %v2301
    %vm2310 = vmand %vm2293, %vm2302
    %vm2311 = vmand %vm2294, %vm2303
    %vm2312 = vmand %vm2295, %vm2304
    %vm2313 = vmand %vm2296, %vm2305
    %vm2314 = vmand %vm2297, %vm2306
    %vm2315 = vmand %vm2298, %vm2307
    %vm2316 = vmand %vm2299, %vm2308
    %vm2317 = vmand %vm2300, %vm2309
    %v2318 = vsel %vm2310, 4, 0
    %v2319 = vsel %vm2311, 4, 0
    %v2320 = vsel %vm2312, 4, 0
    %v2321 = vsel %vm2313, 4, 0
    %v2322 = vsel %vm2314, 4, 0
    %v2323 = vsel %vm2315, 4, 0
    %v2324 = vsel %vm2316, 4, 0
    %v2325 = vsel %vm2317, 4, 0
    %v2326 = vor.u32 %v2273, %v2318
    %v2327 = vor.u32 %v2274, %v2319
    %v2328 = vor.u32 %v2275, %v2320
    %v2329 = vor.u32 %v2276, %v2321
    %v2330 = vor.u32 %v2277, %v2322
    %v2331 = vor.u32 %v2278, %v2323
    %v2332 = vor.u32 %v2279, %v2324
    %v2333 = vor.u32 %v2280, %v2325
    %v2334 = vstv %s2288
    %vm2335 = vcmp.ge.s32.totalorder %v2190, %v2334
    %v2336 = vstv %s2290
    %vm2337 = vcmp.le.s32.totalorder %v2190, %v2336
    %vm2338 = vmand %vm2335, %vm2337
    %v2339 = vsel %vm2338, 4, 0
    %v2340 = vor.u32 %v2287, %v2339
    %s2341 = sld [smem:[#allocation4 + $0x180]]
    %s2342 = sld [smem:[#allocation4 + $0x181]]
    %s2343 = sld [smem:[#allocation4 + $0x182]]
    %s2344 = sld [smem:[#allocation4 + $0x183]]
    %v2345 = vstv %s2342
    %vm2346 = vcmp.ge.s32.totalorder %v2181, %v2345
    %vm2347 = vcmp.ge.s32.totalorder %v2182, %v2345
    %vm2348 = vcmp.ge.s32.totalorder %v2183, %v2345
    %vm2349 = vcmp.ge.s32.totalorder %v2184, %v2345
    %vm2350 = vcmp.ge.s32.totalorder %v2185, %v2345
    %vm2351 = vcmp.ge.s32.totalorder %v2186, %v2345
    %vm2352 = vcmp.ge.s32.totalorder %v2187, %v2345
    %vm2353 = vcmp.ge.s32.totalorder %v2188, %v2345
    %v2354 = vstv %s2344
    %vm2355 = vcmp.le.s32.totalorder %v2181, %v2354
    %vm2356 = vcmp.le.s32.totalorder %v2182, %v2354
    %vm2357 = vcmp.le.s32.totalorder %v2183, %v2354
    %vm2358 = vcmp.le.s32.totalorder %v2184, %v2354
    %vm2359 = vcmp.le.s32.totalorder %v2185, %v2354
    %vm2360 = vcmp.le.s32.totalorder %v2186, %v2354
    %vm2361 = vcmp.le.s32.totalorder %v2187, %v2354
    %vm2362 = vcmp.le.s32.totalorder %v2188, %v2354
    %vm2363 = vmand %vm2346, %vm2355
    %vm2364 = vmand %vm2347, %vm2356
    %vm2365 = vmand %vm2348, %vm2357
    %vm2366 = vmand %vm2349, %vm2358
    %vm2367 = vmand %vm2350, %vm2359
    %vm2368 = vmand %vm2351, %vm2360
    %vm2369 = vmand %vm2352, %vm2361
    %vm2370 = vmand %vm2353, %vm2362
    %v2371 = vsel %vm2363, 8, 0
    %v2372 = vsel %vm2364, 8, 0
    %v2373 = vsel %vm2365, 8, 0
    %v2374 = vsel %vm2366, 8, 0
    %v2375 = vsel %vm2367, 8, 0
    %v2376 = vsel %vm2368, 8, 0
    %v2377 = vsel %vm2369, 8, 0
    %v2378 = vsel %vm2370, 8, 0
    %v2379 = vor.u32 %v2326, %v2371
    %v2380 = vor.u32 %v2327, %v2372
    %v2381 = vor.u32 %v2328, %v2373
    %v2382 = vor.u32 %v2329, %v2374
    %v2383 = vor.u32 %v2330, %v2375
    %v2384 = vor.u32 %v2331, %v2376
    %v2385 = vor.u32 %v2332, %v2377
    %v2386 = vor.u32 %v2333, %v2378
    %v2387 = vstv %s2341
    %vm2388 = vcmp.ge.s32.totalorder %v2190, %v2387
    %v2389 = vstv %s2343
    %vm2390 = vcmp.le.s32.totalorder %v2190, %v2389
    %vm2391 = vmand %vm2388, %vm2390
    %v2392 = vsel %vm2391, 8, 0
    %v2393 = vor.u32 %v2340, %v2392
    %s2394 = sld [smem:[#allocation4 + $0x200]]
    %s2395 = sld [smem:[#allocation4 + $0x201]]
    %s2396 = sld [smem:[#allocation4 + $0x202]]
    %s2397 = sld [smem:[#allocation4 + $0x203]]
    %v2398 = vstv %s2395
    %vm2399 = vcmp.ge.s32.totalorder %v2181, %v2398
    %vm2400 = vcmp.ge.s32.totalorder %v2182, %v2398
    %vm2401 = vcmp.ge.s32.totalorder %v2183, %v2398
    %vm2402 = vcmp.ge.s32.totalorder %v2184, %v2398
    %vm2403 = vcmp.ge.s32.totalorder %v2185, %v2398
    %vm2404 = vcmp.ge.s32.totalorder %v2186, %v2398
    %vm2405 = vcmp.ge.s32.totalorder %v2187, %v2398
    %vm2406 = vcmp.ge.s32.totalorder %v2188, %v2398
    %v2407 = vstv %s2397
    %vm2408 = vcmp.le.s32.totalorder %v2181, %v2407
    %vm2409 = vcmp.le.s32.totalorder %v2182, %v2407
    %vm2410 = vcmp.le.s32.totalorder %v2183, %v2407
    %vm2411 = vcmp.le.s32.totalorder %v2184, %v2407
    %vm2412 = vcmp.le.s32.totalorder %v2185, %v2407
    %vm2413 = vcmp.le.s32.totalorder %v2186, %v2407
    %vm2414 = vcmp.le.s32.totalorder %v2187, %v2407
    %vm2415 = vcmp.le.s32.totalorder %v2188, %v2407
    %vm2416 = vmand %vm2399, %vm2408
    %vm2417 = vmand %vm2400, %vm2409
    %vm2418 = vmand %vm2401, %vm2410
    %vm2419 = vmand %vm2402, %vm2411
    %vm2420 = vmand %vm2403, %vm2412
    %vm2421 = vmand %vm2404, %vm2413
    %vm2422 = vmand %vm2405, %vm2414
    %vm2423 = vmand %vm2406, %vm2415
    %v2424 = vsel %vm2416, 16, 0
    %v2425 = vsel %vm2417, 16, 0
    %v2426 = vsel %vm2418, 16, 0
    %v2427 = vsel %vm2419, 16, 0
    %v2428 = vsel %vm2420, 16, 0
    %v2429 = vsel %vm2421, 16, 0
    %v2430 = vsel %vm2422, 16, 0
    %v2431 = vsel %vm2423, 16, 0
    %v2432 = vor.u32 %v2379, %v2424
    %v2433 = vor.u32 %v2380, %v2425
    %v2434 = vor.u32 %v2381, %v2426
    %v2435 = vor.u32 %v2382, %v2427
    %v2436 = vor.u32 %v2383, %v2428
    %v2437 = vor.u32 %v2384, %v2429
    %v2438 = vor.u32 %v2385, %v2430
    %v2439 = vor.u32 %v2386, %v2431
    %v2440 = vstv %s2394
    %vm2441 = vcmp.ge.s32.totalorder %v2190, %v2440
    %v2442 = vstv %s2396
    %vm2443 = vcmp.le.s32.totalorder %v2190, %v2442
    %vm2444 = vmand %vm2441, %vm2443
    %v2445 = vsel %vm2444, 16, 0
    %v2446 = vor.u32 %v2393, %v2445
    %s2447 = sld [smem:[#allocation4 + $0x280]]
    %s2448 = sld [smem:[#allocation4 + $0x281]]
    %s2449 = sld [smem:[#allocation4 + $0x282]]
    %s2450 = sld [smem:[#allocation4 + $0x283]]
    %v2451 = vstv %s2448
    %vm2452 = vcmp.ge.s32.totalorder %v2181, %v2451
    %vm2453 = vcmp.ge.s32.totalorder %v2182, %v2451
    %vm2454 = vcmp.ge.s32.totalorder %v2183, %v2451
    %vm2455 = vcmp.ge.s32.totalorder %v2184, %v2451
    %vm2456 = vcmp.ge.s32.totalorder %v2185, %v2451
    %vm2457 = vcmp.ge.s32.totalorder %v2186, %v2451
    %vm2458 = vcmp.ge.s32.totalorder %v2187, %v2451
    %vm2459 = vcmp.ge.s32.totalorder %v2188, %v2451
    %v2460 = vstv %s2450
    %vm2461 = vcmp.le.s32.totalorder %v2181, %v2460
    %vm2462 = vcmp.le.s32.totalorder %v2182, %v2460
    %vm2463 = vcmp.le.s32.totalorder %v2183, %v2460
    %vm2464 = vcmp.le.s32.totalorder %v2184, %v2460
    %vm2465 = vcmp.le.s32.totalorder %v2185, %v2460
    %vm2466 = vcmp.le.s32.totalorder %v2186, %v2460
    %vm2467 = vcmp.le.s32.totalorder %v2187, %v2460
    %vm2468 = vcmp.le.s32.totalorder %v2188, %v2460
    %vm2469 = vmand %vm2452, %vm2461
    %vm2470 = vmand %vm2453, %vm2462
    %vm2471 = vmand %vm2454, %vm2463
    %vm2472 = vmand %vm2455, %vm2464
    %vm2473 = vmand %vm2456, %vm2465
    %vm2474 = vmand %vm2457, %vm2466
    %vm2475 = vmand %vm2458, %vm2467
    %vm2476 = vmand %vm2459, %vm2468
    %v2477 = vsel %vm2469, 32, 0
    %v2478 = vsel %vm2470, 32, 0
    %v2479 = vsel %vm2471, 32, 0
    %v2480 = vsel %vm2472, 32, 0
    %v2481 = vsel %vm2473, 32, 0
    %v2482 = vsel %vm2474, 32, 0
    %v2483 = vsel %vm2475, 32, 0
    %v2484 = vsel %vm2476, 32, 0
    %v2485 = vor.u32 %v2432, %v2477
    %v2486 = vor.u32 %v2433, %v2478
    %v2487 = vor.u32 %v2434, %v2479
    %v2488 = vor.u32 %v2435, %v2480
    %v2489 = vor.u32 %v2436, %v2481
    %v2490 = vor.u32 %v2437, %v2482
    %v2491 = vor.u32 %v2438, %v2483
    %v2492 = vor.u32 %v2439, %v2484
    %v2493 = vstv %s2447
    %vm2494 = vcmp.ge.s32.totalorder %v2190, %v2493
    %v2495 = vstv %s2449
    %vm2496 = vcmp.le.s32.totalorder %v2190, %v2495
    %vm2497 = vmand %vm2494, %vm2496
    %v2498 = vsel %vm2497, 32, 0
    %v2499 = vor.u32 %v2446, %v2498
    %s2500 = sld [smem:[#allocation4 + $0x300]]
    %s2501 = sld [smem:[#allocation4 + $0x301]]
    %s2502 = sld [smem:[#allocation4 + $0x302]]
    %s2503 = sld [smem:[#allocation4 + $0x303]]
    %v2504 = vstv %s2501
    %vm2505 = vcmp.ge.s32.totalorder %v2181, %v2504
    %vm2506 = vcmp.ge.s32.totalorder %v2182, %v2504
    %vm2507 = vcmp.ge.s32.totalorder %v2183, %v2504
    %vm2508 = vcmp.ge.s32.totalorder %v2184, %v2504
    %vm2509 = vcmp.ge.s32.totalorder %v2185, %v2504
    %vm2510 = vcmp.ge.s32.totalorder %v2186, %v2504
    %vm2511 = vcmp.ge.s32.totalorder %v2187, %v2504
    %vm2512 = vcmp.ge.s32.totalorder %v2188, %v2504
    %v2513 = vstv %s2503
    %vm2514 = vcmp.le.s32.totalorder %v2181, %v2513
    %vm2515 = vcmp.le.s32.totalorder %v2182, %v2513
    %vm2516 = vcmp.le.s32.totalorder %v2183, %v2513
    %vm2517 = vcmp.le.s32.totalorder %v2184, %v2513
    %vm2518 = vcmp.le.s32.totalorder %v2185, %v2513
    %vm2519 = vcmp.le.s32.totalorder %v2186, %v2513
    %vm2520 = vcmp.le.s32.totalorder %v2187, %v2513
    %vm2521 = vcmp.le.s32.totalorder %v2188, %v2513
    %vm2522 = vmand %vm2505, %vm2514
    %vm2523 = vmand %vm2506, %vm2515
    %vm2524 = vmand %vm2507, %vm2516
    %vm2525 = vmand %vm2508, %vm2517
    %vm2526 = vmand %vm2509, %vm2518
    %vm2527 = vmand %vm2510, %vm2519
    %vm2528 = vmand %vm2511, %vm2520
    %vm2529 = vmand %vm2512, %vm2521
    %v2530 = vsel %vm2522, 64, 0
    %v2531 = vsel %vm2523, 64, 0
    %v2532 = vsel %vm2524, 64, 0
    %v2533 = vsel %vm2525, 64, 0
    %v2534 = vsel %vm2526, 64, 0
    %v2535 = vsel %vm2527, 64, 0
    %v2536 = vsel %vm2528, 64, 0
    %v2537 = vsel %vm2529, 64, 0
    %v2538 = vor.u32 %v2485, %v2530
    %v2539 = vor.u32 %v2486, %v2531
    %v2540 = vor.u32 %v2487, %v2532
    %v2541 = vor.u32 %v2488, %v2533
    %v2542 = vor.u32 %v2489, %v2534
    %v2543 = vor.u32 %v2490, %v2535
    %v2544 = vor.u32 %v2491, %v2536
    %v2545 = vor.u32 %v2492, %v2537
    %v2546 = vstv %s2500
    %vm2547 = vcmp.ge.s32.totalorder %v2190, %v2546
    %v2548 = vstv %s2502
    %vm2549 = vcmp.le.s32.totalorder %v2190, %v2548
    %vm2550 = vmand %vm2547, %vm2549
    %v2551 = vsel %vm2550, 64, 0
    %v2552 = vor.u32 %v2499, %v2551
    %s2553 = sld [smem:[#allocation4 + $0x380]]
    %s2554 = sld [smem:[#allocation4 + $0x381]]
    %s2555 = sld [smem:[#allocation4 + $0x382]]
    %s2556 = sld [smem:[#allocation4 + $0x383]]
    %v2557 = vstv %s2554
    %vm2558 = vcmp.ge.s32.totalorder %v2181, %v2557
    %vm2559 = vcmp.ge.s32.totalorder %v2182, %v2557
    %vm2560 = vcmp.ge.s32.totalorder %v2183, %v2557
    %vm2561 = vcmp.ge.s32.totalorder %v2184, %v2557
    %vm2562 = vcmp.ge.s32.totalorder %v2185, %v2557
    %vm2563 = vcmp.ge.s32.totalorder %v2186, %v2557
    %vm2564 = vcmp.ge.s32.totalorder %v2187, %v2557
    %vm2565 = vcmp.ge.s32.totalorder %v2188, %v2557
    %v2566 = vstv %s2556
    %vm2567 = vcmp.le.s32.totalorder %v2181, %v2566
    %vm2568 = vcmp.le.s32.totalorder %v2182, %v2566
    %vm2569 = vcmp.le.s32.totalorder %v2183, %v2566
    %vm2570 = vcmp.le.s32.totalorder %v2184, %v2566
    %vm2571 = vcmp.le.s32.totalorder %v2185, %v2566
    %vm2572 = vcmp.le.s32.totalorder %v2186, %v2566
    %vm2573 = vcmp.le.s32.totalorder %v2187, %v2566
    %vm2574 = vcmp.le.s32.totalorder %v2188, %v2566
    %vm2575 = vmand %vm2558, %vm2567
    %vm2576 = vmand %vm2559, %vm2568
    %vm2577 = vmand %vm2560, %vm2569
    %vm2578 = vmand %vm2561, %vm2570
    %vm2579 = vmand %vm2562, %vm2571
    %vm2580 = vmand %vm2563, %vm2572
    %vm2581 = vmand %vm2564, %vm2573
    %vm2582 = vmand %vm2565, %vm2574
    %v2583 = vsel %vm2575, 128, 0
    %v2584 = vsel %vm2576, 128, 0
    %v2585 = vsel %vm2577, 128, 0
    %v2586 = vsel %vm2578, 128, 0
    %v2587 = vsel %vm2579, 128, 0
    %v2588 = vsel %vm2580, 128, 0
    %v2589 = vsel %vm2581, 128, 0
    %v2590 = vsel %vm2582, 128, 0
    %v2591 = vor.u32 %v2538, %v2583
    %v2592 = vor.u32 %v2539, %v2584
    %v2593 = vor.u32 %v2540, %v2585
    %v2594 = vor.u32 %v2541, %v2586
    %v2595 = vor.u32 %v2542, %v2587
    %v2596 = vor.u32 %v2543, %v2588
    %v2597 = vor.u32 %v2544, %v2589
    %v2598 = vor.u32 %v2545, %v2590
    %v2599 = vstv %s2553
    %vm2600 = vcmp.ge.s32.totalorder %v2190, %v2599
    %v2601 = vstv %s2555
    %vm2602 = vcmp.le.s32.totalorder %v2190, %v2601
    %vm2603 = vmand %vm2600, %vm2602
    %v2604 = vsel %vm2603, 128, 0
    %v2605 = vor.u32 %v2552, %v2604
    %v2606 = vand.u32 %v2591, %v2605
    %v2607 = vand.u32 %v2592, %v2605
    %v2608 = vand.u32 %v2593, %v2605
    %v2609 = vand.u32 %v2594, %v2605
    %v2610 = vand.u32 %v2595, %v2605
    %v2611 = vand.u32 %v2596, %v2605
    %v2612 = vand.u32 %v2597, %v2605
    %v2613 = vand.u32 %v2598, %v2605
    %vm2614 = vcmp.ne.s32.totalorder %v2606, 0
    %vm2615 = vcmp.ne.s32.totalorder %v2607, 0
    %vm2616 = vcmp.ne.s32.totalorder %v2608, 0
    %vm2617 = vcmp.ne.s32.totalorder %v2609, 0
    %vm2618 = vcmp.ne.s32.totalorder %v2610, 0
    %vm2619 = vcmp.ne.s32.totalorder %v2611, 0
    %vm2620 = vcmp.ne.s32.totalorder %v2612, 0
    %vm2621 = vcmp.ne.s32.totalorder %v2613, 0
    %vm2622 = vcmp.gt.f32.partialorder %v1940, 0.07058824
    %vm2623 = vcmp.gt.f32.partialorder %v1941, 0.07058824
    %vm2624 = vcmp.gt.f32.partialorder %v1942, 0.07058824
    %vm2625 = vcmp.gt.f32.partialorder %v1943, 0.07058824
    %vm2626 = vcmp.gt.f32.partialorder %v1944, 0.07058824
    %vm2627 = vcmp.gt.f32.partialorder %v1945, 0.07058824
    %vm2628 = vcmp.gt.f32.partialorder %v1946, 0.07058824
    %vm2629 = vcmp.gt.f32.partialorder %v1947, 0.07058824
    %vm2630 = vmxor %vm2614, 1
    %vm2631 = vmxor %vm2615, 1
    %vm2632 = vmxor %vm2616, 1
    %vm2633 = vmxor %vm2617, 1
    %vm2634 = vmxor %vm2618, 1
    %vm2635 = vmxor %vm2619, 1
    %vm2636 = vmxor %vm2620, 1
    %vm2637 = vmxor %vm2621, 1
    %v2638 = vsel %vm2630, 1, 0
    %v2639 = vsel %vm2631, 1, 0
    %v2640 = vsel %vm2632, 1, 0
    %v2641 = vsel %vm2633, 1, 0
    %v2642 = vsel %vm2634, 1, 0
    %v2643 = vsel %vm2635, 1, 0
    %v2644 = vsel %vm2636, 1, 0
    %v2645 = vsel %vm2637, 1, 0
    %2646 = vrot.lane.b32.xlu0 %v2638, 1
    %v2647 = vpop.permute.xlu0 %2646
    %2648 = vrot.lane.b32.xlu0 %v2639, 1
    %v2649 = vpop.permute.xlu0 %2648
    %2650 = vrot.lane.b32.xlu0 %v2640, 1
    %v2651 = vpop.permute.xlu0 %2650
    %2652 = vrot.lane.b32.xlu0 %v2641, 1
    %v2653 = vpop.permute.xlu0 %2652
    %2654 = vrot.lane.b32.xlu0 %v2642, 1
    %v2655 = vpop.permute.xlu0 %2654
    %2656 = vrot.lane.b32.xlu0 %v2643, 1
    %v2657 = vpop.permute.xlu0 %2656
    %2658 = vrot.lane.b32.xlu0 %v2644, 1
    %v2659 = vpop.permute.xlu0 %2658
    %2660 = vrot.lane.b32.xlu0 %v2645, 1
    %v2661 = vpop.permute.xlu0 %2660
    %vm2662 = vcmp.ne.s32.totalorder %v2647, 0
    %vm2663 = vcmp.ne.s32.totalorder %v2649, 0
    %vm2664 = vcmp.ne.s32.totalorder %v2651, 0
    %vm2665 = vcmp.ne.s32.totalorder %v2653, 0
    %vm2666 = vcmp.ne.s32.totalorder %v2655, 0
    %vm2667 = vcmp.ne.s32.totalorder %v2657, 0
    %vm2668 = vcmp.ne.s32.totalorder %v2659, 0
    %vm2669 = vcmp.ne.s32.totalorder %v2661, 0
    %vm2670 = vmand %vm2622, %vm2662
    %vm2671 = vmand %vm2623, %vm2663
    %vm2672 = vmand %vm2624, %vm2664
    %vm2673 = vmand %vm2625, %vm2665
    %vm2674 = vmand %vm2626, %vm2666
    %vm2675 = vmand %vm2627, %vm2667
    %vm2676 = vmand %vm2628, %vm2668
    %vm2677 = vmand %vm2629, %vm2669
    %v2678 = vsel %vm2670, 1, 0
    %v2679 = vsel %vm2671, 1, 0
    %v2680 = vsel %vm2672, 1, 0
    %v2681 = vsel %vm2673, 1, 0
    %v2682 = vsel %vm2674, 1, 0
    %v2683 = vsel %vm2675, 1, 0
    %v2684 = vsel %vm2676, 1, 0
    %v2685 = vsel %vm2677, 1, 0
    %2686 = vrot.lane.b32.xlu0 %v2678, 127
    %v2687 = vpop.permute.xlu0 %2686
    %2688 = vrot.lane.b32.xlu0 %v2679, 127
    %v2689 = vpop.permute.xlu0 %2688
    %2690 = vrot.lane.b32.xlu0 %v2680, 127
    %v2691 = vpop.permute.xlu0 %2690
    %2692 = vrot.lane.b32.xlu0 %v2681, 127
    %v2693 = vpop.permute.xlu0 %2692
    %2694 = vrot.lane.b32.xlu0 %v2682, 127
    %v2695 = vpop.permute.xlu0 %2694
    %2696 = vrot.lane.b32.xlu0 %v2683, 127
    %v2697 = vpop.permute.xlu0 %2696
    %2698 = vrot.lane.b32.xlu0 %v2684, 127
    %v2699 = vpop.permute.xlu0 %2698
    %2700 = vrot.lane.b32.xlu0 %v2685, 127
    %v2701 = vpop.permute.xlu0 %2700
    %vm2702 = vcmask 523264
    %2703 = vst.msk [vmem:[#allocation5] sm:$0xff] %vm2702, %v2687
    %2704 = vst.msk [vmem:[#allocation5 + $0x8] sm:$0xff] %vm2702, %v2689
    %2705 = vst.msk [vmem:[#allocation5 + $0x10] sm:$0xff] %vm2702, %v2691
    %2706 = vst.msk [vmem:[#allocation5 + $0x18] sm:$0xff] %vm2702, %v2693
    %2707 = vst.msk [vmem:[#allocation5 + $0x20] sm:$0xff] %vm2702, %v2695
    %2708 = vst.msk [vmem:[#allocation5 + $0x28] sm:$0xff] %vm2702, %v2697
    %2709 = vst.msk [vmem:[#allocation5 + $0x30] sm:$0xff] %vm2702, %v2699
    %2710 = vst.msk [vmem:[#allocation5 + $0x38] sm:$0xff] %vm2702, %v2701
    %2711 = vrot.lane.b32.xlu0 %v2190, 1
    %v2712 = vpop.permute.xlu0 %2711
    %v2713 = vsel %vm2670, %v2712, 1000000
    %v2714 = vsel %vm2671, %v2712, 1000000
    %v2715 = vsel %vm2672, %v2712, 1000000
    %v2716 = vsel %vm2673, %v2712, 1000000
    %v2717 = vsel %vm2674, %v2712, 1000000
    %v2718 = vsel %vm2675, %v2712, 1000000
    %v2719 = vsel %vm2676, %v2712, 1000000
    %v2720 = vsel %vm2677, %v2712, 1000000
    %vm2721 = vcmask 531464
    %v2722 = vsel %vm2721, %v2713, 2147483647
    %v2723 = vsel %vm2721, %v2714, 2147483647
    %v2724 = vsel %vm2721, %v2715, 2147483647
    %v2725 = vsel %vm2721, %v2716, 2147483647
    %v2726 = vsel %vm2721, %v2717, 2147483647
    %vm2727 = vcmp.lt.s32.totalorder %v2722, %v2726
    %v2728 = vsel %vm2727, %v2722, %v2726
    %v2729 = vsel %vm2721, %v2718, 2147483647
    %vm2730 = vcmp.lt.s32.totalorder %v2723, %v2729
    %v2731 = vsel %vm2730, %v2723, %v2729
    %v2732 = vsel %vm2721, %v2719, 2147483647
    %vm2733 = vcmp.lt.s32.totalorder %v2724, %v2732
    %v2734 = vsel %vm2733, %v2724, %v2732
    %v2735 = vsel %vm2721, %v2720, 2147483647
    %vm2736 = vcmp.lt.s32.totalorder %v2725, %v2735
    %v2737 = vsel %vm2736, %v2725, %v2735
    %vm2738 = vcmp.lt.s32.totalorder %v2728, %v2731
    %v2739 = vsel %vm2738, %v2728, %v2731
    %vm2740 = vcmp.lt.s32.totalorder %v2734, %v2737
    %v2741 = vsel %vm2740, %v2734, %v2737
    %vm2742 = vcmp.lt.s32.totalorder %v2739, %v2741
    %v2743 = vsel %vm2742, %v2739, %v2741
    %v2744 = vand.u32 %v2743, 65535
    %v2745 = vshra.s32 %v2743, 16
    %v2746 = vcvt.s32.f32 %v2744
    %v2747 = vcvt.s32.f32 %v2745
    %2748 = vmin.xlane.f32.xlu0 %v2747
    %v2749 = vpop.xlane.xlu0 %2748
    %vm2750 = vcmp.eq.f32.partialorder %v2747, %v2749
    %v2751 = vsel %vm2750, %v2746, inf
    %2752 = vmin.xlane.f32.xlu0 %v2751
    %v2753 = vpop.xlane.xlu0 %2752
    %v2754 = vcvt.f32.s32 %v2753
    %v2755 = vcvt.f32.s32 %v2749
    %v2756 = vshll.u32 %v2755, 16
    %v2757 = vadd.s32 %v2756, %v2754
    %v2758 = vrot.slane %v2757, 4
    %vm2759 = vcmp.lt.s32.totalorder %v2757, %v2758
    %v2760 = vsel %vm2759, %v2757, %v2758
    %v2761 = vrot.slane %v2760, 2
    %vm2762 = vcmp.lt.s32.totalorder %v2760, %v2761
    %v2763 = vsel %vm2762, %v2760, %v2761
    %v2764 = vrot.slane %v2763, 1
    %vm2765 = vcmp.lt.s32.totalorder %v2763, %v2764
    %v2766 = vsel %vm2765, %v2763, %v2764
    %s2767 = vtos %v2766
    %s2768 = scalar_lea.smem [#allocation8], 0
    %2769 = sst [smem:[%s2768]] %s2767
    %v2770 = vsel %vm2670, %v2181, 1000000
    %v2771 = vsel %vm2671, %v2182, 1000000
    %v2772 = vsel %vm2672, %v2183, 1000000
    %v2773 = vsel %vm2673, %v2184, 1000000
    %v2774 = vsel %vm2674, %v2185, 1000000
    %v2775 = vsel %vm2675, %v2186, 1000000
    %v2776 = vsel %vm2676, %v2187, 1000000
    %v2777 = vsel %vm2677, %v2188, 1000000
    %v2778 = vsel %vm2721, %v2770, 2147483647
    %v2779 = vsel %vm2721, %v2771, 2147483647
    %v2780 = vsel %vm2721, %v2772, 2147483647
    %v2781 = vsel %vm2721, %v2773, 2147483647
    %v2782 = vsel %vm2721, %v2774, 2147483647
    %vm2783 = vcmp.lt.s32.totalorder %v2778, %v2782
    %v2784 = vsel %vm2783, %v2778, %v2782
    %v2785 = vsel %vm2721, %v2775, 2147483647
    %vm2786 = vcmp.lt.s32.totalorder %v2779, %v2785
    %v2787 = vsel %vm2786, %v2779, %v2785
    %v2788 = vsel %vm2721, %v2776, 2147483647
    %vm2789 = vcmp.lt.s32.totalorder %v2780, %v2788
    %v2790 = vsel %vm2789, %v2780, %v2788
    %v2791 = vsel %vm2721, %v2777, 2147483647
    %vm2792 = vcmp.lt.s32.totalorder %v2781, %v2791
    %v2793 = vsel %vm2792, %v2781, %v2791
    %vm2794 = vcmp.lt.s32.totalorder %v2784, %v2787
    %v2795 = vsel %vm2794, %v2784, %v2787
    %vm2796 = vcmp.lt.s32.totalorder %v2790, %v2793
    %v2797 = vsel %vm2796, %v2790, %v2793
    %vm2798 = vcmp.lt.s32.totalorder %v2795, %v2797
    %v2799 = vsel %vm2798, %v2795, %v2797
    %v2800 = vand.u32 %v2799, 65535
    %v2801 = vshra.s32 %v2799, 16
    %v2802 = vcvt.s32.f32 %v2800
    %v2803 = vcvt.s32.f32 %v2801
    %2804 = vmin.xlane.f32.xlu0 %v2803
    %v2805 = vpop.xlane.xlu0 %2804
    %vm2806 = vcmp.eq.f32.partialorder %v2803, %v2805
    %v2807 = vsel %vm2806, %v2802, inf
    %2808 = vmin.xlane.f32.xlu0 %v2807
    %v2809 = vpop.xlane.xlu0 %2808
    %v2810 = vcvt.f32.s32 %v2809
    %v2811 = vcvt.f32.s32 %v2805
    %v2812 = vshll.u32 %v2811, 16
    %v2813 = vadd.s32 %v2812, %v2810
    %v2814 = vrot.slane %v2813, 4
    %vm2815 = vcmp.lt.s32.totalorder %v2813, %v2814
    %v2816 = vsel %vm2815, %v2813, %v2814
    %v2817 = vrot.slane %v2816, 2
    %vm2818 = vcmp.lt.s32.totalorder %v2816, %v2817
    %v2819 = vsel %vm2818, %v2816, %v2817
    %v2820 = vrot.slane %v2819, 1
    %vm2821 = vcmp.lt.s32.totalorder %v2819, %v2820
    %v2822 = vsel %vm2821, %v2819, %v2820
    %s2823 = vtos %v2822
    %s2824 = scalar_lea.smem [#allocation8], 1
    %2825 = sst [smem:[%s2824]] %s2823
    %v2826 = vsel %vm2670, %v2712, 4293967296
    %v2827 = vsel %vm2671, %v2712, 4293967296
    %v2828 = vsel %vm2672, %v2712, 4293967296
    %v2829 = vsel %vm2673, %v2712, 4293967296
    %v2830 = vsel %vm2674, %v2712, 4293967296
    %v2831 = vsel %vm2675, %v2712, 4293967296
    %v2832 = vsel %vm2676, %v2712, 4293967296
    %v2833 = vsel %vm2677, %v2712, 4293967296
    %v2834 = vsel %vm2721, %v2826, 2147483648
    %v2835 = vsel %vm2721, %v2827, 2147483648
    %v2836 = vsel %vm2721, %v2828, 2147483648
    %v2837 = vsel %vm2721, %v2829, 2147483648
    %v2838 = vsel %vm2721, %v2830, 2147483648
    %vm2839 = vcmp.gt.s32.totalorder %v2834, %v2838
    %v2840 = vsel %vm2839, %v2834, %v2838
    %v2841 = vsel %vm2721, %v2831, 2147483648
    %vm2842 = vcmp.gt.s32.totalorder %v2835, %v2841
    %v2843 = vsel %vm2842, %v2835, %v2841
    %v2844 = vsel %vm2721, %v2832, 2147483648
    %vm2845 = vcmp.gt.s32.totalorder %v2836, %v2844
    %v2846 = vsel %vm2845, %v2836, %v2844
    %v2847 = vsel %vm2721, %v2833, 2147483648
    %vm2848 = vcmp.gt.s32.totalorder %v2837, %v2847
    %v2849 = vsel %vm2848, %v2837, %v2847
    %vm2850 = vcmp.gt.s32.totalorder %v2840, %v2843
    %v2851 = vsel %vm2850, %v2840, %v2843
    %vm2852 = vcmp.gt.s32.totalorder %v2846, %v2849
    %v2853 = vsel %vm2852, %v2846, %v2849
    %vm2854 = vcmp.gt.s32.totalorder %v2851, %v2853
    %v2855 = vsel %vm2854, %v2851, %v2853
    %v2856 = vand.u32 %v2855, 65535
    %v2857 = vshra.s32 %v2855, 16
    %v2858 = vcvt.s32.f32 %v2856
    %v2859 = vcvt.s32.f32 %v2857
    %2860 = vmax.xlane.f32.xlu0 %v2859
    %v2861 = vpop.xlane.xlu0 %2860
    %vm2862 = vcmp.eq.f32.partialorder %v2859, %v2861
    %v2863 = vsel %vm2862, %v2858, -inf
    %2864 = vmax.xlane.f32.xlu0 %v2863
    %v2865 = vpop.xlane.xlu0 %2864
    %v2866 = vcvt.f32.s32 %v2865
    %v2867 = vcvt.f32.s32 %v2861
    %v2868 = vshll.u32 %v2867, 16
    %v2869 = vadd.s32 %v2868, %v2866
    %v2870 = vrot.slane %v2869, 4
    %vm2871 = vcmp.gt.s32.totalorder %v2869, %v2870
    %v2872 = vsel %vm2871, %v2869, %v2870
    %v2873 = vrot.slane %v2872, 2
    %vm2874 = vcmp.gt.s32.totalorder %v2872, %v2873
    %v2875 = vsel %vm2874, %v2872, %v2873
    %v2876 = vrot.slane %v2875, 1
    %vm2877 = vcmp.gt.s32.totalorder %v2875, %v2876
    %v2878 = vsel %vm2877, %v2875, %v2876
    %s2879 = vtos %v2878
    %s2880 = scalar_lea.smem [#allocation8], 2
    %2881 = sst [smem:[%s2880]] %s2879
    %v2882 = vsel %vm2670, %v2181, 4293967296
    %v2883 = vsel %vm2671, %v2182, 4293967296
    %v2884 = vsel %vm2672, %v2183, 4293967296
    %v2885 = vsel %vm2673, %v2184, 4293967296
    %v2886 = vsel %vm2674, %v2185, 4293967296
    %v2887 = vsel %vm2675, %v2186, 4293967296
    %v2888 = vsel %vm2676, %v2187, 4293967296
    %v2889 = vsel %vm2677, %v2188, 4293967296
    %v2890 = vsel %vm2721, %v2882, 2147483648
    %v2891 = vsel %vm2721, %v2883, 2147483648
    %v2892 = vsel %vm2721, %v2884, 2147483648
    %v2893 = vsel %vm2721, %v2885, 2147483648
    %v2894 = vsel %vm2721, %v2886, 2147483648
    %vm2895 = vcmp.gt.s32.totalorder %v2890, %v2894
    %v2896 = vsel %vm2895, %v2890, %v2894
    %v2897 = vsel %vm2721, %v2887, 2147483648
    %vm2898 = vcmp.gt.s32.totalorder %v2891, %v2897
    %v2899 = vsel %vm2898, %v2891, %v2897
    %v2900 = vsel %vm2721, %v2888, 2147483648
    %vm2901 = vcmp.gt.s32.totalorder %v2892, %v2900
    %v2902 = vsel %vm2901, %v2892, %v2900
    %v2903 = vsel %vm2721, %v2889, 2147483648
    %vm2904 = vcmp.gt.s32.totalorder %v2893, %v2903
    %v2905 = vsel %vm2904, %v2893, %v2903
    %vm2906 = vcmp.gt.s32.totalorder %v2896, %v2899
    %v2907 = vsel %vm2906, %v2896, %v2899
    %vm2908 = vcmp.gt.s32.totalorder %v2902, %v2905
    %v2909 = vsel %vm2908, %v2902, %v2905
    %vm2910 = vcmp.gt.s32.totalorder %v2907, %v2909
    %v2911 = vsel %vm2910, %v2907, %v2909
    %v2912 = vand.u32 %v2911, 65535
    %v2913 = vshra.s32 %v2911, 16
    %v2914 = vcvt.s32.f32 %v2912
    %v2915 = vcvt.s32.f32 %v2913
    %2916 = vmax.xlane.f32.xlu0 %v2915
    %v2917 = vpop.xlane.xlu0 %2916
    %vm2918 = vcmp.eq.f32.partialorder %v2915, %v2917
    %v2919 = vsel %vm2918, %v2914, -inf
    %2920 = vmax.xlane.f32.xlu0 %v2919
    %v2921 = vpop.xlane.xlu0 %2920
    %v2922 = vcvt.f32.s32 %v2921
    %v2923 = vcvt.f32.s32 %v2917
    %v2924 = vshll.u32 %v2923, 16
    %v2925 = vadd.s32 %v2924, %v2922
    %v2926 = vrot.slane %v2925, 4
    %vm2927 = vcmp.gt.s32.totalorder %v2925, %v2926
    %v2928 = vsel %vm2927, %v2925, %v2926
    %v2929 = vrot.slane %v2928, 2
    %vm2930 = vcmp.gt.s32.totalorder %v2928, %v2929
    %v2931 = vsel %vm2930, %v2928, %v2929
    %v2932 = vrot.slane %v2931, 1
    %vm2933 = vcmp.gt.s32.totalorder %v2931, %v2932
    %v2934 = vsel %vm2933, %v2931, %v2932
    %s2935 = vtos %v2934
    %s2936 = scalar_lea.smem [#allocation8], 3
    %2937 = sst [smem:[%s2936]] %s2935
    %s2938 = sld [smem:[#allocation4 + $0x400]]
    %s2939 = sld [smem:[#allocation4 + $0x401]]
    %s2940 = sld [smem:[#allocation4 + $0x402]]
    %s2941 = sld [smem:[#allocation4 + $0x403]]
    %v2942 = vstv %s2939
    %vm2943 = vcmp.ge.s32.totalorder %v2181, %v2942
    %vm2944 = vcmp.ge.s32.totalorder %v2182, %v2942
    %vm2945 = vcmp.ge.s32.totalorder %v2183, %v2942
    %vm2946 = vcmp.ge.s32.totalorder %v2184, %v2942
    %vm2947 = vcmp.ge.s32.totalorder %v2185, %v2942
    %vm2948 = vcmp.ge.s32.totalorder %v2186, %v2942
    %vm2949 = vcmp.ge.s32.totalorder %v2187, %v2942
    %vm2950 = vcmp.ge.s32.totalorder %v2188, %v2942
    %v2951 = vstv %s2941
    %vm2952 = vcmp.le.s32.totalorder %v2181, %v2951
    %vm2953 = vcmp.le.s32.totalorder %v2182, %v2951
    %vm2954 = vcmp.le.s32.totalorder %v2183, %v2951
    %vm2955 = vcmp.le.s32.totalorder %v2184, %v2951
    %vm2956 = vcmp.le.s32.totalorder %v2185, %v2951
    %vm2957 = vcmp.le.s32.totalorder %v2186, %v2951
    %vm2958 = vcmp.le.s32.totalorder %v2187, %v2951
    %vm2959 = vcmp.le.s32.totalorder %v2188, %v2951
    %vm2960 = vmand %vm2943, %vm2952
    %vm2961 = vmand %vm2944, %vm2953
    %vm2962 = vmand %vm2945, %vm2954
    %vm2963 = vmand %vm2946, %vm2955
    %vm2964 = vmand %vm2947, %vm2956
    %vm2965 = vmand %vm2948, %vm2957
    %vm2966 = vmand %vm2949, %vm2958
    %vm2967 = vmand %vm2950, %vm2959
    %v2968 = vsel %vm2960, 1, 0
    %v2969 = vsel %vm2961, 1, 0
    %v2970 = vsel %vm2962, 1, 0
    %v2971 = vsel %vm2963, 1, 0
    %v2972 = vsel %vm2964, 1, 0
    %v2973 = vsel %vm2965, 1, 0
    %v2974 = vsel %vm2966, 1, 0
    %v2975 = vsel %vm2967, 1, 0
    %v2976 = vstv %s2938
    %vm2977 = vcmp.ge.s32.totalorder %v2190, %v2976
    %v2978 = vstv %s2940
    %vm2979 = vcmp.le.s32.totalorder %v2190, %v2978
    %vm2980 = vmand %vm2977, %vm2979
    %v2981 = vsel %vm2980, 1, 0
    %s2982 = sld [smem:[#allocation4 + $0x480]]
    %s2983 = sld [smem:[#allocation4 + $0x481]]
    %s2984 = sld [smem:[#allocation4 + $0x482]]
    %s2985 = sld [smem:[#allocation4 + $0x483]]
    %v2986 = vstv %s2983
    %vm2987 = vcmp.ge.s32.totalorder %v2181, %v2986
    %vm2988 = vcmp.ge.s32.totalorder %v2182, %v2986
    %vm2989 = vcmp.ge.s32.totalorder %v2183, %v2986
    %vm2990 = vcmp.ge.s32.totalorder %v2184, %v2986
    %vm2991 = vcmp.ge.s32.totalorder %v2185, %v2986
    %vm2992 = vcmp.ge.s32.totalorder %v2186, %v2986
    %vm2993 = vcmp.ge.s32.totalorder %v2187, %v2986
    %vm2994 = vcmp.ge.s32.totalorder %v2188, %v2986
    %v2995 = vstv %s2985
    %vm2996 = vcmp.le.s32.totalorder %v2181, %v2995
    %vm2997 = vcmp.le.s32.totalorder %v2182, %v2995
    %vm2998 = vcmp.le.s32.totalorder %v2183, %v2995
    %vm2999 = vcmp.le.s32.totalorder %v2184, %v2995
    %vm3000 = vcmp.le.s32.totalorder %v2185, %v2995
    %vm3001 = vcmp.le.s32.totalorder %v2186, %v2995
    %vm3002 = vcmp.le.s32.totalorder %v2187, %v2995
    %vm3003 = vcmp.le.s32.totalorder %v2188, %v2995
    %vm3004 = vmand %vm2987, %vm2996
    %vm3005 = vmand %vm2988, %vm2997
    %vm3006 = vmand %vm2989, %vm2998
    %vm3007 = vmand %vm2990, %vm2999
    %vm3008 = vmand %vm2991, %vm3000
    %vm3009 = vmand %vm2992, %vm3001
    %vm3010 = vmand %vm2993, %vm3002
    %vm3011 = vmand %vm2994, %vm3003
    %v3012 = vsel %vm3004, 2, 0
    %v3013 = vsel %vm3005, 2, 0
    %v3014 = vsel %vm3006, 2, 0
    %v3015 = vsel %vm3007, 2, 0
    %v3016 = vsel %vm3008, 2, 0
    %v3017 = vsel %vm3009, 2, 0
    %v3018 = vsel %vm3010, 2, 0
    %v3019 = vsel %vm3011, 2, 0
    %v3020 = vor.u32 %v2968, %v3012
    %v3021 = vor.u32 %v2969, %v3013
    %v3022 = vor.u32 %v2970, %v3014
    %v3023 = vor.u32 %v2971, %v3015
    %v3024 = vor.u32 %v2972, %v3016
    %v3025 = vor.u32 %v2973, %v3017
    %v3026 = vor.u32 %v2974, %v3018
    %v3027 = vor.u32 %v2975, %v3019
    %v3028 = vstv %s2982
    %vm3029 = vcmp.ge.s32.totalorder %v2190, %v3028
    %v3030 = vstv %s2984
    %vm3031 = vcmp.le.s32.totalorder %v2190, %v3030
    %vm3032 = vmand %vm3029, %vm3031
    %v3033 = vsel %vm3032, 2, 0
    %v3034 = vor.u32 %v2981, %v3033
    %s3035 = sld [smem:[#allocation4 + $0x500]]
    %s3036 = sld [smem:[#allocation4 + $0x501]]
    %s3037 = sld [smem:[#allocation4 + $0x502]]
    %s3038 = sld [smem:[#allocation4 + $0x503]]
    %v3039 = vstv %s3036
    %vm3040 = vcmp.ge.s32.totalorder %v2181, %v3039
    %vm3041 = vcmp.ge.s32.totalorder %v2182, %v3039
    %vm3042 = vcmp.ge.s32.totalorder %v2183, %v3039
    %vm3043 = vcmp.ge.s32.totalorder %v2184, %v3039
    %vm3044 = vcmp.ge.s32.totalorder %v2185, %v3039
    %vm3045 = vcmp.ge.s32.totalorder %v2186, %v3039
    %vm3046 = vcmp.ge.s32.totalorder %v2187, %v3039
    %vm3047 = vcmp.ge.s32.totalorder %v2188, %v3039
    %v3048 = vstv %s3038
    %vm3049 = vcmp.le.s32.totalorder %v2181, %v3048
    %vm3050 = vcmp.le.s32.totalorder %v2182, %v3048
    %vm3051 = vcmp.le.s32.totalorder %v2183, %v3048
    %vm3052 = vcmp.le.s32.totalorder %v2184, %v3048
    %vm3053 = vcmp.le.s32.totalorder %v2185, %v3048
    %vm3054 = vcmp.le.s32.totalorder %v2186, %v3048
    %vm3055 = vcmp.le.s32.totalorder %v2187, %v3048
    %vm3056 = vcmp.le.s32.totalorder %v2188, %v3048
    %vm3057 = vmand %vm3040, %vm3049
    %vm3058 = vmand %vm3041, %vm3050
    %vm3059 = vmand %vm3042, %vm3051
    %vm3060 = vmand %vm3043, %vm3052
    %vm3061 = vmand %vm3044, %vm3053
    %vm3062 = vmand %vm3045, %vm3054
    %vm3063 = vmand %vm3046, %vm3055
    %vm3064 = vmand %vm3047, %vm3056
    %v3065 = vsel %vm3057, 4, 0
    %v3066 = vsel %vm3058, 4, 0
    %v3067 = vsel %vm3059, 4, 0
    %v3068 = vsel %vm3060, 4, 0
    %v3069 = vsel %vm3061, 4, 0
    %v3070 = vsel %vm3062, 4, 0
    %v3071 = vsel %vm3063, 4, 0
    %v3072 = vsel %vm3064, 4, 0
    %v3073 = vor.u32 %v3020, %v3065
    %v3074 = vor.u32 %v3021, %v3066
    %v3075 = vor.u32 %v3022, %v3067
    %v3076 = vor.u32 %v3023, %v3068
    %v3077 = vor.u32 %v3024, %v3069
    %v3078 = vor.u32 %v3025, %v3070
    %v3079 = vor.u32 %v3026, %v3071
    %v3080 = vor.u32 %v3027, %v3072
    %v3081 = vstv %s3035
    %vm3082 = vcmp.ge.s32.totalorder %v2190, %v3081
    %v3083 = vstv %s3037
    %vm3084 = vcmp.le.s32.totalorder %v2190, %v3083
    %vm3085 = vmand %vm3082, %vm3084
    %v3086 = vsel %vm3085, 4, 0
    %v3087 = vor.u32 %v3034, %v3086
    %s3088 = sld [smem:[#allocation4 + $0x580]]
    %s3089 = sld [smem:[#allocation4 + $0x581]]
    %s3090 = sld [smem:[#allocation4 + $0x582]]
    %s3091 = sld [smem:[#allocation4 + $0x583]]
    %v3092 = vstv %s3089
    %vm3093 = vcmp.ge.s32.totalorder %v2181, %v3092
    %vm3094 = vcmp.ge.s32.totalorder %v2182, %v3092
    %vm3095 = vcmp.ge.s32.totalorder %v2183, %v3092
    %vm3096 = vcmp.ge.s32.totalorder %v2184, %v3092
    %vm3097 = vcmp.ge.s32.totalorder %v2185, %v3092
    %vm3098 = vcmp.ge.s32.totalorder %v2186, %v3092
    %vm3099 = vcmp.ge.s32.totalorder %v2187, %v3092
    %vm3100 = vcmp.ge.s32.totalorder %v2188, %v3092
    %v3101 = vstv %s3091
    %vm3102 = vcmp.le.s32.totalorder %v2181, %v3101
    %vm3103 = vcmp.le.s32.totalorder %v2182, %v3101
    %vm3104 = vcmp.le.s32.totalorder %v2183, %v3101
    %vm3105 = vcmp.le.s32.totalorder %v2184, %v3101
    %vm3106 = vcmp.le.s32.totalorder %v2185, %v3101
    %vm3107 = vcmp.le.s32.totalorder %v2186, %v3101
    %vm3108 = vcmp.le.s32.totalorder %v2187, %v3101
    %vm3109 = vcmp.le.s32.totalorder %v2188, %v3101
    %vm3110 = vmand %vm3093, %vm3102
    %vm3111 = vmand %vm3094, %vm3103
    %vm3112 = vmand %vm3095, %vm3104
    %vm3113 = vmand %vm3096, %vm3105
    %vm3114 = vmand %vm3097, %vm3106
    %vm3115 = vmand %vm3098, %vm3107
    %vm3116 = vmand %vm3099, %vm3108
    %vm3117 = vmand %vm3100, %vm3109
    %v3118 = vsel %vm3110, 8, 0
    %v3119 = vsel %vm3111, 8, 0
    %v3120 = vsel %vm3112, 8, 0
    %v3121 = vsel %vm3113, 8, 0
    %v3122 = vsel %vm3114, 8, 0
    %v3123 = vsel %vm3115, 8, 0
    %v3124 = vsel %vm3116, 8, 0
    %v3125 = vsel %vm3117, 8, 0
    %v3126 = vor.u32 %v3073, %v3118
    %v3127 = vor.u32 %v3074, %v3119
    %v3128 = vor.u32 %v3075, %v3120
    %v3129 = vor.u32 %v3076, %v3121
    %v3130 = vor.u32 %v3077, %v3122
    %v3131 = vor.u32 %v3078, %v3123
    %v3132 = vor.u32 %v3079, %v3124
    %v3133 = vor.u32 %v3080, %v3125
    %v3134 = vstv %s3088
    %vm3135 = vcmp.ge.s32.totalorder %v2190, %v3134
    %v3136 = vstv %s3090
    %vm3137 = vcmp.le.s32.totalorder %v2190, %v3136
    %vm3138 = vmand %vm3135, %vm3137
    %v3139 = vsel %vm3138, 8, 0
    %v3140 = vor.u32 %v3087, %v3139
    %s3141 = sld [smem:[#allocation4 + $0x600]]
    %s3142 = sld [smem:[#allocation4 + $0x601]]
    %s3143 = sld [smem:[#allocation4 + $0x602]]
    %s3144 = sld [smem:[#allocation4 + $0x603]]
    %v3145 = vstv %s3142
    %vm3146 = vcmp.ge.s32.totalorder %v2181, %v3145
    %vm3147 = vcmp.ge.s32.totalorder %v2182, %v3145
    %vm3148 = vcmp.ge.s32.totalorder %v2183, %v3145
    %vm3149 = vcmp.ge.s32.totalorder %v2184, %v3145
    %vm3150 = vcmp.ge.s32.totalorder %v2185, %v3145
    %vm3151 = vcmp.ge.s32.totalorder %v2186, %v3145
    %vm3152 = vcmp.ge.s32.totalorder %v2187, %v3145
    %vm3153 = vcmp.ge.s32.totalorder %v2188, %v3145
    %v3154 = vstv %s3144
    %vm3155 = vcmp.le.s32.totalorder %v2181, %v3154
    %vm3156 = vcmp.le.s32.totalorder %v2182, %v3154
    %vm3157 = vcmp.le.s32.totalorder %v2183, %v3154
    %vm3158 = vcmp.le.s32.totalorder %v2184, %v3154
    %vm3159 = vcmp.le.s32.totalorder %v2185, %v3154
    %vm3160 = vcmp.le.s32.totalorder %v2186, %v3154
    %vm3161 = vcmp.le.s32.totalorder %v2187, %v3154
    %vm3162 = vcmp.le.s32.totalorder %v2188, %v3154
    %vm3163 = vmand %vm3146, %vm3155
    %vm3164 = vmand %vm3147, %vm3156
    %vm3165 = vmand %vm3148, %vm3157
    %vm3166 = vmand %vm3149, %vm3158
    %vm3167 = vmand %vm3150, %vm3159
    %vm3168 = vmand %vm3151, %vm3160
    %vm3169 = vmand %vm3152, %vm3161
    %vm3170 = vmand %vm3153, %vm3162
    %v3171 = vsel %vm3163, 16, 0
    %v3172 = vsel %vm3164, 16, 0
    %v3173 = vsel %vm3165, 16, 0
    %v3174 = vsel %vm3166, 16, 0
    %v3175 = vsel %vm3167, 16, 0
    %v3176 = vsel %vm3168, 16, 0
    %v3177 = vsel %vm3169, 16, 0
    %v3178 = vsel %vm3170, 16, 0
    %v3179 = vor.u32 %v3126, %v3171
    %v3180 = vor.u32 %v3127, %v3172
    %v3181 = vor.u32 %v3128, %v3173
    %v3182 = vor.u32 %v3129, %v3174
    %v3183 = vor.u32 %v3130, %v3175
    %v3184 = vor.u32 %v3131, %v3176
    %v3185 = vor.u32 %v3132, %v3177
    %v3186 = vor.u32 %v3133, %v3178
    %v3187 = vstv %s3141
    %vm3188 = vcmp.ge.s32.totalorder %v2190, %v3187
    %v3189 = vstv %s3143
    %vm3190 = vcmp.le.s32.totalorder %v2190, %v3189
    %vm3191 = vmand %vm3188, %vm3190
    %v3192 = vsel %vm3191, 16, 0
    %v3193 = vor.u32 %v3140, %v3192
    %s3194 = sld [smem:[#allocation4 + $0x680]]
    %s3195 = sld [smem:[#allocation4 + $0x681]]
    %s3196 = sld [smem:[#allocation4 + $0x682]]
    %s3197 = sld [smem:[#allocation4 + $0x683]]
    %v3198 = vstv %s3195
    %vm3199 = vcmp.ge.s32.totalorder %v2181, %v3198
    %vm3200 = vcmp.ge.s32.totalorder %v2182, %v3198
    %vm3201 = vcmp.ge.s32.totalorder %v2183, %v3198
    %vm3202 = vcmp.ge.s32.totalorder %v2184, %v3198
    %vm3203 = vcmp.ge.s32.totalorder %v2185, %v3198
    %vm3204 = vcmp.ge.s32.totalorder %v2186, %v3198
    %vm3205 = vcmp.ge.s32.totalorder %v2187, %v3198
    %vm3206 = vcmp.ge.s32.totalorder %v2188, %v3198
    %v3207 = vstv %s3197
    %vm3208 = vcmp.le.s32.totalorder %v2181, %v3207
    %vm3209 = vcmp.le.s32.totalorder %v2182, %v3207
    %vm3210 = vcmp.le.s32.totalorder %v2183, %v3207
    %vm3211 = vcmp.le.s32.totalorder %v2184, %v3207
    %vm3212 = vcmp.le.s32.totalorder %v2185, %v3207
    %vm3213 = vcmp.le.s32.totalorder %v2186, %v3207
    %vm3214 = vcmp.le.s32.totalorder %v2187, %v3207
    %vm3215 = vcmp.le.s32.totalorder %v2188, %v3207
    %vm3216 = vmand %vm3199, %vm3208
    %vm3217 = vmand %vm3200, %vm3209
    %vm3218 = vmand %vm3201, %vm3210
    %vm3219 = vmand %vm3202, %vm3211
    %vm3220 = vmand %vm3203, %vm3212
    %vm3221 = vmand %vm3204, %vm3213
    %vm3222 = vmand %vm3205, %vm3214
    %vm3223 = vmand %vm3206, %vm3215
    %v3224 = vsel %vm3216, 32, 0
    %v3225 = vsel %vm3217, 32, 0
    %v3226 = vsel %vm3218, 32, 0
    %v3227 = vsel %vm3219, 32, 0
    %v3228 = vsel %vm3220, 32, 0
    %v3229 = vsel %vm3221, 32, 0
    %v3230 = vsel %vm3222, 32, 0
    %v3231 = vsel %vm3223, 32, 0
    %v3232 = vor.u32 %v3179, %v3224
    %v3233 = vor.u32 %v3180, %v3225
    %v3234 = vor.u32 %v3181, %v3226
    %v3235 = vor.u32 %v3182, %v3227
    %v3236 = vor.u32 %v3183, %v3228
    %v3237 = vor.u32 %v3184, %v3229
    %v3238 = vor.u32 %v3185, %v3230
    %v3239 = vor.u32 %v3186, %v3231
    %v3240 = vstv %s3194
    %vm3241 = vcmp.ge.s32.totalorder %v2190, %v3240
    %v3242 = vstv %s3196
    %vm3243 = vcmp.le.s32.totalorder %v2190, %v3242
    %vm3244 = vmand %vm3241, %vm3243
    %v3245 = vsel %vm3244, 32, 0
    %v3246 = vor.u32 %v3193, %v3245
    %s3247 = sld [smem:[#allocation4 + $0x700]]
    %s3248 = sld [smem:[#allocation4 + $0x701]]
    %s3249 = sld [smem:[#allocation4 + $0x702]]
    %s3250 = sld [smem:[#allocation4 + $0x703]]
    %v3251 = vstv %s3248
    %vm3252 = vcmp.ge.s32.totalorder %v2181, %v3251
    %vm3253 = vcmp.ge.s32.totalorder %v2182, %v3251
    %vm3254 = vcmp.ge.s32.totalorder %v2183, %v3251
    %vm3255 = vcmp.ge.s32.totalorder %v2184, %v3251
    %vm3256 = vcmp.ge.s32.totalorder %v2185, %v3251
    %vm3257 = vcmp.ge.s32.totalorder %v2186, %v3251
    %vm3258 = vcmp.ge.s32.totalorder %v2187, %v3251
    %vm3259 = vcmp.ge.s32.totalorder %v2188, %v3251
    %v3260 = vstv %s3250
    %vm3261 = vcmp.le.s32.totalorder %v2181, %v3260
    %vm3262 = vcmp.le.s32.totalorder %v2182, %v3260
    %vm3263 = vcmp.le.s32.totalorder %v2183, %v3260
    %vm3264 = vcmp.le.s32.totalorder %v2184, %v3260
    %vm3265 = vcmp.le.s32.totalorder %v2185, %v3260
    %vm3266 = vcmp.le.s32.totalorder %v2186, %v3260
    %vm3267 = vcmp.le.s32.totalorder %v2187, %v3260
    %vm3268 = vcmp.le.s32.totalorder %v2188, %v3260
    %vm3269 = vmand %vm3252, %vm3261
    %vm3270 = vmand %vm3253, %vm3262
    %vm3271 = vmand %vm3254, %vm3263
    %vm3272 = vmand %vm3255, %vm3264
    %vm3273 = vmand %vm3256, %vm3265
    %vm3274 = vmand %vm3257, %vm3266
    %vm3275 = vmand %vm3258, %vm3267
    %vm3276 = vmand %vm3259, %vm3268
    %v3277 = vsel %vm3269, 64, 0
    %v3278 = vsel %vm3270, 64, 0
    %v3279 = vsel %vm3271, 64, 0
    %v3280 = vsel %vm3272, 64, 0
    %v3281 = vsel %vm3273, 64, 0
    %v3282 = vsel %vm3274, 64, 0
    %v3283 = vsel %vm3275, 64, 0
    %v3284 = vsel %vm3276, 64, 0
    %v3285 = vor.u32 %v3232, %v3277
    %v3286 = vor.u32 %v3233, %v3278
    %v3287 = vor.u32 %v3234, %v3279
    %v3288 = vor.u32 %v3235, %v3280
    %v3289 = vor.u32 %v3236, %v3281
    %v3290 = vor.u32 %v3237, %v3282
    %v3291 = vor.u32 %v3238, %v3283
    %v3292 = vor.u32 %v3239, %v3284
    %v3293 = vstv %s3247
    %vm3294 = vcmp.ge.s32.totalorder %v2190, %v3293
    %v3295 = vstv %s3249
    %vm3296 = vcmp.le.s32.totalorder %v2190, %v3295
    %vm3297 = vmand %vm3294, %vm3296
    %v3298 = vsel %vm3297, 64, 0
    %v3299 = vor.u32 %v3246, %v3298
    %s3300 = sld [smem:[#allocation4 + $0x780]]
    %s3301 = sld [smem:[#allocation4 + $0x781]]
    %s3302 = sld [smem:[#allocation4 + $0x782]]
    %s3303 = sld [smem:[#allocation4 + $0x783]]
    %v3304 = vstv %s3301
    %vm3305 = vcmp.ge.s32.totalorder %v2181, %v3304
    %vm3306 = vcmp.ge.s32.totalorder %v2182, %v3304
    %vm3307 = vcmp.ge.s32.totalorder %v2183, %v3304
    %vm3308 = vcmp.ge.s32.totalorder %v2184, %v3304
    %vm3309 = vcmp.ge.s32.totalorder %v2185, %v3304
    %vm3310 = vcmp.ge.s32.totalorder %v2186, %v3304
    %vm3311 = vcmp.ge.s32.totalorder %v2187, %v3304
    %vm3312 = vcmp.ge.s32.totalorder %v2188, %v3304
    %v3313 = vstv %s3303
    %vm3314 = vcmp.le.s32.totalorder %v2181, %v3313
    %vm3315 = vcmp.le.s32.totalorder %v2182, %v3313
    %vm3316 = vcmp.le.s32.totalorder %v2183, %v3313
    %vm3317 = vcmp.le.s32.totalorder %v2184, %v3313
    %vm3318 = vcmp.le.s32.totalorder %v2185, %v3313
    %vm3319 = vcmp.le.s32.totalorder %v2186, %v3313
    %vm3320 = vcmp.le.s32.totalorder %v2187, %v3313
    %vm3321 = vcmp.le.s32.totalorder %v2188, %v3313
    %vm3322 = vmand %vm3305, %vm3314
    %vm3323 = vmand %vm3306, %vm3315
    %vm3324 = vmand %vm3307, %vm3316
    %vm3325 = vmand %vm3308, %vm3317
    %vm3326 = vmand %vm3309, %vm3318
    %vm3327 = vmand %vm3310, %vm3319
    %vm3328 = vmand %vm3311, %vm3320
    %vm3329 = vmand %vm3312, %vm3321
    %v3330 = vsel %vm3322, 128, 0
    %v3331 = vsel %vm3323, 128, 0
    %v3332 = vsel %vm3324, 128, 0
    %v3333 = vsel %vm3325, 128, 0
    %v3334 = vsel %vm3326, 128, 0
    %v3335 = vsel %vm3327, 128, 0
    %v3336 = vsel %vm3328, 128, 0
    %v3337 = vsel %vm3329, 128, 0
    %v3338 = vor.u32 %v3285, %v3330
    %v3339 = vor.u32 %v3286, %v3331
    %v3340 = vor.u32 %v3287, %v3332
    %v3341 = vor.u32 %v3288, %v3333
    %v3342 = vor.u32 %v3289, %v3334
    %v3343 = vor.u32 %v3290, %v3335
    %v3344 = vor.u32 %v3291, %v3336
    %v3345 = vor.u32 %v3292, %v3337
    %v3346 = vstv %s3300
    %vm3347 = vcmp.ge.s32.totalorder %v2190, %v3346
    %v3348 = vstv %s3302
    %vm3349 = vcmp.le.s32.totalorder %v2190, %v3348
    %vm3350 = vmand %vm3347, %vm3349
    %v3351 = vsel %vm3350, 128, 0
    %v3352 = vor.u32 %v3299, %v3351
    %v3353 = vand.u32 %v3338, %v3352
    %v3354 = vand.u32 %v3339, %v3352
    %v3355 = vand.u32 %v3340, %v3352
    %v3356 = vand.u32 %v3341, %v3352
    %v3357 = vand.u32 %v3342, %v3352
    %v3358 = vand.u32 %v3343, %v3352
    %v3359 = vand.u32 %v3344, %v3352
    %v3360 = vand.u32 %v3345, %v3352
    %vm3361 = vcmp.ne.s32.totalorder %v3353, 0
    %vm3362 = vcmp.ne.s32.totalorder %v3354, 0
    %vm3363 = vcmp.ne.s32.totalorder %v3355, 0
    %vm3364 = vcmp.ne.s32.totalorder %v3356, 0
    %vm3365 = vcmp.ne.s32.totalorder %v3357, 0
    %vm3366 = vcmp.ne.s32.totalorder %v3358, 0
    %vm3367 = vcmp.ne.s32.totalorder %v3359, 0
    %vm3368 = vcmp.ne.s32.totalorder %v3360, 0
    %vm3369 = vcmp.gt.f32.partialorder %v2164, 0.07058824
    %vm3370 = vcmp.gt.f32.partialorder %v2165, 0.07058824
    %vm3371 = vcmp.gt.f32.partialorder %v2166, 0.07058824
    %vm3372 = vcmp.gt.f32.partialorder %v2167, 0.07058824
    %vm3373 = vcmp.gt.f32.partialorder %v2168, 0.07058824
    %vm3374 = vcmp.gt.f32.partialorder %v2169, 0.07058824
    %vm3375 = vcmp.gt.f32.partialorder %v2170, 0.07058824
    %vm3376 = vcmp.gt.f32.partialorder %v2171, 0.07058824
    %vm3377 = vcmp.gt.f32.partialorder %v2172, 0.07058824
    %vm3378 = vcmp.gt.f32.partialorder %v2173, 0.07058824
    %vm3379 = vcmp.gt.f32.partialorder %v2174, 0.07058824
    %vm3380 = vcmp.gt.f32.partialorder %v2175, 0.07058824
    %vm3381 = vcmp.gt.f32.partialorder %v2176, 0.07058824
    %vm3382 = vcmp.gt.f32.partialorder %v2177, 0.07058824
    %vm3383 = vcmp.gt.f32.partialorder %v2178, 0.07058824
    %vm3384 = vcmp.gt.f32.partialorder %v2179, 0.07058824
    %vm3385 = vmxor %vm3361, 1
    %vm3386 = vmxor %vm3362, 1
    %vm3387 = vmxor %vm3363, 1
    %vm3388 = vmxor %vm3364, 1
    %vm3389 = vmxor %vm3365, 1
    %vm3390 = vmxor %vm3366, 1
    %vm3391 = vmxor %vm3367, 1
    %vm3392 = vmxor %vm3368, 1
    %v3393 = vsel %vm3385, 1, 0
    %v3394 = vsel %vm3386, 1, 0
    %v3395 = vsel %vm3387, 1, 0
    %v3396 = vsel %vm3388, 1, 0
    %v3397 = vsel %vm3389, 1, 0
    %v3398 = vsel %vm3390, 1, 0
    %v3399 = vsel %vm3391, 1, 0
    %v3400 = vsel %vm3392, 1, 0
    %3401 = vrot.lane.b32.xlu0 %v3393, 67
    %v3402 = vpop.permute.xlu0 %3401
    %3403 = vrot.lane.b32.xlu0 %v3394, 67
    %v3404 = vpop.permute.xlu0 %3403
    %3405 = vrot.lane.b32.xlu0 %v3395, 67
    %v3406 = vpop.permute.xlu0 %3405
    %3407 = vrot.lane.b32.xlu0 %v3396, 67
    %v3408 = vpop.permute.xlu0 %3407
    %3409 = vrot.lane.b32.xlu0 %v3397, 67
    %v3410 = vpop.permute.xlu0 %3409
    %3411 = vrot.lane.b32.xlu0 %v3398, 67
    %v3412 = vpop.permute.xlu0 %3411
    %3413 = vrot.lane.b32.xlu0 %v3399, 67
    %v3414 = vpop.permute.xlu0 %3413
    %3415 = vrot.lane.b32.xlu0 %v3400, 67
    %v3416 = vpop.permute.xlu0 %3415
    %vm3417 = vcmp.ne.s32.totalorder %v3402, 0
    %vm3418 = vcmp.ne.s32.totalorder %v3404, 0
    %vm3419 = vcmp.ne.s32.totalorder %v3406, 0
    %vm3420 = vcmp.ne.s32.totalorder %v3408, 0
    %vm3421 = vcmp.ne.s32.totalorder %v3410, 0
    %vm3422 = vcmp.ne.s32.totalorder %v3412, 0
    %vm3423 = vcmp.ne.s32.totalorder %v3414, 0
    %vm3424 = vcmp.ne.s32.totalorder %v3416, 0
    %vm3425 = vmand %vm3369, %vm3417
    %vm3426 = vmand %vm3370, %vm3417
    %vm3427 = vmand %vm3371, %vm3418
    %vm3428 = vmand %vm3372, %vm3418
    %vm3429 = vmand %vm3373, %vm3419
    %vm3430 = vmand %vm3374, %vm3419
    %vm3431 = vmand %vm3375, %vm3420
    %vm3432 = vmand %vm3376, %vm3420
    %vm3433 = vmand %vm3377, %vm3421
    %vm3434 = vmand %vm3378, %vm3421
    %vm3435 = vmand %vm3379, %vm3422
    %vm3436 = vmand %vm3380, %vm3422
    %vm3437 = vmand %vm3381, %vm3423
    %vm3438 = vmand %vm3382, %vm3423
    %vm3439 = vmand %vm3383, %vm3424
    %vm3440 = vmand %vm3384, %vm3424
    %v3441 = vsel %vm3425, 1, 0
    %v3442 = vsel %vm3426, 1, 0
    %v3443 = vsel %vm3427, 1, 0
    %v3444 = vsel %vm3428, 1, 0
    %v3445 = vsel %vm3429, 1, 0
    %v3446 = vsel %vm3430, 1, 0
    %v3447 = vsel %vm3431, 1, 0
    %v3448 = vsel %vm3432, 1, 0
    %v3449 = vsel %vm3433, 1, 0
    %v3450 = vsel %vm3434, 1, 0
    %v3451 = vsel %vm3435, 1, 0
    %v3452 = vsel %vm3436, 1, 0
    %v3453 = vsel %vm3437, 1, 0
    %v3454 = vsel %vm3438, 1, 0
    %v3455 = vsel %vm3439, 1, 0
    %v3456 = vsel %vm3440, 1, 0
    %3457 = vrot.lane.b32.xlu0 %v3441, 125
    %v3458 = vpop.permute.xlu0 %3457
    %3459 = vrot.lane.b32.xlu0 %v3442, 125
    %v3460 = vpop.permute.xlu0 %3459
    %3461 = vrot.lane.b32.xlu0 %v3443, 125
    %v3462 = vpop.permute.xlu0 %3461
    %3463 = vrot.lane.b32.xlu0 %v3444, 125
    %v3464 = vpop.permute.xlu0 %3463
    %3465 = vrot.lane.b32.xlu0 %v3445, 125
    %v3466 = vpop.permute.xlu0 %3465
    %3467 = vrot.lane.b32.xlu0 %v3446, 125
    %v3468 = vpop.permute.xlu0 %3467
    %3469 = vrot.lane.b32.xlu0 %v3447, 125
    %v3470 = vpop.permute.xlu0 %3469
    %3471 = vrot.lane.b32.xlu0 %v3448, 125
    %v3472 = vpop.permute.xlu0 %3471
    %3473 = vrot.lane.b32.xlu0 %v3449, 125
    %v3474 = vpop.permute.xlu0 %3473
    %3475 = vrot.lane.b32.xlu0 %v3450, 125
    %v3476 = vpop.permute.xlu0 %3475
    %3477 = vrot.lane.b32.xlu0 %v3451, 125
    %v3478 = vpop.permute.xlu0 %3477
    %3479 = vrot.lane.b32.xlu0 %v3452, 125
    %v3480 = vpop.permute.xlu0 %3479
    %3481 = vrot.lane.b32.xlu0 %v3453, 125
    %v3482 = vpop.permute.xlu0 %3481
    %3483 = vrot.lane.b32.xlu0 %v3454, 125
    %v3484 = vpop.permute.xlu0 %3483
    %3485 = vrot.lane.b32.xlu0 %v3455, 125
    %v3486 = vpop.permute.xlu0 %3485
    %3487 = vrot.lane.b32.xlu0 %v3456, 125
    %v3488 = vpop.permute.xlu0 %3487
    %vm3489 = vcmask 1022976
    %v3490 = vsel %vm3489, %v3458, %v3460
    %v3491 = vsel %vm3489, %v3462, %v3464
    %v3492 = vsel %vm3489, %v3466, %v3468
    %v3493 = vsel %vm3489, %v3470, %v3472
    %v3494 = vsel %vm3489, %v3474, %v3476
    %v3495 = vsel %vm3489, %v3478, %v3480
    %v3496 = vsel %vm3489, %v3482, %v3484
    %v3497 = vsel %vm3489, %v3486, %v3488
    %vm3498 = vcmask 1048064
    %3499 = vst.msk [vmem:[#allocation5] sm:$0xff] %vm3498, %v3490
    %3500 = vst.msk [vmem:[#allocation5 + $0x8] sm:$0xff] %vm3498, %v3491
    %3501 = vst.msk [vmem:[#allocation5 + $0x10] sm:$0xff] %vm3498, %v3492
    %3502 = vst.msk [vmem:[#allocation5 + $0x18] sm:$0xff] %vm3498, %v3493
    %3503 = vst.msk [vmem:[#allocation5 + $0x20] sm:$0xff] %vm3498, %v3494
    %3504 = vst.msk [vmem:[#allocation5 + $0x28] sm:$0xff] %vm3498, %v3495
    %3505 = vst.msk [vmem:[#allocation5 + $0x30] sm:$0xff] %vm3498, %v3496
    %3506 = vst.msk [vmem:[#allocation5 + $0x38] sm:$0xff] %vm3498, %v3497
    %3507 = vrot.lane.b32.xlu0 %v2190, 67
    %v3508 = vpop.permute.xlu0 %3507
    %v3509 = vsel %vm3425, %v3508, 1000000
    %v3510 = vsel %vm3426, %v3508, 1000000
    %v3511 = vsel %vm3427, %v3508, 1000000
    %v3512 = vsel %vm3428, %v3508, 1000000
    %v3513 = vsel %vm3429, %v3508, 1000000
    %v3514 = vsel %vm3430, %v3508, 1000000
    %v3515 = vsel %vm3431, %v3508, 1000000
    %v3516 = vsel %vm3432, %v3508, 1000000
    %v3517 = vsel %vm3433, %v3508, 1000000
    %v3518 = vsel %vm3434, %v3508, 1000000
    %v3519 = vsel %vm3435, %v3508, 1000000
    %v3520 = vsel %vm3436, %v3508, 1000000
    %v3521 = vsel %vm3437, %v3508, 1000000
    %v3522 = vsel %vm3438, %v3508, 1000000
    %v3523 = vsel %vm3439, %v3508, 1000000
    %v3524 = vsel %vm3440, %v3508, 1000000
    %vm3525 = vcmask 1048088
    %v3526 = vsel %vm3525, %v3509, 2147483647
    %vm3527 = vcmask 23552
    %v3528 = vsel %vm3527, %v3510, 2147483647
    %v3529 = vsel %vm3525, %v3511, 2147483647
    %v3530 = vsel %vm3527, %v3512, 2147483647
    %v3531 = vsel %vm3525, %v3513, 2147483647
    %vm3532 = vcmp.lt.s32.totalorder %v3526, %v3531
    %v3533 = vsel %vm3532, %v3526, %v3531
    %v3534 = vsel %vm3527, %v3514, 2147483647
    %vm3535 = vcmp.lt.s32.totalorder %v3528, %v3534
    %v3536 = vsel %vm3535, %v3528, %v3534
    %v3537 = vsel %vm3525, %v3515, 2147483647
    %vm3538 = vcmp.lt.s32.totalorder %v3529, %v3537
    %v3539 = vsel %vm3538, %v3529, %v3537
    %v3540 = vsel %vm3527, %v3516, 2147483647
    %vm3541 = vcmp.lt.s32.totalorder %v3530, %v3540
    %v3542 = vsel %vm3541, %v3530, %v3540
    %v3543 = vsel %vm3525, %v3517, 2147483647
    %vm3544 = vcmp.lt.s32.totalorder %v3533, %v3543
    %v3545 = vsel %vm3544, %v3533, %v3543
    %v3546 = vsel %vm3527, %v3518, 2147483647
    %vm3547 = vcmp.lt.s32.totalorder %v3536, %v3546
    %v3548 = vsel %vm3547, %v3536, %v3546
    %v3549 = vsel %vm3525, %v3519, 2147483647
    %vm3550 = vcmp.lt.s32.totalorder %v3539, %v3549
    %v3551 = vsel %vm3550, %v3539, %v3549
    %v3552 = vsel %vm3527, %v3520, 2147483647
    %vm3553 = vcmp.lt.s32.totalorder %v3542, %v3552
    %v3554 = vsel %vm3553, %v3542, %v3552
    %v3555 = vsel %vm3525, %v3521, 2147483647
    %vm3556 = vcmp.lt.s32.totalorder %v3545, %v3555
    %v3557 = vsel %vm3556, %v3545, %v3555
    %v3558 = vsel %vm3527, %v3522, 2147483647
    %vm3559 = vcmp.lt.s32.totalorder %v3548, %v3558
    %v3560 = vsel %vm3559, %v3548, %v3558
    %v3561 = vsel %vm3525, %v3523, 2147483647
    %vm3562 = vcmp.lt.s32.totalorder %v3551, %v3561
    %v3563 = vsel %vm3562, %v3551, %v3561
    %v3564 = vsel %vm3527, %v3524, 2147483647
    %vm3565 = vcmp.lt.s32.totalorder %v3554, %v3564
    %v3566 = vsel %vm3565, %v3554, %v3564
    %vm3567 = vcmp.lt.s32.totalorder %v3557, %v3560
    %v3568 = vsel %vm3567, %v3557, %v3560
    %vm3569 = vcmp.lt.s32.totalorder %v3563, %v3566
    %v3570 = vsel %vm3569, %v3563, %v3566
    %vm3571 = vcmp.lt.s32.totalorder %v3568, %v3570
    %v3572 = vsel %vm3571, %v3568, %v3570
    %v3573 = vand.u32 %v3572, 65535
    %v3574 = vshra.s32 %v3572, 16
    %v3575 = vcvt.s32.f32 %v3573
    %v3576 = vcvt.s32.f32 %v3574
    %3577 = vmin.xlane.f32.xlu0 %v3576
    %v3578 = vpop.xlane.xlu0 %3577
    %vm3579 = vcmp.eq.f32.partialorder %v3576, %v3578
    %v3580 = vsel %vm3579, %v3575, inf
    %3581 = vmin.xlane.f32.xlu0 %v3580
    %v3582 = vpop.xlane.xlu0 %3581
    %v3583 = vcvt.f32.s32 %v3582
    %v3584 = vcvt.f32.s32 %v3578
    %v3585 = vshll.u32 %v3584, 16
    %v3586 = vadd.s32 %v3585, %v3583
    %v3587 = vrot.slane %v3586, 4
    %vm3588 = vcmp.lt.s32.totalorder %v3586, %v3587
    %v3589 = vsel %vm3588, %v3586, %v3587
    %v3590 = vrot.slane %v3589, 2
    %vm3591 = vcmp.lt.s32.totalorder %v3589, %v3590
    %v3592 = vsel %vm3591, %v3589, %v3590
    %v3593 = vrot.slane %v3592, 1
    %vm3594 = vcmp.lt.s32.totalorder %v3592, %v3593
    %v3595 = vsel %vm3594, %v3592, %v3593
    %s3596 = vtos %v3595
    %s3597 = scalar_lea.smem [#allocation8], 128
    %3598 = sst [smem:[%s3597]] %s3596
    %v3599 = vsel %vm3425, %v2181, 1000000
    %v3600 = vsel %vm3426, %v2181, 1000000
    %v3601 = vsel %vm3427, %v2182, 1000000
    %v3602 = vsel %vm3428, %v2182, 1000000
    %v3603 = vsel %vm3429, %v2183, 1000000
    %v3604 = vsel %vm3430, %v2183, 1000000
    %v3605 = vsel %vm3431, %v2184, 1000000
    %v3606 = vsel %vm3432, %v2184, 1000000
    %v3607 = vsel %vm3433, %v2185, 1000000
    %v3608 = vsel %vm3434, %v2185, 1000000
    %v3609 = vsel %vm3435, %v2186, 1000000
    %v3610 = vsel %vm3436, %v2186, 1000000
    %v3611 = vsel %vm3437, %v2187, 1000000
    %v3612 = vsel %vm3438, %v2187, 1000000
    %v3613 = vsel %vm3439, %v2188, 1000000
    %v3614 = vsel %vm3440, %v2188, 1000000
    %v3615 = vsel %vm3525, %v3599, 2147483647
    %v3616 = vsel %vm3527, %v3600, 2147483647
    %v3617 = vsel %vm3525, %v3601, 2147483647
    %v3618 = vsel %vm3527, %v3602, 2147483647
    %v3619 = vsel %vm3525, %v3603, 2147483647
    %vm3620 = vcmp.lt.s32.totalorder %v3615, %v3619
    %v3621 = vsel %vm3620, %v3615, %v3619
    %v3622 = vsel %vm3527, %v3604, 2147483647
    %vm3623 = vcmp.lt.s32.totalorder %v3616, %v3622
    %v3624 = vsel %vm3623, %v3616, %v3622
    %v3625 = vsel %vm3525, %v3605, 2147483647
    %vm3626 = vcmp.lt.s32.totalorder %v3617, %v3625
    %v3627 = vsel %vm3626, %v3617, %v3625
    %v3628 = vsel %vm3527, %v3606, 2147483647
    %vm3629 = vcmp.lt.s32.totalorder %v3618, %v3628
    %v3630 = vsel %vm3629, %v3618, %v3628
    %v3631 = vsel %vm3525, %v3607, 2147483647
    %vm3632 = vcmp.lt.s32.totalorder %v3621, %v3631
    %v3633 = vsel %vm3632, %v3621, %v3631
    %v3634 = vsel %vm3527, %v3608, 2147483647
    %vm3635 = vcmp.lt.s32.totalorder %v3624, %v3634
    %v3636 = vsel %vm3635, %v3624, %v3634
    %v3637 = vsel %vm3525, %v3609, 2147483647
    %vm3638 = vcmp.lt.s32.totalorder %v3627, %v3637
    %v3639 = vsel %vm3638, %v3627, %v3637
    %v3640 = vsel %vm3527, %v3610, 2147483647
    %vm3641 = vcmp.lt.s32.totalorder %v3630, %v3640
    %v3642 = vsel %vm3641, %v3630, %v3640
    %v3643 = vsel %vm3525, %v3611, 2147483647
    %vm3644 = vcmp.lt.s32.totalorder %v3633, %v3643
    %v3645 = vsel %vm3644, %v3633, %v3643
    %v3646 = vsel %vm3527, %v3612, 2147483647
    %vm3647 = vcmp.lt.s32.totalorder %v3636, %v3646
    %v3648 = vsel %vm3647, %v3636, %v3646
    %v3649 = vsel %vm3525, %v3613, 2147483647
    %vm3650 = vcmp.lt.s32.totalorder %v3639, %v3649
    %v3651 = vsel %vm3650, %v3639, %v3649
    %v3652 = vsel %vm3527, %v3614, 2147483647
    %vm3653 = vcmp.lt.s32.totalorder %v3642, %v3652
    %v3654 = vsel %vm3653, %v3642, %v3652
    %vm3655 = vcmp.lt.s32.totalorder %v3645, %v3648
    %v3656 = vsel %vm3655, %v3645, %v3648
    %vm3657 = vcmp.lt.s32.totalorder %v3651, %v3654
    %v3658 = vsel %vm3657, %v3651, %v3654
    %vm3659 = vcmp.lt.s32.totalorder %v3656, %v3658
    %v3660 = vsel %vm3659, %v3656, %v3658
    %v3661 = vand.u32 %v3660, 65535
    %v3662 = vshra.s32 %v3660, 16
    %v3663 = vcvt.s32.f32 %v3661
    %v3664 = vcvt.s32.f32 %v3662
    %3665 = vmin.xlane.f32.xlu0 %v3664
    %v3666 = vpop.xlane.xlu0 %3665
    %vm3667 = vcmp.eq.f32.partialorder %v3664, %v3666
    %v3668 = vsel %vm3667, %v3663, inf
    %3669 = vmin.xlane.f32.xlu0 %v3668
    %v3670 = vpop.xlane.xlu0 %3669
    %v3671 = vcvt.f32.s32 %v3670
    %v3672 = vcvt.f32.s32 %v3666
    %v3673 = vshll.u32 %v3672, 16
    %v3674 = vadd.s32 %v3673, %v3671
    %v3675 = vrot.slane %v3674, 4
    %vm3676 = vcmp.lt.s32.totalorder %v3674, %v3675
    %v3677 = vsel %vm3676, %v3674, %v3675
    %v3678 = vrot.slane %v3677, 2
    %vm3679 = vcmp.lt.s32.totalorder %v3677, %v3678
    %v3680 = vsel %vm3679, %v3677, %v3678
    %v3681 = vrot.slane %v3680, 1
    %vm3682 = vcmp.lt.s32.totalorder %v3680, %v3681
    %v3683 = vsel %vm3682, %v3680, %v3681
    %s3684 = vtos %v3683
    %s3685 = scalar_lea.smem [#allocation8], 129
    %3686 = sst [smem:[%s3685]] %s3684
    %v3687 = vsel %vm3425, %v3508, 4293967296
    %v3688 = vsel %vm3426, %v3508, 4293967296
    %v3689 = vsel %vm3427, %v3508, 4293967296
    %v3690 = vsel %vm3428, %v3508, 4293967296
    %v3691 = vsel %vm3429, %v3508, 4293967296
    %v3692 = vsel %vm3430, %v3508, 4293967296
    %v3693 = vsel %vm3431, %v3508, 4293967296
    %v3694 = vsel %vm3432, %v3508, 4293967296
    %v3695 = vsel %vm3433, %v3508, 4293967296
    %v3696 = vsel %vm3434, %v3508, 4293967296
    %v3697 = vsel %vm3435, %v3508, 4293967296
    %v3698 = vsel %vm3436, %v3508, 4293967296
    %v3699 = vsel %vm3437, %v3508, 4293967296
    %v3700 = vsel %vm3438, %v3508, 4293967296
    %v3701 = vsel %vm3439, %v3508, 4293967296
    %v3702 = vsel %vm3440, %v3508, 4293967296
    %v3703 = vsel %vm3525, %v3687, 2147483648
    %v3704 = vsel %vm3527, %v3688, 2147483648
    %v3705 = vsel %vm3525, %v3689, 2147483648
    %v3706 = vsel %vm3527, %v3690, 2147483648
    %v3707 = vsel %vm3525, %v3691, 2147483648
    %vm3708 = vcmp.gt.s32.totalorder %v3703, %v3707
    %v3709 = vsel %vm3708, %v3703, %v3707
    %v3710 = vsel %vm3527, %v3692, 2147483648
    %vm3711 = vcmp.gt.s32.totalorder %v3704, %v3710
    %v3712 = vsel %vm3711, %v3704, %v3710
    %v3713 = vsel %vm3525, %v3693, 2147483648
    %vm3714 = vcmp.gt.s32.totalorder %v3705, %v3713
    %v3715 = vsel %vm3714, %v3705, %v3713
    %v3716 = vsel %vm3527, %v3694, 2147483648
    %vm3717 = vcmp.gt.s32.totalorder %v3706, %v3716
    %v3718 = vsel %vm3717, %v3706, %v3716
    %v3719 = vsel %vm3525, %v3695, 2147483648
    %vm3720 = vcmp.gt.s32.totalorder %v3709, %v3719
    %v3721 = vsel %vm3720, %v3709, %v3719
    %v3722 = vsel %vm3527, %v3696, 2147483648
    %vm3723 = vcmp.gt.s32.totalorder %v3712, %v3722
    %v3724 = vsel %vm3723, %v3712, %v3722
    %v3725 = vsel %vm3525, %v3697, 2147483648
    %vm3726 = vcmp.gt.s32.totalorder %v3715, %v3725
    %v3727 = vsel %vm3726, %v3715, %v3725
    %v3728 = vsel %vm3527, %v3698, 2147483648
    %vm3729 = vcmp.gt.s32.totalorder %v3718, %v3728
    %v3730 = vsel %vm3729, %v3718, %v3728
    %v3731 = vsel %vm3525, %v3699, 2147483648
    %vm3732 = vcmp.gt.s32.totalorder %v3721, %v3731
    %v3733 = vsel %vm3732, %v3721, %v3731
    %v3734 = vsel %vm3527, %v3700, 2147483648
    %vm3735 = vcmp.gt.s32.totalorder %v3724, %v3734
    %v3736 = vsel %vm3735, %v3724, %v3734
    %v3737 = vsel %vm3525, %v3701, 2147483648
    %vm3738 = vcmp.gt.s32.totalorder %v3727, %v3737
    %v3739 = vsel %vm3738, %v3727, %v3737
    %v3740 = vsel %vm3527, %v3702, 2147483648
    %vm3741 = vcmp.gt.s32.totalorder %v3730, %v3740
    %v3742 = vsel %vm3741, %v3730, %v3740
    %vm3743 = vcmp.gt.s32.totalorder %v3733, %v3736
    %v3744 = vsel %vm3743, %v3733, %v3736
    %vm3745 = vcmp.gt.s32.totalorder %v3739, %v3742
    %v3746 = vsel %vm3745, %v3739, %v3742
    %vm3747 = vcmp.gt.s32.totalorder %v3744, %v3746
    %v3748 = vsel %vm3747, %v3744, %v3746
    %v3749 = vand.u32 %v3748, 65535
    %v3750 = vshra.s32 %v3748, 16
    %v3751 = vcvt.s32.f32 %v3749
    %v3752 = vcvt.s32.f32 %v3750
    %3753 = vmax.xlane.f32.xlu0 %v3752
    %v3754 = vpop.xlane.xlu0 %3753
    %vm3755 = vcmp.eq.f32.partialorder %v3752, %v3754
    %v3756 = vsel %vm3755, %v3751, -inf
    %3757 = vmax.xlane.f32.xlu0 %v3756
    %v3758 = vpop.xlane.xlu0 %3757
    %v3759 = vcvt.f32.s32 %v3758
    %v3760 = vcvt.f32.s32 %v3754
    %v3761 = vshll.u32 %v3760, 16
    %v3762 = vadd.s32 %v3761, %v3759
    %v3763 = vrot.slane %v3762, 4
    %vm3764 = vcmp.gt.s32.totalorder %v3762, %v3763
    %v3765 = vsel %vm3764, %v3762, %v3763
    %v3766 = vrot.slane %v3765, 2
    %vm3767 = vcmp.gt.s32.totalorder %v3765, %v3766
    %v3768 = vsel %vm3767, %v3765, %v3766
    %v3769 = vrot.slane %v3768, 1
    %vm3770 = vcmp.gt.s32.totalorder %v3768, %v3769
    %v3771 = vsel %vm3770, %v3768, %v3769
    %s3772 = vtos %v3771
    %s3773 = scalar_lea.smem [#allocation8], 130
    %3774 = sst [smem:[%s3773]] %s3772
    %v3775 = vsel %vm3425, %v2181, 4293967296
    %v3776 = vsel %vm3426, %v2181, 4293967296
    %v3777 = vsel %vm3427, %v2182, 4293967296
    %v3778 = vsel %vm3428, %v2182, 4293967296
    %v3779 = vsel %vm3429, %v2183, 4293967296
    %v3780 = vsel %vm3430, %v2183, 4293967296
    %v3781 = vsel %vm3431, %v2184, 4293967296
    %v3782 = vsel %vm3432, %v2184, 4293967296
    %v3783 = vsel %vm3433, %v2185, 4293967296
    %v3784 = vsel %vm3434, %v2185, 4293967296
    %v3785 = vsel %vm3435, %v2186, 4293967296
    %v3786 = vsel %vm3436, %v2186, 4293967296
    %v3787 = vsel %vm3437, %v2187, 4293967296
    %v3788 = vsel %vm3438, %v2187, 4293967296
    %v3789 = vsel %vm3439, %v2188, 4293967296
    %v3790 = vsel %vm3440, %v2188, 4293967296
    %v3791 = vsel %vm3525, %v3775, 2147483648
    %v3792 = vsel %vm3527, %v3776, 2147483648
    %v3793 = vsel %vm3525, %v3777, 2147483648
    %v3794 = vsel %vm3527, %v3778, 2147483648
    %v3795 = vsel %vm3525, %v3779, 2147483648
    %vm3796 = vcmp.gt.s32.totalorder %v3791, %v3795
    %v3797 = vsel %vm3796, %v3791, %v3795
    %v3798 = vsel %vm3527, %v3780, 2147483648
    %vm3799 = vcmp.gt.s32.totalorder %v3792, %v3798
    %v3800 = vsel %vm3799, %v3792, %v3798
    %v3801 = vsel %vm3525, %v3781, 2147483648
    %vm3802 = vcmp.gt.s32.totalorder %v3793, %v3801
    %v3803 = vsel %vm3802, %v3793, %v3801
    %v3804 = vsel %vm3527, %v3782, 2147483648
    %vm3805 = vcmp.gt.s32.totalorder %v3794, %v3804
    %v3806 = vsel %vm3805, %v3794, %v3804
    %v3807 = vsel %vm3525, %v3783, 2147483648
    %vm3808 = vcmp.gt.s32.totalorder %v3797, %v3807
    %v3809 = vsel %vm3808, %v3797, %v3807
    %v3810 = vsel %vm3527, %v3784, 2147483648
    %vm3811 = vcmp.gt.s32.totalorder %v3800, %v3810
    %v3812 = vsel %vm3811, %v3800, %v3810
    %v3813 = vsel %vm3525, %v3785, 2147483648
    %vm3814 = vcmp.gt.s32.totalorder %v3803, %v3813
    %v3815 = vsel %vm3814, %v3803, %v3813
    %v3816 = vsel %vm3527, %v3786, 2147483648
    %vm3817 = vcmp.gt.s32.totalorder %v3806, %v3816
    %v3818 = vsel %vm3817, %v3806, %v3816
    %v3819 = vsel %vm3525, %v3787, 2147483648
    %vm3820 = vcmp.gt.s32.totalorder %v3809, %v3819
    %v3821 = vsel %vm3820, %v3809, %v3819
    %v3822 = vsel %vm3527, %v3788, 2147483648
    %vm3823 = vcmp.gt.s32.totalorder %v3812, %v3822
    %v3824 = vsel %vm3823, %v3812, %v3822
    %v3825 = vsel %vm3525, %v3789, 2147483648
    %vm3826 = vcmp.gt.s32.totalorder %v3815, %v3825
    %v3827 = vsel %vm3826, %v3815, %v3825
    %v3828 = vsel %vm3527, %v3790, 2147483648
    %vm3829 = vcmp.gt.s32.totalorder %v3818, %v3828
    %v3830 = vsel %vm3829, %v3818, %v3828
    %vm3831 = vcmp.gt.s32.totalorder %v3821, %v3824
    %v3832 = vsel %vm3831, %v3821, %v3824
    %vm3833 = vcmp.gt.s32.totalorder %v3827, %v3830
    %v3834 = vsel %vm3833, %v3827, %v3830
    %vm3835 = vcmp.gt.s32.totalorder %v3832, %v3834
    %v3836 = vsel %vm3835, %v3832, %v3834
    %v3837 = vand.u32 %v3836, 65535
    %v3838 = vshra.s32 %v3836, 16
    %v3839 = vcvt.s32.f32 %v3837
    %v3840 = vcvt.s32.f32 %v3838
    %3841 = vmax.xlane.f32.xlu0 %v3840
    %v3842 = vpop.xlane.xlu0 %3841
    %vm3843 = vcmp.eq.f32.partialorder %v3840, %v3842
    %v3844 = vsel %vm3843, %v3839, -inf
    %3845 = vmax.xlane.f32.xlu0 %v3844
    %v3846 = vpop.xlane.xlu0 %3845
    %v3847 = vcvt.f32.s32 %v3846
    %v3848 = vcvt.f32.s32 %v3842
    %v3849 = vshll.u32 %v3848, 16
    %v3850 = vadd.s32 %v3849, %v3847
    %v3851 = vrot.slane %v3850, 4
    %vm3852 = vcmp.gt.s32.totalorder %v3850, %v3851
    %v3853 = vsel %vm3852, %v3850, %v3851
    %v3854 = vrot.slane %v3853, 2
    %vm3855 = vcmp.gt.s32.totalorder %v3853, %v3854
    %v3856 = vsel %vm3855, %v3853, %v3854
    %v3857 = vrot.slane %v3856, 1
    %vm3858 = vcmp.gt.s32.totalorder %v3856, %v3857
    %v3859 = vsel %vm3858, %v3856, %v3857
    %s3860 = vtos %v3859
    %s3861 = scalar_lea.smem [#allocation8], 131
    %3862 = sst [smem:[%s3861]] %s3860
    // Predicated region
    $region10: #{tpu_custom_call.1} parent=1 // pred_check
      _
    $region11: #{tpu_custom_call.1} parent=1 // pred_check_branch
      %3864 = sbr.rel (0) target = $region13
    $region12: #{tpu_custom_call.1} parent=1 // pred_region
      %s3866 = ssub.s32 1024, 1024
      %3867 = vsyncadd [#allocation6], %s3866
      %s3868 = sshll.u32 [#allocation5], 4
      %s3869 = int_to_ptr.vmem [resolvable:$true] %s3868
      %3874 = dma.vmem_to_hbm [thread:$0]  %s3869, 1024, %s3, [#allocation6], 128, 128, 8
    $region13: #{tpu_custom_call.1} parent=1 // pred_fallthru
      _
    // Predicated region
    $region14: #{tpu_custom_call.1} parent=1 // pred_check
      _
    $region15: #{tpu_custom_call.1} parent=1 // pred_check_branch
      %3876 = sbr.rel (0) target = $region17
    $region16: #{tpu_custom_call.1} parent=1 // pred_region
      %s3878 = ssub.s32 32, 32
      %3879 = vsyncadd [#allocation7], %s3878
      %3882 = dma.smem_to_hbm [#allocation8], 32, %s4, [#allocation7]
    $region17: #{tpu_custom_call.1} parent=1 // pred_fallthru
      _
    // Predicated region
    $region18: #{tpu_custom_call.1} parent=1 // pred_check
      _
    $region19: #{tpu_custom_call.1} parent=1 // pred_check_branch
      %3884 = sbr.rel (0) target = $region21
    $region20: #{tpu_custom_call.1} parent=1 // pred_region
      %3885 = dma.done [#allocation6], 1024
    $region21: #{tpu_custom_call.1} parent=1 // pred_fallthru
      _
    // Predicated region
    $region22: #{tpu_custom_call.1} parent=1 // pred_check
      _
    $region23: #{tpu_custom_call.1} parent=1 // pred_check_branch
      %3887 = sbr.rel (0) target = $region25
    $region24: #{tpu_custom_call.1} parent=1 // pred_region
      %3888 = dma.done [#allocation7], 32
    $region25: #{tpu_custom_call.1} parent=1 // pred_fallthru
      _
    %3889 = sfence
    %3890 = vsyncpa [#allocation6], 1
    %3891 = vsyncpa [#allocation7], 1

</llo_original>
